<compile_context>
chip_gen: v5e
topology: v5e:2x2
jax: 0.10.0
libtpu: 0.0.40
codegen_flags: <defaults>
</compile_context>

<pallas_src>
import functools

import jax
import jax.numpy as jnp
from jax.experimental import pallas as pl
from jax.experimental.pallas import tpu as pltpu


# --------------------------------------------------------------------------
# Kernel A: fused attention block + router (TB sequences per grid step)
# --------------------------------------------------------------------------
def _attn_router_kernel(x_ref, ln1_ref, wq_ref, wk_ref, wv_ref, wo_ref,
                        ln2_ref, wr_ref, br_ref,
                        xattn_ref, rw_ref, *, TB, S, H, hd, eps):
    D = H * hd
    R = TB * S
    x = x_ref[...].reshape(R, D)                               # (R, D) f32

    # ---- input RMSNorm (f32 math) ----
    var = jnp.mean(x * x, axis=-1, keepdims=True)
    xn = (x * jax.lax.rsqrt(var + eps)) * ln1_ref[...]
    xn_b = xn.astype(jnp.bfloat16)

    # ---- per-head linear attention; heads use stacked weights (leading dim)
    #      so activations are never lane-sliced and there is no concat: each
    #      head's output is folded through its slice of Wo and accumulated.
    acc = jnp.zeros((R, D), jnp.float32)
    for h in range(H):
        qh = jnp.dot(xn_b, wq_ref[h], preferred_element_type=jnp.float32)
        kh = jnp.dot(xn_b, wk_ref[h], preferred_element_type=jnp.float32)
        vh = jnp.dot(xn_b, wv_ref[h], preferred_element_type=jnp.float32)
        # ELU(x) + 1 feature map (f32 elementwise)
        qh = jnp.where(qh > 0, qh + 1.0, jnp.exp(qh))
        kh = jnp.where(kh > 0, kh + 1.0, jnp.exp(kh))
        q3 = qh.reshape(TB, S, hd).astype(jnp.bfloat16)
        k3 = kh.reshape(TB, S, hd).astype(jnp.bfloat16)
        v3 = vh.reshape(TB, S, hd).astype(jnp.bfloat16)
        s = jnp.einsum('bqd,bkd->bqk', q3, k3,
                       preferred_element_type=jnp.float32)     # (TB, S, S)
        s = s - jnp.max(s, axis=-1, keepdims=True)
        p = jnp.exp(s)
        p = p / jnp.sum(p, axis=-1, keepdims=True)             # exact softmax
        # TODO(synk): attention dropout(p=0.1) implemented as identity
        # (inference/eval semantics).
        o3 = jnp.einsum('bqk,bkd->bqd', p.astype(jnp.bfloat16), v3,
                        preferred_element_type=jnp.float32)    # (TB, S, hd)
        acc = acc + jnp.dot(o3.reshape(R, hd).astype(jnp.bfloat16), wo_ref[h],
                            preferred_element_type=jnp.float32)

    # ---- residual add ----
    x_attn = x + acc
    xattn_ref[...] = x_attn.reshape(TB, S, D)

    # ---- post-attention RMSNorm + router softmax (MoE prologue) ----
    var2 = jnp.mean(x_attn * x_attn, axis=-1, keepdims=True)
    xn2 = (x_attn * jax.lax.rsqrt(var2 + eps)) * ln2_ref[...]
    logits = jnp.dot(xn2.astype(jnp.bfloat16), wr_ref[...],
                     preferred_element_type=jnp.float32) + br_ref[...]
    logits = logits - jnp.max(logits, axis=-1, keepdims=True)
    ew = jnp.exp(logits)
    rw = ew / jnp.sum(ew, axis=-1, keepdims=True)              # exact softmax
    rw_ref[...] = rw.reshape(TB, S, rw.shape[-1])


def attn_router_block(hs, p, *, H, eps=1e-6):
    B, S, D = hs.shape
    E = p['router_w'].shape[1]
    hd = D // H
    TB = B if B * S <= 512 else max(1, 512 // S)   # rows-per-step >= full batch when small
    assert B % TB == 0
    row_D = pl.BlockSpec((TB, S, D), lambda b: (b, 0, 0))
    row_E = pl.BlockSpec((TB, S, E), lambda b: (b, 0, 0))
    return pl.pallas_call(
        functools.partial(_attn_router_kernel, TB=TB, S=S, H=H, hd=hd, eps=eps),
        grid=(B // TB,),
        in_specs=[row_D,
                  pl.BlockSpec((1, D), lambda b: (0, 0)),          # ln1
                  pl.BlockSpec((H, D, hd), lambda b: (0, 0, 0)),   # Wq (per head)
                  pl.BlockSpec((H, D, hd), lambda b: (0, 0, 0)),   # Wk
                  pl.BlockSpec((H, D, hd), lambda b: (0, 0, 0)),   # Wv
                  pl.BlockSpec((H, hd, D), lambda b: (0, 0, 0)),   # Wo (per head)
                  pl.BlockSpec((1, D), lambda b: (0, 0)),          # ln2
                  pl.BlockSpec((D, E), lambda b: (0, 0)),          # router W
                  pl.BlockSpec((1, E), lambda b: (0, 0))],         # router b
        out_specs=(row_D, row_E),
        out_shape=(jax.ShapeDtypeStruct((B, S, D), jnp.float32),   # x + attn
                   jax.ShapeDtypeStruct((B, S, E), jnp.float32)),  # routing wts
        # "arbitrary": avoid duplicating the weight DMAs across v7x megacores
        # for a tiny batch-tile grid.
        compiler_params=pltpu.CompilerParams(
            dimension_semantics=("arbitrary",)),
    )(hs, p['ln1_w'].reshape(1, D), p['wq'], p['wk'], p['wv'], p['wo'],
      p['ln2_w'].reshape(1, D), p['router_w'], p['router_b'].reshape(1, E))


# --------------------------------------------------------------------------
# Kernel B: MoE experts, compacted active list + in-VMEM accumulation
# --------------------------------------------------------------------------
def _moe_expert_kernel(nact_ref, act_ref, xattn_ref, rw_ref, ln2_ref,
                       wgu_ref, wd_ref, o_ref, xn2_scr, *, I, eps):
    j = pl.program_id(1)                       # slot in compacted expert list

    @pl.when(j == 0)
    def _init():
        x = xattn_ref[...]
        o_ref[...] = x                                          # residual init
        var = jnp.mean(x * x, axis=-1, keepdims=True)
        xn2_scr[...] = ((x * jax.lax.rsqrt(var + eps)) * ln2_ref[...]
                        ).astype(jnp.bfloat16)                  # cached norm

    @pl.when(j < nact_ref[0])                  # only active experts compute
    def _expert():
        eid = act_ref[j]
        xn = xn2_scr[...]                                       # (RT, D) bf16
        gu = jnp.dot(xn, wgu_ref[0], preferred_element_type=jnp.float32)
        g = gu[:, :I]
        u = gu[:, I:]
        h = (g * jax.nn.sigmoid(g)) * u                         # SiLU(gate)*up
        eo = jnp.dot(h.astype(jnp.bfloat16), wd_ref[0],
                     preferred_element_type=jnp.float32)        # (RT, D)
        rw = rw_ref[...]                                        # (RT, E)
        sel = jax.lax.broadcasted_iota(jnp.int32, rw.shape, 1) == eid
        scale = jnp.sum(jnp.where(sel, rw, 0.0), axis=-1, keepdims=True)
        o_ref[...] += eo * scale


def moe_expert_block(nact, act_ids, x_attn, rw, p, *, eps=1e-6):
    N, D = x_attn.shape
    E = rw.shape[1]
    I2 = p['wgu'].shape[2]
    I = I2 // 2
    RT = N if N <= 512 else 512
    assert N % RT == 0
    row_D = pl.BlockSpec((RT, D), lambda r, j, nact, act: (r, 0))
    row_E = pl.BlockSpec((RT, E), lambda r, j, nact, act: (r, 0))
    grid_spec = pltpu.PrefetchScalarGridSpec(
        num_scalar_prefetch=2,
        grid=(N // RT, E),
        in_specs=[row_D, row_E,
                  pl.BlockSpec((1, D), lambda r, j, nact, act: (0, 0)),
                  # expert weights addressed through the compacted active list;
                  # tail slots repeat the last active id -> no fresh DMA.
                  pl.BlockSpec((1, D, I2), lambda r, j, nact, act: (act[j], 0, 0)),
                  pl.BlockSpec((1, I, D), lambda r, j, nact, act: (act[j], 0, 0))],
        out_specs=row_D,
        scratch_shapes=[pltpu.VMEM((RT, D), jnp.bfloat16)])
    return pl.pallas_call(
        functools.partial(_moe_expert_kernel, I=I, eps=eps),
        grid_spec=grid_spec,
        out_shape=jax.ShapeDtypeStruct((N, D), jnp.float32),
        compiler_params=pltpu.CompilerParams(
            dimension_semantics=("parallel", "arbitrary")),
    )(nact, act_ids, x_attn, rw, p['ln2_w'].reshape(1, D), p['wgu'], p['wd'])


# --------------------------------------------------------------------------
# Kernel C: final RMSNorm fused with V-tiled lm_head projection
# --------------------------------------------------------------------------
def _final_norm_head_kernel(x_ref, w_ref, wlm_ref, o_ref, xn_scr, *, eps):
    @pl.when(pl.program_id(1) == 0)
    def _():
        x = x_ref[...]
        var = jnp.mean(x * x, axis=-1, keepdims=True)
        xn_scr[...] = ((x * jax.lax.rsqrt(var + eps)) * w_ref[...]
                       ).astype(jnp.bfloat16)
    o_ref[...] = jnp.dot(xn_scr[...], wlm_ref[...],
                         preferred_element_type=jnp.float32)


def final_norm_lm_head(x, norm_w, w_lm_pad, *, eps=1e-6):
    N, D = x.shape
    Vp = w_lm_pad.shape[1]
    RT = N if N <= 512 else 512
    VT = Vp if Vp <= 512 else 512
    assert N % RT == 0 and Vp % VT == 0
    return pl.pallas_call(
        functools.partial(_final_norm_head_kernel, eps=eps),
        grid=(N // RT, Vp // VT),
        in_specs=[pl.BlockSpec((RT, D), lambda r, v: (r, 0)),
                  pl.BlockSpec((1, D), lambda r, v: (0, 0)),
                  pl.BlockSpec((D, VT), lambda r, v: (0, v))],
        out_specs=pl.BlockSpec((RT, VT), lambda r, v: (r, v)),
        out_shape=jax.ShapeDtypeStruct((N, Vp), jnp.float32),
        scratch_shapes=[pltpu.VMEM((RT, D), jnp.bfloat16)],
        compiler_params=pltpu.CompilerParams(
            dimension_semantics=("parallel", "arbitrary")),
    )(x, norm_w.reshape(1, D), w_lm_pad)


# --------------------------------------------------------------------------
# Model definition
# --------------------------------------------------------------------------
CONFIG = dict(vocab_size=100, hidden_size=128, intermediate_size=256,
              num_hidden_layers=2, num_heads=4, num_experts=4)


def init_params(key, cfg):
    D = cfg['hidden_size']; I = cfg['intermediate_size']
    E = cfg['num_experts']; L = cfg['num_hidden_layers']
    V = cfg['vocab_size']; H = cfg['num_heads']
    hd = D // H
    Vp = ((V + 127) // 128) * 128                       # lane-pad vocab
    keys = iter(jax.random.split(key, 2 + 8 * L))

    def w(shape, dtype=jnp.bfloat16, scale=0.02):
        return (jax.random.normal(next(keys), shape, jnp.float32) * scale).astype(dtype)

    lm = w((D, V))
    params = dict(embed=w((V, D), jnp.float32),
                  norm_w=jnp.ones((D,), jnp.float32),
                  lm_head=jnp.pad(lm, ((0, 0), (0, Vp - V))),   # zero-padded cols
                  layers=[])
    for _ in range(L):
        params['layers'].append(dict(
            ln1_w=jnp.ones((D,), jnp.float32),
            ln2_w=jnp.ones((D,), jnp.float32),
            wq=w((H, D, hd)), wk=w((H, D, hd)), wv=w((H, D, hd)),
            wo=w((H, hd, D)),                   # per-head slices of o_proj
            router_w=w((D, E)),
            router_b=w((E,), jnp.float32),
            wgu=w((E, D, 2 * I)),               # fused gate ‖ up projection
            wd=w((E, I, D)),                    # stacked expert down_proj
        ))
    return params


def llama_forward(params, input_ids, cfg):
    B, S = input_ids.shape
    D = cfg['hidden_size']; H = cfg['num_heads']
    E = cfg['num_experts']; V = cfg['vocab_size']
    N = B * S

    # token embedding gather (tiny XLA glue)
    hs = jnp.take(params['embed'], input_ids, axis=0)           # (B, S, D) f32
    total_bal = jnp.float32(0.0)

    for p in params['layers']:
        # --- Kernel A: norm -> attention -> residual -> norm -> router
        x_attn, rw = attn_router_block(hs, p, H=H)

        # --- XLA glue: balance loss (mean over batch dim, pre-topk weights)
        mean_routing = rw.mean(axis=0)                          # (S, E)
        total_bal = total_bal + jnp.mean((mean_routing - 1.0 / E) ** 2) * 0.01

        # --- XLA glue: compacted list of experts hit by any token's top-2
        rw_flat = rw.reshape(N, E)
        _, topk_idx = jax.lax.top_k(rw_flat, 2)
        hit = (topk_idx[..., None] == jnp.arange(E)).any(axis=(0, 1))
        nact = hit.sum().astype(jnp.int32)
        order = jnp.argsort(jnp.where(hit, 0, 1)).astype(jnp.int32)  # actives first
        last_active = order[jnp.maximum(nact - 1, 0)]
        act_ids = jnp.where(jnp.arange(E) < nact, order, last_active).astype(jnp.int32)

        # --- Kernel B: experts accumulated in VMEM on top of the residual
        moe_out = moe_expert_block(nact.reshape(1), act_ids,
                                   x_attn.reshape(N, D), rw_flat, p)
        hs = moe_out.reshape(B, S, D)

    # --- Kernel C: final RMSNorm + lm_head (lane-padded vocab, sliced after)
    logits_pad = final_norm_lm_head(hs.reshape(N, D), params['norm_w'],
                                    params['lm_head'])
    logits = logits_pad[:, :V].reshape(B, S, V)
    return logits, total_bal


# --------------------------------------------------------------------------
if __name__ == "__main__":
    key = jax.random.PRNGKey(0)
    pkey, ikey = jax.random.split(key)
    params = init_params(pkey, CONFIG)

    B, S = 2, 16
    input_ids = jax.random.randint(ikey, (B, S), 0, CONFIG['vocab_size'])

    fwd = jax.jit(functools.partial(llama_forward, cfg=CONFIG))
    logits, total_balance_loss = fwd(params, input_ids)
    jax.block_until_ready((logits, total_balance_loss))

    assert logits.shape == (B, S, CONFIG['vocab_size'])
    assert logits.dtype == jnp.float32
    assert total_balance_loss.shape == ()
    print("KERNEL_OK")
</pallas_src>

<mosaic_0001>
module attributes {stable_mosaic.version = 11 : i64} {
  func.func @_attn_router_kernel(%arg0: i32, %arg1: memref<2x16x128xf32, #tpu.memory_space<vmem>>, %arg2: memref<1x128xf32, #tpu.memory_space<vmem>>, %arg3: memref<4x128x32xbf16, #tpu.memory_space<vmem>>, %arg4: memref<4x128x32xbf16, #tpu.memory_space<vmem>>, %arg5: memref<4x128x32xbf16, #tpu.memory_space<vmem>>, %arg6: memref<4x32x128xbf16, #tpu.memory_space<vmem>>, %arg7: memref<1x128xf32, #tpu.memory_space<vmem>>, %arg8: memref<128x4xbf16, #tpu.memory_space<vmem>>, %arg9: memref<1x4xf32, #tpu.memory_space<vmem>>, %arg10: memref<2x16x128xf32, #tpu.memory_space<vmem>>, %arg11: memref<2x16x4xf32, #tpu.memory_space<vmem>>) attributes {dimension_semantics = [#tpu.dimension_semantics<arbitrary>], iteration_bounds = array<i64: 1>, scalar_prefetch = 0 : i64, scratch_operands = 0 : i64, tpu.core_type = #tpu.core_type<tc>, window_params = [{transform_indices = @transform_0, window_bounds = array<i64: 2, 16, 128>}, {pipeline_mode = #tpu.pipeline_mode<synchronous>, transform_indices = @transform_1, window_bounds = array<i64: 1, 128>}, {pipeline_mode = #tpu.pipeline_mode<synchronous>, transform_indices = @transform_2, window_bounds = array<i64: 4, 128, 32>}, {pipeline_mode = #tpu.pipeline_mode<synchronous>, transform_indices = @transform_3, window_bounds = array<i64: 4, 128, 32>}, {pipeline_mode = #tpu.pipeline_mode<synchronous>, transform_indices = @transform_4, window_bounds = array<i64: 4, 128, 32>}, {pipeline_mode = #tpu.pipeline_mode<synchronous>, transform_indices = @transform_5, window_bounds = array<i64: 4, 32, 128>}, {pipeline_mode = #tpu.pipeline_mode<synchronous>, transform_indices = @transform_6, window_bounds = array<i64: 1, 128>}, {pipeline_mode = #tpu.pipeline_mode<synchronous>, transform_indices = @transform_7, window_bounds = array<i64: 128, 4>}, {pipeline_mode = #tpu.pipeline_mode<synchronous>, transform_indices = @transform_8, window_bounds = array<i64: 1, 4>}, {transform_indices = @transform_9, window_bounds = array<i64: 2, 16, 128>}, {transform_indices = @transform_10, window_bounds = array<i64: 2, 16, 4>}]} {
    %c0 = arith.constant 0 : index
    %c0_0 = arith.constant 0 : index
    %c0_1 = arith.constant 0 : index
    %0 = vector.load %arg1[%c0, %c0_0, %c0_1] : memref<2x16x128xf32, #tpu.memory_space<vmem>>, vector<2x16x128xf32>
    %1 = vector.shape_cast %0 : vector<2x16x128xf32> to vector<32x128xf32>
    %2 = arith.mulf %1, %1 : vector<32x128xf32>
    %cst = arith.constant dense<0.000000e+00> : vector<32xf32>
    %3 = vector.multi_reduction <add>, %2, %cst [1] : vector<32x128xf32> to vector<32xf32>
    %4 = vector.shape_cast %3 : vector<32xf32> to vector<32x1xf32>
    %cst_2 = arith.constant 1.280000e+02 : f32
    %5 = vector.broadcast %cst_2 : f32 to vector<32x1xf32>
    %6 = arith.divf %4, %5 : vector<32x1xf32>
    %cst_3 = arith.constant 9.99999997E-7 : f32
    %7 = vector.broadcast %cst_3 : f32 to vector<32x1xf32>
    %8 = arith.addf %6, %7 : vector<32x1xf32>
    %9 = math.rsqrt %8 : vector<32x1xf32>
    %10 = vector.broadcast %9 : vector<32x1xf32> to vector<32x128xf32>
    %11 = arith.mulf %1, %10 : vector<32x128xf32>
    %c0_4 = arith.constant 0 : index
    %c0_5 = arith.constant 0 : index
    %12 = vector.load %arg2[%c0_4, %c0_5] : memref<1x128xf32, #tpu.memory_space<vmem>>, vector<1x128xf32>
    %13 = vector.broadcast %12 : vector<1x128xf32> to vector<32x128xf32>
    %14 = arith.mulf %11, %13 : vector<32x128xf32>
    %15 = arith.truncf %14 : vector<32x128xf32> to vector<32x128xbf16>
    %cst_6 = arith.constant 0.000000e+00 : f32
    %16 = vector.broadcast %cst_6 : f32 to vector<32x128xf32>
    %c0_7 = arith.constant 0 : index
    %c0_8 = arith.constant 0 : index
    %c0_9 = arith.constant 0 : index
    %17 = vector.load %arg3[%c0_7, %c0_8, %c0_9] : memref<4x128x32xbf16, #tpu.memory_space<vmem>>, vector<1x128x32xbf16>
    %18 = vector.shape_cast %17 : vector<1x128x32xbf16> to vector<128x32xbf16>
    %cst_10 = arith.constant dense<0.000000e+00> : vector<32x32xf32>
    %19 = tpu.matmul %15, %18, %cst_10 {dimension_numbers = #tpu.dot_dimension_numbers<[1], [0], [0], [1], [0, 0, 1, 1], [], []>} : vector<32x128xbf16>, vector<128x32xbf16>, vector<32x32xf32> -> vector<32x32xf32>
    %c0_11 = arith.constant 0 : index
    %c0_12 = arith.constant 0 : index
    %c0_13 = arith.constant 0 : index
    %20 = vector.load %arg4[%c0_11, %c0_12, %c0_13] : memref<4x128x32xbf16, #tpu.memory_space<vmem>>, vector<1x128x32xbf16>
    %21 = vector.shape_cast %20 : vector<1x128x32xbf16> to vector<128x32xbf16>
    %cst_14 = arith.constant dense<0.000000e+00> : vector<32x32xf32>
    %22 = tpu.matmul %15, %21, %cst_14 {dimension_numbers = #tpu.dot_dimension_numbers<[1], [0], [0], [1], [0, 0, 1, 1], [], []>} : vector<32x128xbf16>, vector<128x32xbf16>, vector<32x32xf32> -> vector<32x32xf32>
    %c0_15 = arith.constant 0 : index
    %c0_16 = arith.constant 0 : index
    %c0_17 = arith.constant 0 : index
    %23 = vector.load %arg5[%c0_15, %c0_16, %c0_17] : memref<4x128x32xbf16, #tpu.memory_space<vmem>>, vector<1x128x32xbf16>
    %24 = vector.shape_cast %23 : vector<1x128x32xbf16> to vector<128x32xbf16>
    %cst_18 = arith.constant dense<0.000000e+00> : vector<32x32xf32>
    %25 = tpu.matmul %15, %24, %cst_18 {dimension_numbers = #tpu.dot_dimension_numbers<[1], [0], [0], [1], [0, 0, 1, 1], [], []>} : vector<32x128xbf16>, vector<128x32xbf16>, vector<32x32xf32> -> vector<32x32xf32>
    %cst_19 = arith.constant 0.000000e+00 : f32
    %26 = vector.broadcast %cst_19 : f32 to vector<32x32xf32>
    %27 = arith.cmpf ogt, %19, %26 : vector<32x32xf32>
    %cst_20 = arith.constant 1.000000e+00 : f32
    %28 = vector.broadcast %cst_20 : f32 to vector<32x32xf32>
    %29 = arith.addf %19, %28 : vector<32x32xf32>
    %30 = math.exp %19 : vector<32x32xf32>
    %31 = arith.select %27, %29, %30 : vector<32x32xi1>, vector<32x32xf32>
    %cst_21 = arith.constant 0.000000e+00 : f32
    %32 = vector.broadcast %cst_21 : f32 to vector<32x32xf32>
    %33 = arith.cmpf ogt, %22, %32 : vector<32x32xf32>
    %cst_22 = arith.constant 1.000000e+00 : f32
    %34 = vector.broadcast %cst_22 : f32 to vector<32x32xf32>
    %35 = arith.addf %22, %34 : vector<32x32xf32>
    %36 = math.exp %22 : vector<32x32xf32>
    %37 = arith.select %33, %35, %36 : vector<32x32xi1>, vector<32x32xf32>
    %38 = vector.shape_cast %31 : vector<32x32xf32> to vector<2x16x32xf32>
    %39 = arith.truncf %38 : vector<2x16x32xf32> to vector<2x16x32xbf16>
    %40 = vector.shape_cast %37 : vector<32x32xf32> to vector<2x16x32xf32>
    %41 = arith.truncf %40 : vector<2x16x32xf32> to vector<2x16x32xbf16>
    %42 = vector.shape_cast %25 : vector<32x32xf32> to vector<2x16x32xf32>
    %43 = arith.truncf %42 : vector<2x16x32xf32> to vector<2x16x32xbf16>
    "tpu.trace_start"() <{level = 10 : i32, message = "bqd,bkd->bqk"}> : () -> ()
    %cst_23 = arith.constant dense<0.000000e+00> : vector<2x16x16xf32>
    %44 = tpu.matmul %39, %41, %cst_23 {dimension_numbers = #tpu.dot_dimension_numbers<[2], [2], [1], [1], [0, 0, 0, 1, 1, 1], [0], [0]>} : vector<2x16x32xbf16>, vector<2x16x32xbf16>, vector<2x16x16xf32> -> vector<2x16x16xf32>
    "tpu.trace_stop"() : () -> ()
    %cst_24 = arith.constant dense<0xFF800000> : vector<2x16xf32>
    %45 = vector.multi_reduction <maximumf>, %44, %cst_24 [2] : vector<2x16x16xf32> to vector<2x16xf32>
    %46 = vector.shape_cast %45 : vector<2x16xf32> to vector<2x16x1xf32>
    %47 = vector.broadcast %46 : vector<2x16x1xf32> to vector<2x16x16xf32>
    %48 = arith.subf %44, %47 : vector<2x16x16xf32>
    %49 = math.exp %48 : vector<2x16x16xf32>
    %cst_25 = arith.constant dense<0.000000e+00> : vector<2x16xf32>
    %50 = vector.multi_reduction <add>, %49, %cst_25 [2] : vector<2x16x16xf32> to vector<2x16xf32>
    %51 = vector.shape_cast %50 : vector<2x16xf32> to vector<2x16x1xf32>
    %52 = vector.broadcast %51 : vector<2x16x1xf32> to vector<2x16x16xf32>
    %53 = arith.divf %49, %52 : vector<2x16x16xf32>
    %54 = arith.truncf %53 : vector<2x16x16xf32> to vector<2x16x16xbf16>
    "tpu.trace_start"() <{level = 10 : i32, message = "bqk,bkd->bqd"}> : () -> ()
    %cst_26 = arith.constant dense<0.000000e+00> : vector<2x16x32xf32>
    %55 = tpu.matmul %54, %43, %cst_26 {dimension_numbers = #tpu.dot_dimension_numbers<[2], [1], [1], [2], [0, 0, 0, 1, 1, 2], [0], [0]>} : vector<2x16x16xbf16>, vector<2x16x32xbf16>, vector<2x16x32xf32> -> vector<2x16x32xf32>
    "tpu.trace_stop"() : () -> ()
    %56 = vector.shape_cast %55 : vector<2x16x32xf32> to vector<32x32xf32>
    %57 = arith.truncf %56 : vector<32x32xf32> to vector<32x32xbf16>
    %c0_27 = arith.constant 0 : index
    %c0_28 = arith.constant 0 : index
    %c0_29 = arith.constant 0 : index
    %58 = vector.load %arg6[%c0_27, %c0_28, %c0_29] : memref<4x32x128xbf16, #tpu.memory_space<vmem>>, vector<1x32x128xbf16>
    %59 = vector.shape_cast %58 : vector<1x32x128xbf16> to vector<32x128xbf16>
    %cst_30 = arith.constant dense<0.000000e+00> : vector<32x128xf32>
    %60 = tpu.matmul %57, %59, %cst_30 {dimension_numbers = #tpu.dot_dimension_numbers<[1], [0], [0], [1], [0, 0, 1, 1], [], []>} : vector<32x32xbf16>, vector<32x128xbf16>, vector<32x128xf32> -> vector<32x128xf32>
    %61 = arith.addf %16, %60 : vector<32x128xf32>
    %c1 = arith.constant 1 : index
    %c0_31 = arith.constant 0 : index
    %c0_32 = arith.constant 0 : index
    %62 = vector.load %arg3[%c1, %c0_31, %c0_32] : memref<4x128x32xbf16, #tpu.memory_space<vmem>>, vector<1x128x32xbf16>
    %63 = vector.shape_cast %62 : vector<1x128x32xbf16> to vector<128x32xbf16>
    %cst_33 = arith.constant dense<0.000000e+00> : vector<32x32xf32>
    %64 = tpu.matmul %15, %63, %cst_33 {dimension_numbers = #tpu.dot_dimension_numbers<[1], [0], [0], [1], [0, 0, 1, 1], [], []>} : vector<32x128xbf16>, vector<128x32xbf16>, vector<32x32xf32> -> vector<32x32xf32>
    %c1_34 = arith.constant 1 : index
    %c0_35 = arith.constant 0 : index
    %c0_36 = arith.constant 0 : index
    %65 = vector.load %arg4[%c1_34, %c0_35, %c0_36] : memref<4x128x32xbf16, #tpu.memory_space<vmem>>, vector<1x128x32xbf16>
    %66 = vector.shape_cast %65 : vector<1x128x32xbf16> to vector<128x32xbf16>
    %cst_37 = arith.constant dense<0.000000e+00> : vector<32x32xf32>
    %67 = tpu.matmul %15, %66, %cst_37 {dimension_numbers = #tpu.dot_dimension_numbers<[1], [0], [0], [1], [0, 0, 1, 1], [], []>} : vector<32x128xbf16>, vector<128x32xbf16>, vector<32x32xf32> -> vector<32x32xf32>
    %c1_38 = arith.constant 1 : index
    %c0_39 = arith.constant 0 : index
    %c0_40 = arith.constant 0 : index
    %68 = vector.load %arg5[%c1_38, %c0_39, %c0_40] : memref<4x128x32xbf16, #tpu.memory_space<vmem>>, vector<1x128x32xbf16>
    %69 = vector.shape_cast %68 : vector<1x128x32xbf16> to vector<128x32xbf16>
    %cst_41 = arith.constant dense<0.000000e+00> : vector<32x32xf32>
    %70 = tpu.matmul %15, %69, %cst_41 {dimension_numbers = #tpu.dot_dimension_numbers<[1], [0], [0], [1], [0, 0, 1, 1], [], []>} : vector<32x128xbf16>, vector<128x32xbf16>, vector<32x32xf32> -> vector<32x32xf32>
    %cst_42 = arith.constant 0.000000e+00 : f32
    %71 = vector.broadcast %cst_42 : f32 to vector<32x32xf32>
    %72 = arith.cmpf ogt, %64, %71 : vector<32x32xf32>
    %cst_43 = arith.constant 1.000000e+00 : f32
    %73 = vector.broadcast %cst_43 : f32 to vector<32x32xf32>
    %74 = arith.addf %64, %73 : vector<32x32xf32>
    %75 = math.exp %64 : vector<32x32xf32>
    %76 = arith.select %72, %74, %75 : vector<32x32xi1>, vector<32x32xf32>
    %cst_44 = arith.constant 0.000000e+00 : f32
    %77 = vector.broadcast %cst_44 : f32 to vector<32x32xf32>
    %78 = arith.cmpf ogt, %67, %77 : vector<32x32xf32>
    %cst_45 = arith.constant 1.000000e+00 : f32
    %79 = vector.broadcast %cst_45 : f32 to vector<32x32xf32>
    %80 = arith.addf %67, %79 : vector<32x32xf32>
    %81 = math.exp %67 : vector<32x32xf32>
    %82 = arith.select %78, %80, %81 : vector<32x32xi1>, vector<32x32xf32>
    %83 = vector.shape_cast %76 : vector<32x32xf32> to vector<2x16x32xf32>
    %84 = arith.truncf %83 : vector<2x16x32xf32> to vector<2x16x32xbf16>
    %85 = vector.shape_cast %82 : vector<32x32xf32> to vector<2x16x32xf32>
    %86 = arith.truncf %85 : vector<2x16x32xf32> to vector<2x16x32xbf16>
    %87 = vector.shape_cast %70 : vector<32x32xf32> to vector<2x16x32xf32>
    %88 = arith.truncf %87 : vector<2x16x32xf32> to vector<2x16x32xbf16>
    "tpu.trace_start"() <{level = 10 : i32, message = "bqd,bkd->bqk"}> : () -> ()
    %cst_46 = arith.constant dense<0.000000e+00> : vector<2x16x16xf32>
    %89 = tpu.matmul %84, %86, %cst_46 {dimension_numbers = #tpu.dot_dimension_numbers<[2], [2], [1], [1], [0, 0, 0, 1, 1, 1], [0], [0]>} : vector<2x16x32xbf16>, vector<2x16x32xbf16>, vector<2x16x16xf32> -> vector<2x16x16xf32>
    "tpu.trace_stop"() : () -> ()
    %cst_47 = arith.constant dense<0xFF800000> : vector<2x16xf32>
    %90 = vector.multi_reduction <maximumf>, %89, %cst_47 [2] : vector<2x16x16xf32> to vector<2x16xf32>
    %91 = vector.shape_cast %90 : vector<2x16xf32> to vector<2x16x1xf32>
    %92 = vector.broadcast %91 : vector<2x16x1xf32> to vector<2x16x16xf32>
    %93 = arith.subf %89, %92 : vector<2x16x16xf32>
    %94 = math.exp %93 : vector<2x16x16xf32>
    %cst_48 = arith.constant dense<0.000000e+00> : vector<2x16xf32>
    %95 = vector.multi_reduction <add>, %94, %cst_48 [2] : vector<2x16x16xf32> to vector<2x16xf32>
    %96 = vector.shape_cast %95 : vector<2x16xf32> to vector<2x16x1xf32>
    %97 = vector.broadcast %96 : vector<2x16x1xf32> to vector<2x16x16xf32>
    %98 = arith.divf %94, %97 : vector<2x16x16xf32>
    %99 = arith.truncf %98 : vector<2x16x16xf32> to vector<2x16x16xbf16>
    "tpu.trace_start"() <{level = 10 : i32, message = "bqk,bkd->bqd"}> : () -> ()
    %cst_49 = arith.constant dense<0.000000e+00> : vector<2x16x32xf32>
    %100 = tpu.matmul %99, %88, %cst_49 {dimension_numbers = #tpu.dot_dimension_numbers<[2], [1], [1], [2], [0, 0, 0, 1, 1, 2], [0], [0]>} : vector<2x16x16xbf16>, vector<2x16x32xbf16>, vector<2x16x32xf32> -> vector<2x16x32xf32>
    "tpu.trace_stop"() : () -> ()
    %101 = vector.shape_cast %100 : vector<2x16x32xf32> to vector<32x32xf32>
    %102 = arith.truncf %101 : vector<32x32xf32> to vector<32x32xbf16>
    %c1_50 = arith.constant 1 : index
    %c0_51 = arith.constant 0 : index
    %c0_52 = arith.constant 0 : index
    %103 = vector.load %arg6[%c1_50, %c0_51, %c0_52] : memref<4x32x128xbf16, #tpu.memory_space<vmem>>, vector<1x32x128xbf16>
    %104 = vector.shape_cast %103 : vector<1x32x128xbf16> to vector<32x128xbf16>
    %cst_53 = arith.constant dense<0.000000e+00> : vector<32x128xf32>
    %105 = tpu.matmul %102, %104, %cst_53 {dimension_numbers = #tpu.dot_dimension_numbers<[1], [0], [0], [1], [0, 0, 1, 1], [], []>} : vector<32x32xbf16>, vector<32x128xbf16>, vector<32x128xf32> -> vector<32x128xf32>
    %106 = arith.addf %61, %105 : vector<32x128xf32>
    %c2 = arith.constant 2 : index
    %c0_54 = arith.constant 0 : index
    %c0_55 = arith.constant 0 : index
    %107 = vector.load %arg3[%c2, %c0_54, %c0_55] : memref<4x128x32xbf16, #tpu.memory_space<vmem>>, vector<1x128x32xbf16>
    %108 = vector.shape_cast %107 : vector<1x128x32xbf16> to vector<128x32xbf16>
    %cst_56 = arith.constant dense<0.000000e+00> : vector<32x32xf32>
    %109 = tpu.matmul %15, %108, %cst_56 {dimension_numbers = #tpu.dot_dimension_numbers<[1], [0], [0], [1], [0, 0, 1, 1], [], []>} : vector<32x128xbf16>, vector<128x32xbf16>, vector<32x32xf32> -> vector<32x32xf32>
    %c2_57 = arith.constant 2 : index
    %c0_58 = arith.constant 0 : index
    %c0_59 = arith.constant 0 : index
    %110 = vector.load %arg4[%c2_57, %c0_58, %c0_59] : memref<4x128x32xbf16, #tpu.memory_space<vmem>>, vector<1x128x32xbf16>
    %111 = vector.shape_cast %110 : vector<1x128x32xbf16> to vector<128x32xbf16>
    %cst_60 = arith.constant dense<0.000000e+00> : vector<32x32xf32>
    %112 = tpu.matmul %15, %111, %cst_60 {dimension_numbers = #tpu.dot_dimension_numbers<[1], [0], [0], [1], [0, 0, 1, 1], [], []>} : vector<32x128xbf16>, vector<128x32xbf16>, vector<32x32xf32> -> vector<32x32xf32>
    %c2_61 = arith.constant 2 : index
    %c0_62 = arith.constant 0 : index
    %c0_63 = arith.constant 0 : index
    %113 = vector.load %arg5[%c2_61, %c0_62, %c0_63] : memref<4x128x32xbf16, #tpu.memory_space<vmem>>, vector<1x128x32xbf16>
    %114 = vector.shape_cast %113 : vector<1x128x32xbf16> to vector<128x32xbf16>
    %cst_64 = arith.constant dense<0.000000e+00> : vector<32x32xf32>
    %115 = tpu.matmul %15, %114, %cst_64 {dimension_numbers = #tpu.dot_dimension_numbers<[1], [0], [0], [1], [0, 0, 1, 1], [], []>} : vector<32x128xbf16>, vector<128x32xbf16>, vector<32x32xf32> -> vector<32x32xf32>
    %cst_65 = arith.constant 0.000000e+00 : f32
    %116 = vector.broadcast %cst_65 : f32 to vector<32x32xf32>
    %117 = arith.cmpf ogt, %109, %116 : vector<32x32xf32>
    %cst_66 = arith.constant 1.000000e+00 : f32
    %118 = vector.broadcast %cst_66 : f32 to vector<32x32xf32>
    %119 = arith.addf %109, %118 : vector<32x32xf32>
    %120 = math.exp %109 : vector<32x32xf32>
    %121 = arith.select %117, %119, %120 : vector<32x32xi1>, vector<32x32xf32>
    %cst_67 = arith.constant 0.000000e+00 : f32
    %122 = vector.broadcast %cst_67 : f32 to vector<32x32xf32>
    %123 = arith.cmpf ogt, %112, %122 : vector<32x32xf32>
    %cst_68 = arith.constant 1.000000e+00 : f32
    %124 = vector.broadcast %cst_68 : f32 to vector<32x32xf32>
    %125 = arith.addf %112, %124 : vector<32x32xf32>
    %126 = math.exp %112 : vector<32x32xf32>
    %127 = arith.select %123, %125, %126 : vector<32x32xi1>, vector<32x32xf32>
    %128 = vector.shape_cast %121 : vector<32x32xf32> to vector<2x16x32xf32>
    %129 = arith.truncf %128 : vector<2x16x32xf32> to vector<2x16x32xbf16>
    %130 = vector.shape_cast %127 : vector<32x32xf32> to vector<2x16x32xf32>
    %131 = arith.truncf %130 : vector<2x16x32xf32> to vector<2x16x32xbf16>
    %132 = vector.shape_cast %115 : vector<32x32xf32> to vector<2x16x32xf32>
    %133 = arith.truncf %132 : vector<2x16x32xf32> to vector<2x16x32xbf16>
    "tpu.trace_start"() <{level = 10 : i32, message = "bqd,bkd->bqk"}> : () -> ()
    %cst_69 = arith.constant dense<0.000000e+00> : vector<2x16x16xf32>
    %134 = tpu.matmul %129, %131, %cst_69 {dimension_numbers = #tpu.dot_dimension_numbers<[2], [2], [1], [1], [0, 0, 0, 1, 1, 1], [0], [0]>} : vector<2x16x32xbf16>, vector<2x16x32xbf16>, vector<2x16x16xf32> -> vector<2x16x16xf32>
    "tpu.trace_stop"() : () -> ()
    %cst_70 = arith.constant dense<0xFF800000> : vector<2x16xf32>
    %135 = vector.multi_reduction <maximumf>, %134, %cst_70 [2] : vector<2x16x16xf32> to vector<2x16xf32>
    %136 = vector.shape_cast %135 : vector<2x16xf32> to vector<2x16x1xf32>
    %137 = vector.broadcast %136 : vector<2x16x1xf32> to vector<2x16x16xf32>
    %138 = arith.subf %134, %137 : vector<2x16x16xf32>
    %139 = math.exp %138 : vector<2x16x16xf32>
    %cst_71 = arith.constant dense<0.000000e+00> : vector<2x16xf32>
    %140 = vector.multi_reduction <add>, %139, %cst_71 [2] : vector<2x16x16xf32> to vector<2x16xf32>
    %141 = vector.shape_cast %140 : vector<2x16xf32> to vector<2x16x1xf32>
    %142 = vector.broadcast %141 : vector<2x16x1xf32> to vector<2x16x16xf32>
    %143 = arith.divf %139, %142 : vector<2x16x16xf32>
    %144 = arith.truncf %143 : vector<2x16x16xf32> to vector<2x16x16xbf16>
    "tpu.trace_start"() <{level = 10 : i32, message = "bqk,bkd->bqd"}> : () -> ()
    %cst_72 = arith.constant dense<0.000000e+00> : vector<2x16x32xf32>
    %145 = tpu.matmul %144, %133, %cst_72 {dimension_numbers = #tpu.dot_dimension_numbers<[2], [1], [1], [2], [0, 0, 0, 1, 1, 2], [0], [0]>} : vector<2x16x16xbf16>, vector<2x16x32xbf16>, vector<2x16x32xf32> -> vector<2x16x32xf32>
    "tpu.trace_stop"() : () -> ()
    %146 = vector.shape_cast %145 : vector<2x16x32xf32> to vector<32x32xf32>
    %147 = arith.truncf %146 : vector<32x32xf32> to vector<32x32xbf16>
    %c2_73 = arith.constant 2 : index
    %c0_74 = arith.constant 0 : index
    %c0_75 = arith.constant 0 : index
    %148 = vector.load %arg6[%c2_73, %c0_74, %c0_75] : memref<4x32x128xbf16, #tpu.memory_space<vmem>>, vector<1x32x128xbf16>
    %149 = vector.shape_cast %148 : vector<1x32x128xbf16> to vector<32x128xbf16>
    %cst_76 = arith.constant dense<0.000000e+00> : vector<32x128xf32>
    %150 = tpu.matmul %147, %149, %cst_76 {dimension_numbers = #tpu.dot_dimension_numbers<[1], [0], [0], [1], [0, 0, 1, 1], [], []>} : vector<32x32xbf16>, vector<32x128xbf16>, vector<32x128xf32> -> vector<32x128xf32>
    %151 = arith.addf %106, %150 : vector<32x128xf32>
    %c3 = arith.constant 3 : index
    %c0_77 = arith.constant 0 : index
    %c0_78 = arith.constant 0 : index
    %152 = vector.load %arg3[%c3, %c0_77, %c0_78] : memref<4x128x32xbf16, #tpu.memory_space<vmem>>, vector<1x128x32xbf16>
    %153 = vector.shape_cast %152 : vector<1x128x32xbf16> to vector<128x32xbf16>
    %cst_79 = arith.constant dense<0.000000e+00> : vector<32x32xf32>
    %154 = tpu.matmul %15, %153, %cst_79 {dimension_numbers = #tpu.dot_dimension_numbers<[1], [0], [0], [1], [0, 0, 1, 1], [], []>} : vector<32x128xbf16>, vector<128x32xbf16>, vector<32x32xf32> -> vector<32x32xf32>
    %c3_80 = arith.constant 3 : index
    %c0_81 = arith.constant 0 : index
    %c0_82 = arith.constant 0 : index
    %155 = vector.load %arg4[%c3_80, %c0_81, %c0_82] : memref<4x128x32xbf16, #tpu.memory_space<vmem>>, vector<1x128x32xbf16>
    %156 = vector.shape_cast %155 : vector<1x128x32xbf16> to vector<128x32xbf16>
    %cst_83 = arith.constant dense<0.000000e+00> : vector<32x32xf32>
    %157 = tpu.matmul %15, %156, %cst_83 {dimension_numbers = #tpu.dot_dimension_numbers<[1], [0], [0], [1], [0, 0, 1, 1], [], []>} : vector<32x128xbf16>, vector<128x32xbf16>, vector<32x32xf32> -> vector<32x32xf32>
    %c3_84 = arith.constant 3 : index
    %c0_85 = arith.constant 0 : index
    %c0_86 = arith.constant 0 : index
    %158 = vector.load %arg5[%c3_84, %c0_85, %c0_86] : memref<4x128x32xbf16, #tpu.memory_space<vmem>>, vector<1x128x32xbf16>
    %159 = vector.shape_cast %158 : vector<1x128x32xbf16> to vector<128x32xbf16>
    %cst_87 = arith.constant dense<0.000000e+00> : vector<32x32xf32>
    %160 = tpu.matmul %15, %159, %cst_87 {dimension_numbers = #tpu.dot_dimension_numbers<[1], [0], [0], [1], [0, 0, 1, 1], [], []>} : vector<32x128xbf16>, vector<128x32xbf16>, vector<32x32xf32> -> vector<32x32xf32>
    %cst_88 = arith.constant 0.000000e+00 : f32
    %161 = vector.broadcast %cst_88 : f32 to vector<32x32xf32>
    %162 = arith.cmpf ogt, %154, %161 : vector<32x32xf32>
    %cst_89 = arith.constant 1.000000e+00 : f32
    %163 = vector.broadcast %cst_89 : f32 to vector<32x32xf32>
    %164 = arith.addf %154, %163 : vector<32x32xf32>
    %165 = math.exp %154 : vector<32x32xf32>
    %166 = arith.select %162, %164, %165 : vector<32x32xi1>, vector<32x32xf32>
    %cst_90 = arith.constant 0.000000e+00 : f32
    %167 = vector.broadcast %cst_90 : f32 to vector<32x32xf32>
    %168 = arith.cmpf ogt, %157, %167 : vector<32x32xf32>
    %cst_91 = arith.constant 1.000000e+00 : f32
    %169 = vector.broadcast %cst_91 : f32 to vector<32x32xf32>
    %170 = arith.addf %157, %169 : vector<32x32xf32>
    %171 = math.exp %157 : vector<32x32xf32>
    %172 = arith.select %168, %170, %171 : vector<32x32xi1>, vector<32x32xf32>
    %173 = vector.shape_cast %166 : vector<32x32xf32> to vector<2x16x32xf32>
    %174 = arith.truncf %173 : vector<2x16x32xf32> to vector<2x16x32xbf16>
    %175 = vector.shape_cast %172 : vector<32x32xf32> to vector<2x16x32xf32>
    %176 = arith.truncf %175 : vector<2x16x32xf32> to vector<2x16x32xbf16>
    %177 = vector.shape_cast %160 : vector<32x32xf32> to vector<2x16x32xf32>
    %178 = arith.truncf %177 : vector<2x16x32xf32> to vector<2x16x32xbf16>
    "tpu.trace_start"() <{level = 10 : i32, message = "bqd,bkd->bqk"}> : () -> ()
    %cst_92 = arith.constant dense<0.000000e+00> : vector<2x16x16xf32>
    %179 = tpu.matmul %174, %176, %cst_92 {dimension_numbers = #tpu.dot_dimension_numbers<[2], [2], [1], [1], [0, 0, 0, 1, 1, 1], [0], [0]>} : vector<2x16x32xbf16>, vector<2x16x32xbf16>, vector<2x16x16xf32> -> vector<2x16x16xf32>
    "tpu.trace_stop"() : () -> ()
    %cst_93 = arith.constant dense<0xFF800000> : vector<2x16xf32>
    %180 = vector.multi_reduction <maximumf>, %179, %cst_93 [2] : vector<2x16x16xf32> to vector<2x16xf32>
    %181 = vector.shape_cast %180 : vector<2x16xf32> to vector<2x16x1xf32>
    %182 = vector.broadcast %181 : vector<2x16x1xf32> to vector<2x16x16xf32>
    %183 = arith.subf %179, %182 : vector<2x16x16xf32>
    %184 = math.exp %183 : vector<2x16x16xf32>
    %cst_94 = arith.constant dense<0.000000e+00> : vector<2x16xf32>
    %185 = vector.multi_reduction <add>, %184, %cst_94 [2] : vector<2x16x16xf32> to vector<2x16xf32>
    %186 = vector.shape_cast %185 : vector<2x16xf32> to vector<2x16x1xf32>
    %187 = vector.broadcast %186 : vector<2x16x1xf32> to vector<2x16x16xf32>
    %188 = arith.divf %184, %187 : vector<2x16x16xf32>
    %189 = arith.truncf %188 : vector<2x16x16xf32> to vector<2x16x16xbf16>
    "tpu.trace_start"() <{level = 10 : i32, message = "bqk,bkd->bqd"}> : () -> ()
    %cst_95 = arith.constant dense<0.000000e+00> : vector<2x16x32xf32>
    %190 = tpu.matmul %189, %178, %cst_95 {dimension_numbers = #tpu.dot_dimension_numbers<[2], [1], [1], [2], [0, 0, 0, 1, 1, 2], [0], [0]>} : vector<2x16x16xbf16>, vector<2x16x32xbf16>, vector<2x16x32xf32> -> vector<2x16x32xf32>
    "tpu.trace_stop"() : () -> ()
    %191 = vector.shape_cast %190 : vector<2x16x32xf32> to vector<32x32xf32>
    %192 = arith.truncf %191 : vector<32x32xf32> to vector<32x32xbf16>
    %c3_96 = arith.constant 3 : index
    %c0_97 = arith.constant 0 : index
    %c0_98 = arith.constant 0 : index
    %193 = vector.load %arg6[%c3_96, %c0_97, %c0_98] : memref<4x32x128xbf16, #tpu.memory_space<vmem>>, vector<1x32x128xbf16>
    %194 = vector.shape_cast %193 : vector<1x32x128xbf16> to vector<32x128xbf16>
    %cst_99 = arith.constant dense<0.000000e+00> : vector<32x128xf32>
    %195 = tpu.matmul %192, %194, %cst_99 {dimension_numbers = #tpu.dot_dimension_numbers<[1], [0], [0], [1], [0, 0, 1, 1], [], []>} : vector<32x32xbf16>, vector<32x128xbf16>, vector<32x128xf32> -> vector<32x128xf32>
    %196 = arith.addf %151, %195 : vector<32x128xf32>
    %197 = arith.addf %1, %196 : vector<32x128xf32>
    %198 = vector.shape_cast %197 : vector<32x128xf32> to vector<2x16x128xf32>
    %c0_100 = arith.constant 0 : index
    %c0_101 = arith.constant 0 : index
    %c0_102 = arith.constant 0 : index
    %199 = vector.load %arg10[%c0_100, %c0_101, %c0_102] : memref<2x16x128xf32, #tpu.memory_space<vmem>>, vector<2x16x128xf32>
    tpu.vector_store %arg10[%c0_100, %c0_101, %c0_102], %198 {strides = array<i32>} : memref<2x16x128xf32, #tpu.memory_space<vmem>>, vector<2x16x128xf32>,
    %200 = arith.mulf %197, %197 : vector<32x128xf32>
    %cst_103 = arith.constant dense<0.000000e+00> : vector<32xf32>
    %201 = vector.multi_reduction <add>, %200, %cst_103 [1] : vector<32x128xf32> to vector<32xf32>
    %202 = vector.shape_cast %201 : vector<32xf32> to vector<32x1xf32>
    %cst_104 = arith.constant 1.280000e+02 : f32
    %203 = vector.broadcast %cst_104 : f32 to vector<32x1xf32>
    %204 = arith.divf %202, %203 : vector<32x1xf32>
    %cst_105 = arith.constant 9.99999997E-7 : f32
    %205 = vector.broadcast %cst_105 : f32 to vector<32x1xf32>
    %206 = arith.addf %204, %205 : vector<32x1xf32>
    %207 = math.rsqrt %206 : vector<32x1xf32>
    %208 = vector.broadcast %207 : vector<32x1xf32> to vector<32x128xf32>
    %209 = arith.mulf %197, %208 : vector<32x128xf32>
    %c0_106 = arith.constant 0 : index
    %c0_107 = arith.constant 0 : index
    %210 = vector.load %arg7[%c0_106, %c0_107] : memref<1x128xf32, #tpu.memory_space<vmem>>, vector<1x128xf32>
    %211 = vector.broadcast %210 : vector<1x128xf32> to vector<32x128xf32>
    %212 = arith.mulf %209, %211 : vector<32x128xf32>
    %213 = arith.truncf %212 : vector<32x128xf32> to vector<32x128xbf16>
    %c0_108 = arith.constant 0 : index
    %c0_109 = arith.constant 0 : index
    %214 = vector.load %arg8[%c0_108, %c0_109] : memref<128x4xbf16, #tpu.memory_space<vmem>>, vector<128x4xbf16>
    %cst_110 = arith.constant dense<0.000000e+00> : vector<32x4xf32>
    %215 = tpu.matmul %213, %214, %cst_110 {dimension_numbers = #tpu.dot_dimension_numbers<[1], [0], [0], [1], [0, 0, 1, 1], [], []>} : vector<32x128xbf16>, vector<128x4xbf16>, vector<32x4xf32> -> vector<32x4xf32>
    %c0_111 = arith.constant 0 : index
    %c0_112 = arith.constant 0 : index
    %216 = vector.load %arg9[%c0_111, %c0_112] : memref<1x4xf32, #tpu.memory_space<vmem>>, vector<1x4xf32>
    %217 = vector.broadcast %216 : vector<1x4xf32> to vector<32x4xf32>
    %218 = arith.addf %215, %217 : vector<32x4xf32>
    %cst_113 = arith.constant dense<0xFF800000> : vector<32xf32>
    %219 = vector.multi_reduction <maximumf>, %218, %cst_113 [1] : vector<32x4xf32> to vector<32xf32>
    %220 = vector.shape_cast %219 : vector<32xf32> to vector<32x1xf32>
    %221 = vector.broadcast %220 : vector<32x1xf32> to vector<32x4xf32>
    %222 = arith.subf %218, %221 : vector<32x4xf32>
    %223 = math.exp %222 : vector<32x4xf32>
    %cst_114 = arith.constant dense<0.000000e+00> : vector<32xf32>
    %224 = vector.multi_reduction <add>, %223, %cst_114 [1] : vector<32x4xf32> to vector<32xf32>
    %225 = vector.shape_cast %224 : vector<32xf32> to vector<32x1xf32>
    %226 = vector.broadcast %225 : vector<32x1xf32> to vector<32x4xf32>
    %227 = arith.divf %223, %226 : vector<32x4xf32>
    %228 = vector.shape_cast %227 : vector<32x4xf32> to vector<2x16x4xf32>
    %c0_115 = arith.constant 0 : index
    %c0_116 = arith.constant 0 : index
    %c0_117 = arith.constant 0 : index
    %229 = vector.load %arg11[%c0_115, %c0_116, %c0_117] : memref<2x16x4xf32, #tpu.memory_space<vmem>>, vector<2x16x4xf32>
    tpu.vector_store %arg11[%c0_115, %c0_116, %c0_117], %228 {strides = array<i32>} : memref<2x16x4xf32, #tpu.memory_space<vmem>>, vector<2x16x4xf32>,
    return
  }
  func.func @transform_0(%arg0: i32) -> (i32, i32, i32) {
    %c0_i32 = arith.constant 0 : i32
    %c0_i32_0 = arith.constant 0 : i32
    %c0_i32_1 = arith.constant 0 : i32
    return %arg0, %c0_i32, %c0_i32_0 : i32, i32, i32
  }
  func.func @transform_1(%arg0: i32) -> (i32, i32) {
    %c0_i32 = arith.constant 0 : i32
    %c0_i32_0 = arith.constant 0 : i32
    %c0_i32_1 = arith.constant 0 : i32
    return %c0_i32, %c0_i32_0 : i32, i32
  }
  func.func @transform_2(%arg0: i32) -> (i32, i32, i32) {
    %c0_i32 = arith.constant 0 : i32
    %c0_i32_0 = arith.constant 0 : i32
    %c0_i32_1 = arith.constant 0 : i32
    %c0_i32_2 = arith.constant 0 : i32
    return %c0_i32, %c0_i32_0, %c0_i32_1 : i32, i32, i32
  }
  func.func @transform_3(%arg0: i32) -> (i32, i32, i32) {
    %c0_i32 = arith.constant 0 : i32
    %c0_i32_0 = arith.constant 0 : i32
    %c0_i32_1 = arith.constant 0 : i32
    %c0_i32_2 = arith.constant 0 : i32
    return %c0_i32, %c0_i32_0, %c0_i32_1 : i32, i32, i32
  }
  func.func @transform_4(%arg0: i32) -> (i32, i32, i32) {
    %c0_i32 = arith.constant 0 : i32
    %c0_i32_0 = arith.constant 0 : i32
    %c0_i32_1 = arith.constant 0 : i32
    %c0_i32_2 = arith.constant 0 : i32
    return %c0_i32, %c0_i32_0, %c0_i32_1 : i32, i32, i32
  }
  func.func @transform_5(%arg0: i32) -> (i32, i32, i32) {
    %c0_i32 = arith.constant 0 : i32
    %c0_i32_0 = arith.constant 0 : i32
    %c0_i32_1 = arith.constant 0 : i32
    %c0_i32_2 = arith.constant 0 : i32
    return %c0_i32, %c0_i32_0, %c0_i32_1 : i32, i32, i32
  }
  func.func @transform_6(%arg0: i32) -> (i32, i32) {
    %c0_i32 = arith.constant 0 : i32
    %c0_i32_0 = arith.constant 0 : i32
    %c0_i32_1 = arith.constant 0 : i32
    return %c0_i32, %c0_i32_0 : i32, i32
  }
  func.func @transform_7(%arg0: i32) -> (i32, i32) {
    %c0_i32 = arith.constant 0 : i32
    %c0_i32_0 = arith.constant 0 : i32
    %c0_i32_1 = arith.constant 0 : i32
    return %c0_i32, %c0_i32_0 : i32, i32
  }
  func.func @transform_8(%arg0: i32) -> (i32, i32) {
    %c0_i32 = arith.constant 0 : i32
    %c0_i32_0 = arith.constant 0 : i32
    %c0_i32_1 = arith.constant 0 : i32
    return %c0_i32, %c0_i32_0 : i32, i32
  }
  func.func @transform_9(%arg0: i32) -> (i32, i32, i32) {
    %c0_i32 = arith.constant 0 : i32
    %c0_i32_0 = arith.constant 0 : i32
    %c0_i32_1 = arith.constant 0 : i32
    return %arg0, %c0_i32, %c0_i32_0 : i32, i32, i32
  }
  func.func @transform_10(%arg0: i32) -> (i32, i32, i32) {
    %c0_i32 = arith.constant 0 : i32
    %c0_i32_0 = arith.constant 0 : i32
    %c0_i32_1 = arith.constant 0 : i32
    return %arg0, %c0_i32, %c0_i32_0 : i32, i32, i32
  }
}

module attributes {stable_mosaic.version = 11 : i64} {
  func.func @_final_norm_head_kernel(%arg0: i32, %arg1: i32, %arg2: memref<32x128xf32, #tpu.memory_space<vmem>>, %arg3: memref<1x128xf32, #tpu.memory_space<vmem>>, %arg4: memref<128x128xbf16, #tpu.memory_space<vmem>>, %arg5: memref<32x128xf32, #tpu.memory_space<vmem>>, %arg6: memref<32x128xbf16, #tpu.memory_space<vmem>>) attributes {dimension_semantics = [#tpu.dimension_semantics<parallel>, #tpu.dimension_semantics<arbitrary>], iteration_bounds = array<i64: 1, 1>, scalar_prefetch = 0 : i64, scratch_operands = 1 : i64, tpu.core_type = #tpu.core_type<tc>, window_params = [{transform_indices = @transform_0, window_bounds = array<i64: 32, 128>}, {pipeline_mode = #tpu.pipeline_mode<synchronous>, transform_indices = @transform_1, window_bounds = array<i64: 1, 128>}, {transform_indices = @transform_2, window_bounds = array<i64: 128, 128>}, {transform_indices = @transform_3, window_bounds = array<i64: 32, 128>}]} {
    %c0_i32 = arith.constant 0 : i32
    %0 = arith.cmpi eq, %arg1, %c0_i32 : i32
    %1 = arith.extui %0 : i1 to i32
    %c0_i32_0 = arith.constant 0 : i32
    %2 = arith.cmpi ne, %1, %c0_i32_0 : i32
    scf.if %2 {
      %c0_6 = arith.constant 0 : index
      %c0_7 = arith.constant 0 : index
      %7 = vector.load %arg2[%c0_6, %c0_7] : memref<32x128xf32, #tpu.memory_space<vmem>>, vector<32x128xf32>
      %8 = arith.mulf %7, %7 : vector<32x128xf32>
      %cst_8 = arith.constant dense<0.000000e+00> : vector<32xf32>
      %9 = vector.multi_reduction <add>, %8, %cst_8 [1] : vector<32x128xf32> to vector<32xf32>
      %10 = vector.shape_cast %9 : vector<32xf32> to vector<32x1xf32>
      %cst_9 = arith.constant 1.280000e+02 : f32
      %11 = vector.broadcast %cst_9 : f32 to vector<32x1xf32>
      %12 = arith.divf %10, %11 : vector<32x1xf32>
      %cst_10 = arith.constant 9.99999997E-7 : f32
      %13 = vector.broadcast %cst_10 : f32 to vector<32x1xf32>
      %14 = arith.addf %12, %13 : vector<32x1xf32>
      %15 = math.rsqrt %14 : vector<32x1xf32>
      %16 = vector.broadcast %15 : vector<32x1xf32> to vector<32x128xf32>
      %17 = arith.mulf %7, %16 : vector<32x128xf32>
      %c0_11 = arith.constant 0 : index
      %c0_12 = arith.constant 0 : index
      %18 = vector.load %arg3[%c0_11, %c0_12] : memref<1x128xf32, #tpu.memory_space<vmem>>, vector<1x128xf32>
      %19 = vector.broadcast %18 : vector<1x128xf32> to vector<32x128xf32>
      %20 = arith.mulf %17, %19 : vector<32x128xf32>
      %21 = arith.truncf %20 : vector<32x128xf32> to vector<32x128xbf16>
      %c0_13 = arith.constant 0 : index
      %c0_14 = arith.constant 0 : index
      %22 = vector.load %arg6[%c0_13, %c0_14] : memref<32x128xbf16, #tpu.memory_space<vmem>>, vector<32x128xbf16>
      tpu.vector_store %arg6[%c0_13, %c0_14], %21 {strides = array<i32>} : memref<32x128xbf16, #tpu.memory_space<vmem>>, vector<32x128xbf16>,
    } else {
    }
    %c0 = arith.constant 0 : index
    %c0_1 = arith.constant 0 : index
    %3 = vector.load %arg6[%c0, %c0_1] : memref<32x128xbf16, #tpu.memory_space<vmem>>, vector<32x128xbf16>
    %c0_2 = arith.constant 0 : index
    %c0_3 = arith.constant 0 : index
    %4 = vector.load %arg4[%c0_2, %c0_3] : memref<128x128xbf16, #tpu.memory_space<vmem>>, vector<128x128xbf16>
    %cst = arith.constant dense<0.000000e+00> : vector<32x128xf32>
    %5 = tpu.matmul %3, %4, %cst {dimension_numbers = #tpu.dot_dimension_numbers<[1], [0], [0], [1], [0, 0, 1, 1], [], []>} : vector<32x128xbf16>, vector<128x128xbf16>, vector<32x128xf32> -> vector<32x128xf32>
    %c0_4 = arith.constant 0 : index
    %c0_5 = arith.constant 0 : index
    %6 = vector.load %arg5[%c0_4, %c0_5] : memref<32x128xf32, #tpu.memory_space<vmem>>, vector<32x128xf32>
    tpu.vector_store %arg5[%c0_4, %c0_5], %5 {strides = array<i32>} : memref<32x128xf32, #tpu.memory_space<vmem>>, vector<32x128xf32>,
    return
  }
  func.func @transform_0(%arg0: i32, %arg1: i32) -> (i32, i32) {
    %c0_i32 = arith.constant 0 : i32
    %c0_i32_0 = arith.constant 0 : i32
    return %arg0, %c0_i32 : i32, i32
  }
  func.func @transform_1(%arg0: i32, %arg1: i32) -> (i32, i32) {
    %c0_i32 = arith.constant 0 : i32
    %c0_i32_0 = arith.constant 0 : i32
    %c0_i32_1 = arith.constant 0 : i32
    return %c0_i32, %c0_i32_0 : i32, i32
  }
  func.func @transform_2(%arg0: i32, %arg1: i32) -> (i32, i32) {
    %c0_i32 = arith.constant 0 : i32
    %c0_i32_0 = arith.constant 0 : i32
    return %c0_i32, %arg1 : i32, i32
  }
  func.func @transform_3(%arg0: i32, %arg1: i32) -> (i32, i32) {
    %c0_i32 = arith.constant 0 : i32
    return %arg0, %arg1 : i32, i32
  }
}

module attributes {stable_mosaic.version = 11 : i64} {
  func.func @_moe_expert_kernel(%arg0: i32, %arg1: i32, %arg2: memref<1xi32, #tpu.memory_space<smem>>, %arg3: memref<4xi32, #tpu.memory_space<smem>>, %arg4: memref<32x128xf32, #tpu.memory_space<vmem>>, %arg5: memref<32x4xf32, #tpu.memory_space<vmem>>, %arg6: memref<1x128xf32, #tpu.memory_space<vmem>>, %arg7: memref<1x128x512xbf16, #tpu.memory_space<vmem>>, %arg8: memref<1x256x128xbf16, #tpu.memory_space<vmem>>, %arg9: memref<32x128xf32, #tpu.memory_space<vmem>>, %arg10: memref<32x128xbf16, #tpu.memory_space<vmem>>) attributes {dimension_semantics = [#tpu.dimension_semantics<parallel>, #tpu.dimension_semantics<arbitrary>], iteration_bounds = array<i64: 1, 4>, scalar_prefetch = 2 : i64, scratch_operands = 1 : i64, tpu.core_type = #tpu.core_type<tc>, window_params = [{transform_indices = @transform_0, window_bounds = array<i64: 32, 128>}, {transform_indices = @transform_1, window_bounds = array<i64: 32, 4>}, {pipeline_mode = #tpu.pipeline_mode<synchronous>, transform_indices = @transform_2, window_bounds = array<i64: 1, 128>}, {transform_indices = @transform_3, window_bounds = array<i64: 1, 128, 512>}, {transform_indices = @transform_4, window_bounds = array<i64: 1, 256, 128>}, {transform_indices = @transform_5, window_bounds = array<i64: 32, 128>}]} {
    %c0_i32 = arith.constant 0 : i32
    %0 = arith.cmpi eq, %arg1, %c0_i32 : i32
    %1 = arith.extui %0 : i1 to i32
    %c0_i32_0 = arith.constant 0 : i32
    %2 = arith.cmpi ne, %1, %c0_i32_0 : i32
    scf.if %2 {
      %c0_2 = arith.constant 0 : index
      %c0_3 = arith.constant 0 : index
      %7 = vector.load %arg4[%c0_2, %c0_3] : memref<32x128xf32, #tpu.memory_space<vmem>>, vector<32x128xf32>
      %c0_4 = arith.constant 0 : index
      %c0_5 = arith.constant 0 : index
      %8 = vector.load %arg9[%c0_4, %c0_5] : memref<32x128xf32, #tpu.memory_space<vmem>>, vector<32x128xf32>
      tpu.vector_store %arg9[%c0_4, %c0_5], %7 {strides = array<i32>} : memref<32x128xf32, #tpu.memory_space<vmem>>, vector<32x128xf32>,
      %9 = arith.mulf %7, %7 : vector<32x128xf32>
      %cst = arith.constant dense<0.000000e+00> : vector<32xf32>
      %10 = vector.multi_reduction <add>, %9, %cst [1] : vector<32x128xf32> to vector<32xf32>
      %11 = vector.shape_cast %10 : vector<32xf32> to vector<32x1xf32>
      %cst_6 = arith.constant 1.280000e+02 : f32
      %12 = vector.broadcast %cst_6 : f32 to vector<32x1xf32>
      %13 = arith.divf %11, %12 : vector<32x1xf32>
      %cst_7 = arith.constant 9.99999997E-7 : f32
      %14 = vector.broadcast %cst_7 : f32 to vector<32x1xf32>
      %15 = arith.addf %13, %14 : vector<32x1xf32>
      %16 = math.rsqrt %15 : vector<32x1xf32>
      %17 = vector.broadcast %16 : vector<32x1xf32> to vector<32x128xf32>
      %18 = arith.mulf %7, %17 : vector<32x128xf32>
      %c0_8 = arith.constant 0 : index
      %c0_9 = arith.constant 0 : index
      %19 = vector.load %arg6[%c0_8, %c0_9] : memref<1x128xf32, #tpu.memory_space<vmem>>, vector<1x128xf32>
      %20 = vector.broadcast %19 : vector<1x128xf32> to vector<32x128xf32>
      %21 = arith.mulf %18, %20 : vector<32x128xf32>
      %22 = arith.truncf %21 : vector<32x128xf32> to vector<32x128xbf16>
      %c0_10 = arith.constant 0 : index
      %c0_11 = arith.constant 0 : index
      %23 = vector.load %arg10[%c0_10, %c0_11] : memref<32x128xbf16, #tpu.memory_space<vmem>>, vector<32x128xbf16>
      tpu.vector_store %arg10[%c0_10, %c0_11], %22 {strides = array<i32>} : memref<32x128xbf16, #tpu.memory_space<vmem>>, vector<32x128xbf16>,
    } else {
    }
    %c0 = arith.constant 0 : index
    %3 = memref.load %arg2[%c0] : memref<1xi32, #tpu.memory_space<smem>>
    %4 = arith.cmpi slt, %arg1, %3 : i32
    %5 = arith.extui %4 : i1 to i32
    %c0_i32_1 = arith.constant 0 : i32
    %6 = arith.cmpi ne, %5, %c0_i32_1 : i32
    scf.if %6 {
      %7 = arith.index_cast %arg1 : i32 to index
      %8 = memref.load %arg3[%7] : memref<4xi32, #tpu.memory_space<smem>>
      %c0_2 = arith.constant 0 : index
      %c0_3 = arith.constant 0 : index
      %9 = vector.load %arg10[%c0_2, %c0_3] : memref<32x128xbf16, #tpu.memory_space<vmem>>, vector<32x128xbf16>
      %c0_4 = arith.constant 0 : index
      %c0_5 = arith.constant 0 : index
      %c0_6 = arith.constant 0 : index
      %10 = vector.load %arg7[%c0_4, %c0_5, %c0_6] : memref<1x128x512xbf16, #tpu.memory_space<vmem>>, vector<1x128x512xbf16>
      %11 = vector.shape_cast %10 : vector<1x128x512xbf16> to vector<128x512xbf16>
      %cst = arith.constant dense<0.000000e+00> : vector<32x512xf32>
      %12 = tpu.matmul %9, %11, %cst {dimension_numbers = #tpu.dot_dimension_numbers<[1], [0], [0], [1], [0, 0, 1, 1], [], []>} : vector<32x128xbf16>, vector<128x512xbf16>, vector<32x512xf32> -> vector<32x512xf32>
      %13 = vector.extract_strided_slice %12 {offsets = [0, 0], sizes = [32, 256], strides = [1, 1]} : vector<32x512xf32> to vector<32x256xf32>
      %14 = vector.extract_strided_slice %12 {offsets = [0, 256], sizes = [32, 256], strides = [1, 1]} : vector<32x512xf32> to vector<32x256xf32>
      %15 = arith.negf %13 : vector<32x256xf32>
      %16 = math.exp %15 : vector<32x256xf32>
      %cst_7 = arith.constant 1.000000e+00 : f32
      %17 = vector.broadcast %cst_7 : f32 to vector<32x256xf32>
      %18 = arith.addf %17, %16 : vector<32x256xf32>
      %19 = arith.divf %17, %18 : vector<32x256xf32>
      %20 = arith.mulf %13, %19 : vector<32x256xf32>
      %21 = arith.mulf %20, %14 : vector<32x256xf32>
      %22 = arith.truncf %21 : vector<32x256xf32> to vector<32x256xbf16>
      %c0_8 = arith.constant 0 : index
      %c0_9 = arith.constant 0 : index
      %c0_10 = arith.constant 0 : index
      %23 = vector.load %arg8[%c0_8, %c0_9, %c0_10] : memref<1x256x128xbf16, #tpu.memory_space<vmem>>, vector<1x256x128xbf16>
      %24 = vector.shape_cast %23 : vector<1x256x128xbf16> to vector<256x128xbf16>
      %cst_11 = arith.constant dense<0.000000e+00> : vector<32x128xf32>
      %25 = tpu.matmul %22, %24, %cst_11 {dimension_numbers = #tpu.dot_dimension_numbers<[1], [0], [0], [1], [0, 0, 1, 1], [], []>} : vector<32x256xbf16>, vector<256x128xbf16>, vector<32x128xf32> -> vector<32x128xf32>
      %c0_12 = arith.constant 0 : index
      %c0_13 = arith.constant 0 : index
      %26 = vector.load %arg5[%c0_12, %c0_13] : memref<32x4xf32, #tpu.memory_space<vmem>>, vector<32x4xf32>
      %27 = tpu.iota {dimensions = array<i32: 1>} : vector<32x4xi32>
      %28 = vector.broadcast %8 : i32 to vector<32x4xi32>
      %29 = arith.cmpi eq, %27, %28 : vector<32x4xi32>
      %cst_14 = arith.constant 0.000000e+00 : f32
      %30 = vector.broadcast %cst_14 : f32 to vector<32x4xf32>
      %31 = arith.select %29, %26, %30 : vector<32x4xi1>, vector<32x4xf32>
      %cst_15 = arith.constant dense<0.000000e+00> : vector<32xf32>
      %32 = vector.multi_reduction <add>, %31, %cst_15 [1] : vector<32x4xf32> to vector<32xf32>
      %33 = vector.shape_cast %32 : vector<32xf32> to vector<32x1xf32>
      %c0_16 = arith.constant 0 : index
      %c0_17 = arith.constant 0 : index
      %34 = vector.load %arg9[%c0_16, %c0_17] : memref<32x128xf32, #tpu.memory_space<vmem>>, vector<32x128xf32>
      %35 = vector.broadcast %33 : vector<32x1xf32> to vector<32x128xf32>
      %36 = arith.mulf %25, %35 : vector<32x128xf32>
      %37 = arith.addf %34, %36 : vector<32x128xf32>
      %c0_18 = arith.constant 0 : index
      %c0_19 = arith.constant 0 : index
      %38 = vector.load %arg9[%c0_18, %c0_19] : memref<32x128xf32, #tpu.memory_space<vmem>>, vector<32x128xf32>
      tpu.vector_store %arg9[%c0_18, %c0_19], %37 {strides = array<i32>} : memref<32x128xf32, #tpu.memory_space<vmem>>, vector<32x128xf32>,
    } else {
    }
    return
  }
  func.func @transform_0(%arg0: i32, %arg1: i32, %arg2: memref<1xi32, #tpu.memory_space<smem>>, %arg3: memref<4xi32, #tpu.memory_space<smem>>) -> (i32, i32) {
    %c0_i32 = arith.constant 0 : i32
    %c0_i32_0 = arith.constant 0 : i32
    return %arg0, %c0_i32 : i32, i32
  }
  func.func @transform_1(%arg0: i32, %arg1: i32, %arg2: memref<1xi32, #tpu.memory_space<smem>>, %arg3: memref<4xi32, #tpu.memory_space<smem>>) -> (i32, i32) {
    %c0_i32 = arith.constant 0 : i32
    %c0_i32_0 = arith.constant 0 : i32
    return %arg0, %c0_i32 : i32, i32
  }
  func.func @transform_2(%arg0: i32, %arg1: i32, %arg2: memref<1xi32, #tpu.memory_space<smem>>, %arg3: memref<4xi32, #tpu.memory_space<smem>>) -> (i32, i32) {
    %c0_i32 = arith.constant 0 : i32
    %c0_i32_0 = arith.constant 0 : i32
    %c0_i32_1 = arith.constant 0 : i32
    return %c0_i32, %c0_i32_0 : i32, i32
  }
  func.func @transform_3(%arg0: i32, %arg1: i32, %arg2: memref<1xi32, #tpu.memory_space<smem>>, %arg3: memref<4xi32, #tpu.memory_space<smem>>) -> (i32, i32, i32) {
    %0 = arith.index_cast %arg1 : i32 to index
    %1 = memref.load %arg3[%0] : memref<4xi32, #tpu.memory_space<smem>>
    %c0_i32 = arith.constant 0 : i32
    %c0_i32_0 = arith.constant 0 : i32
    %c0_i32_1 = arith.constant 0 : i32
    return %1, %c0_i32, %c0_i32_0 : i32, i32, i32
  }
  func.func @transform_4(%arg0: i32, %arg1: i32, %arg2: memref<1xi32, #tpu.memory_space<smem>>, %arg3: memref<4xi32, #tpu.memory_space<smem>>) -> (i32, i32, i32) {
    %0 = arith.index_cast %arg1 : i32 to index
    %1 = memref.load %arg3[%0] : memref<4xi32, #tpu.memory_space<smem>>
    %c0_i32 = arith.constant 0 : i32
    %c0_i32_0 = arith.constant 0 : i32
    %c0_i32_1 = arith.constant 0 : i32
    return %1, %c0_i32, %c0_i32_0 : i32, i32, i32
  }
  func.func @transform_5(%arg0: i32, %arg1: i32, %arg2: memref<1xi32, #tpu.memory_space<smem>>, %arg3: memref<4xi32, #tpu.memory_space<smem>>) -> (i32, i32) {
    %c0_i32 = arith.constant 0 : i32
    %c0_i32_0 = arith.constant 0 : i32
    return %arg0, %c0_i32 : i32, i32
  }
}

</mosaic_0001>

<llo_original>
// kernel: llama_forward.9
$region0: #{llama_forward.9}
  #allocation0 [shape = 'u32[]', space=smem, size = 0x4, offset = 0x4, fixed_abs, tag = 'smem constant byte address 0x4 - core index']
  #allocation1 [shape = 'u32[72,128]{1,0:T(1,128)}', space=vmem, size = 0x9000, scoped, tag = 'internal scratch']
  #allocation2 [shape = 'bf16[32,128]{1,0:T(8,128)(2,1)}', space=vmem, size = 0x2000, scoped, tag = 'scratch operand']
  %s0 = inlined_call_operand.vmem [shape: f32[32,128], index: 0, kind: input, shape index: {}]
  %s1 = inlined_call_operand.vmem [shape: f32[1,128], index: 1, kind: input, shape index: {}]
  %s2 = inlined_call_operand.vmem [shape: bf16[128,128], index: 2, kind: input, shape index: {}]
  %s3 = inlined_call_operand.hbm [shape: f32[32,128], index: 3, kind: output, shape index: {}]
  %s4 = sld [smem:[#allocation0]]
  $region26: #{llama_forward.9} parent=0
    _
  %s6 = ssub.s32 1, %s4
  %s7 = scalar_select 0, %s6, %s4
  $region1: #{llama_forward.9} parent=0
    #allocation3 [shape = 'u8[16384]{0}', space=vmem, size = 0x4000, scoped, tag = 'output window, operand 0, single buffered']
    #allocation4 [shape = 's32[1]{0}', space=sflag, size = 0x4, scoped, tag = 'scoped memory for llama_forward.9']
    %8 = vsyncpa [#allocation4], 0
    // Predicated region
    $region2: #{llama_forward.9} parent=1 // pred_check
      _
    $region3: #{llama_forward.9} parent=1 // pred_check_branch
      %10 = sbr.rel (0) target = $region5
    $region4: #{llama_forward.9} parent=1 // pred_region
      _
    $region5: #{llama_forward.9} parent=1 // pred_fallthru
      _
    // Predicated region
    $region6: #{llama_forward.9} parent=1 // pred_check
      _
    $region7: #{llama_forward.9} parent=1 // pred_check_branch
      %12 = sbr.rel (0) target = $region9
    $region8: #{llama_forward.9} parent=1 // pred_region
      _
    $region9: #{llama_forward.9} parent=1 // pred_fallthru
      _
    // Predicated region
    $region10: #{llama_forward.9} parent=1 // pred_check
      _
    $region11: #{llama_forward.9} parent=1 // pred_check_branch
      %14 = sbr.rel (0) target = $region13
    $region12: #{llama_forward.9} parent=1 // pred_region
      _
    $region13: #{llama_forward.9} parent=1 // pred_fallthru
      _
    %p15 = scmp.eq.s32.totalorder 0, 0
    // Predicated region
    $region14: #{llama_forward.9} parent=1 // pred_check
      %p16 = pneg %p15
    $region15: #{llama_forward.9} parent=1 // pred_check_branch
      %18 = sbr.rel (%p16) target = $region17
    $region16: #{llama_forward.9} parent=1 // pred_region
      %v19 = vld [vmem:[%s0] sm:$0xff]
      %v20 = vld [vmem:[%s0 + $0x8] sm:$0xff]
      %v21 = vld [vmem:[%s0 + $0x10] sm:$0xff]
      %v22 = vld [vmem:[%s0 + $0x18] sm:$0xff]
      %v23 = vmul.f32 %v19, %v19
      %v24 = vmul.f32 %v20, %v20
      %v25 = vmul.f32 %v21, %v21
      %v26 = vmul.f32 %v22, %v22
      %27 = vadd.xlane.f32.xlu0 %v23
      %v28 = vpop.xlane.xlu0 %27
      %29 = vadd.xlane.f32.xlu0 %v24
      %v30 = vpop.xlane.xlu0 %29
      %31 = vadd.xlane.f32.xlu0 %v25
      %v32 = vpop.xlane.xlu0 %31
      %33 = vadd.xlane.f32.xlu0 %v26
      %v34 = vpop.xlane.xlu0 %33
      %v35 = vrcp.pop 128.0
      %v36 = vmul.f32 128.0, %v35
      %v37 = vsub.f32 1.0, %v36
      %v38 = vmul.f32 %v35, %v37
      %v39 = vadd.f32 %v35, %v38
      %vm40 = vweird.f32 %v35
      %v41 = vsel %vm40, %v35, %v39
      %v42 = vmul.f32 %v28, %v41
      %v43 = vmul.f32 %v30, %v41
      %v44 = vmul.f32 %v32, %v41
      %v45 = vmul.f32 %v34, %v41
      %v46 = vadd.f32 %v42, 1e-06
      %v47 = vadd.f32 %v43, 1e-06
      %v48 = vadd.f32 %v44, 1e-06
      %v49 = vadd.f32 %v45, 1e-06
      %v50 = vrsqrt.pop %v46
      %v51 = vmul.f32 %v50, %v46
      %v52 = vmul.f32 %v51, %v50
      %v53 = vmul.f32 0.5, %v52
      %v54 = vsub.f32 1.5, %v53
      %v55 = vmul.f32 %v50, %v54
      %vm56 = vweird.f32 %v46
      %vm57 = vweird.f32 %v50
      %vm58 = vmor %vm56, %vm57
      %v59 = vsel %vm58, %v50, %v55
      %v60 = vrsqrt.pop %v47
      %v61 = vmul.f32 %v60, %v47
      %v62 = vmul.f32 %v61, %v60
      %v63 = vmul.f32 0.5, %v62
      %v64 = vsub.f32 1.5, %v63
      %v65 = vmul.f32 %v60, %v64
      %vm66 = vweird.f32 %v47
      %vm67 = vweird.f32 %v60
      %vm68 = vmor %vm66, %vm67
      %v69 = vsel %vm68, %v60, %v65
      %v70 = vrsqrt.pop %v48
      %v71 = vmul.f32 %v70, %v48
      %v72 = vmul.f32 %v71, %v70
      %v73 = vmul.f32 0.5, %v72
      %v74 = vsub.f32 1.5, %v73
      %v75 = vmul.f32 %v70, %v74
      %vm76 = vweird.f32 %v48
      %vm77 = vweird.f32 %v70
      %vm78 = vmor %vm76, %vm77
      %v79 = vsel %vm78, %v70, %v75
      %v80 = vrsqrt.pop %v49
      %v81 = vmul.f32 %v80, %v49
      %v82 = vmul.f32 %v81, %v80
      %v83 = vmul.f32 0.5, %v82
      %v84 = vsub.f32 1.5, %v83
      %v85 = vmul.f32 %v80, %v84
      %vm86 = vweird.f32 %v49
      %vm87 = vweird.f32 %v80
      %vm88 = vmor %vm86, %vm87
      %v89 = vsel %vm88, %v80, %v85
      %v90 = vmul.f32 %v19, %v59
      %v91 = vmul.f32 %v20, %v69
      %v92 = vmul.f32 %v21, %v79
      %v93 = vmul.f32 %v22, %v89
      %v94 = vld [vmem:[%s1] sm:$0x1]
      %v96 = vperm.slane %v94, 0
      %v98 = vmul.f32 %v90, %v96
      %v99 = vmul.f32 %v91, %v96
      %v100 = vmul.f32 %v92, %v96
      %v101 = vmul.f32 %v93, %v96
      %v102 = vpack.c.bf16 %v98, %v98
      %v103 = vpack.c.bf16 %v99, %v99
      %v104 = vpack.c.bf16 %v100, %v100
      %v105 = vpack.c.bf16 %v101, %v101
      %106 = vst [vmem:[#allocation2] sm:$0xf] %v102
      %107 = vst [vmem:[#allocation2 + $0x4] sm:$0xf] %v103
      %108 = vst [vmem:[#allocation2 + $0x8] sm:$0xf] %v104
      %109 = vst [vmem:[#allocation2 + $0xc] sm:$0xf] %v105
    $region17: #{llama_forward.9} parent=1 // pred_fallthru
      _
    %v110 = vld [vmem:[#allocation2] sm:$0xf]
    %v111 = vld [vmem:[#allocation2 + $0x4] sm:$0xf]
    %v112 = vld [vmem:[#allocation2 + $0x8] sm:$0xf]
    %v113 = vld [vmem:[#allocation2 + $0xc] sm:$0xf]
    %v114 = vld [vmem:[%s2] sm:$0xf]
    %v115 = vld [vmem:[%s2 + $0x4] sm:$0xf]
    %v116 = vld [vmem:[%s2 + $0x8] sm:$0xf]
    %v117 = vld [vmem:[%s2 + $0xc] sm:$0xf]
    %v118 = vld [vmem:[%s2 + $0x10] sm:$0xf]
    %v119 = vld [vmem:[%s2 + $0x14] sm:$0xf]
    %v120 = vld [vmem:[%s2 + $0x18] sm:$0xf]
    %v121 = vld [vmem:[%s2 + $0x1c] sm:$0xf]
    %v122 = vld [vmem:[%s2 + $0x20] sm:$0xf]
    %v123 = vld [vmem:[%s2 + $0x24] sm:$0xf]
    %v124 = vld [vmem:[%s2 + $0x28] sm:$0xf]
    %v125 = vld [vmem:[%s2 + $0x2c] sm:$0xf]
    %v126 = vld [vmem:[%s2 + $0x30] sm:$0xf]
    %v127 = vld [vmem:[%s2 + $0x34] sm:$0xf]
    %v128 = vld [vmem:[%s2 + $0x38] sm:$0xf]
    %v129 = vld [vmem:[%s2 + $0x3c] sm:$0xf]
    %v134 = vunpack.c.l.b16 %v110
    %v135 = vunpack.c.l.b16 %v111
    %v136 = vunpack.c.l.b16 %v112
    %v137 = vunpack.c.l.b16 %v113
    %v138 = vpack.c.b16 %v135, %v134
    %v139 = vpack.c.b16 %v137, %v136
    %v158 = vunpack.c.l.b16 %v114
    %v159 = vunpack.c.l.b16 %v115
    %v160 = vunpack.c.l.b16 %v116
    %v161 = vunpack.c.l.b16 %v117
    %v162 = vunpack.c.l.b16 %v118
    %v163 = vunpack.c.l.b16 %v119
    %v164 = vunpack.c.l.b16 %v120
    %v165 = vunpack.c.l.b16 %v121
    %v166 = vunpack.c.l.b16 %v122
    %v167 = vunpack.c.l.b16 %v123
    %v168 = vunpack.c.l.b16 %v124
    %v169 = vunpack.c.l.b16 %v125
    %v170 = vunpack.c.l.b16 %v126
    %v171 = vunpack.c.l.b16 %v127
    %v172 = vunpack.c.l.b16 %v128
    %v173 = vunpack.c.l.b16 %v129
    %v174 = vpack.c.b16 %v159, %v158
    %v175 = vpack.c.b16 %v161, %v160
    %v176 = vpack.c.b16 %v163, %v162
    %v177 = vpack.c.b16 %v165, %v164
    %v178 = vpack.c.b16 %v167, %v166
    %v179 = vpack.c.b16 %v169, %v168
    %v180 = vpack.c.b16 %v171, %v170
    %v181 = vpack.c.b16 %v173, %v172
    %190 = vmatpush.bf16.msra.mxu0 %v181
    %191 = vmatpush.bf16.msra.mxu0 %v180
    %192 = vmatpush.bf16.msra.mxu0 %v179
    %193 = vmatpush.bf16.msra.mxu0 %v178
    %194 = vmatpush.bf16.msra.mxu0 %v177
    %195 = vmatpush.bf16.msra.mxu0 %v176
    %196 = vmatpush.bf16.msra.mxu0 %v175
    %197 = vmatpush.bf16.msra.mxu0 %v174
    %198 = vmatmul.bf16.gmra.mxu0 %v138
    %v199 = vpop.f32.mrf.mxu0
    %v200 = vadd.f32 0.0, %v199
    %v201 = vpop.f32.mrf.mxu0
    %v202 = vadd.f32 0.0, %v201
    %203 = vmatmul.bf16.gmra.mxu0 %v139
    %v204 = vpop.f32.mrf.mxu0
    %v205 = vadd.f32 0.0, %v204
    %v206 = vpop.f32.mrf.mxu0
    %v207 = vadd.f32 0.0, %v206
    %208 = vdwg.mxu0
    %209 = vst [vmem:[#allocation3] sm:$0xff] %v200
    %210 = vst [vmem:[#allocation3 + $0x8] sm:$0xff] %v202
    %211 = vst [vmem:[#allocation3 + $0x10] sm:$0xff] %v205
    %212 = vst [vmem:[#allocation3 + $0x18] sm:$0xff] %v207
    // Predicated region
    $region18: #{llama_forward.9} parent=1 // pred_check
      _
    $region19: #{llama_forward.9} parent=1 // pred_check_branch
      %214 = sbr.rel (0) target = $region21
    $region20: #{llama_forward.9} parent=1 // pred_region
      %216 = vsyncadd [#allocation4], 0
      %s217 = sshll.u32 [#allocation3], 4
      %s218 = int_to_ptr.vmem [resolvable:$true] %s217
      %s219 = sshll.u32 %s3, 4
      %s220 = int_to_ptr.hbm [resolvable:$true] %s219
      %225 = dma.vmem_to_hbm [thread:$0]  %s218, 512, %s220, [#allocation4], 128, 128, 8
    $region21: #{llama_forward.9} parent=1 // pred_fallthru
      _
    // Predicated region
    $region22: #{llama_forward.9} parent=1 // pred_check
      _
    $region23: #{llama_forward.9} parent=1 // pred_check_branch
      %227 = sbr.rel (0) target = $region25
    $region24: #{llama_forward.9} parent=1 // pred_region
      %229 = dma.done [#allocation4], 512
    $region25: #{llama_forward.9} parent=1 // pred_fallthru
      _
    %230 = vsyncpa [#allocation4], 1

// kernel: llama_forward.6
$region0: #{llama_forward.6}
  #allocation0 [shape = 'u32[]', space=smem, size = 0x4, offset = 0x4, fixed_abs, tag = 'smem constant byte address 0x4 - core index']
  #allocation1 [shape = 'u32[72,128]{1,0:T(1,128)}', space=vmem, size = 0x9000, scoped, tag = 'internal scratch']
  #allocation2 [shape = 'bf16[32,128]{1,0:T(8,128)(2,1)}', space=vmem, size = 0x2000, scoped, tag = 'scratch operand']
  #allocation3 [shape = 's32[1]{0}', space=sflag, size = 0x4, scoped, tag = 'scoped memory for llama_forward.6']
  #allocation4 [shape = 's32[1]{0:T(128)S(6)}', space=smem, size = 0x200, scoped, tag = 'prefetched SMEM operand 0']
  #allocation5 [shape = 'u8[512]{0}', space=smem, size = 0x200, scoped, tag = 'prefetched SMEM operand 1']
  %s0 = inlined_call_operand.<no memory space> [shape: s32[1], index: 0, kind: input, shape index: {}]
  %s1 = inlined_call_operand.vmem [shape: s32[4], index: 1, kind: input, shape index: {}]
  %s2 = inlined_call_operand.vmem [shape: f32[32,128], index: 2, kind: input, shape index: {}]
  %s3 = inlined_call_operand.vmem [shape: f32[32,4], index: 3, kind: input, shape index: {}]
  %s4 = inlined_call_operand.vmem [shape: f32[1,128], index: 4, kind: input, shape index: {}]
  %s5 = inlined_call_operand.hbm [shape: bf16[4,128,512], index: 5, kind: input, shape index: {}]
  %s6 = inlined_call_operand.vmem [shape: bf16[4,256,128], index: 6, kind: input, shape index: {}]
  %s7 = inlined_call_operand.vmem [shape: f32[32,128], index: 7, kind: output, shape index: {}]
  %s8 = sld [smem:[#allocation0]]
  $region65: #{llama_forward.6} parent=0
    _
  %s10 = ssub.s32 1, %s8
  %s11 = scalar_select 0, %s10, %s8
  %12 = sst [smem:[#allocation4]] %s0
  %s14 = sshll.u32 %s1, 4
  %s15 = int_to_ptr.vmem [resolvable:$true] %s14
  %17 = dma.vmem_to_smem %s15, 16, [#allocation5], [#allocation3]
  %19 = dma.done [#allocation3], 16
  %20 = sfence
  $region1: #{llama_forward.6} parent=0
    #allocation6 [shape = 'u8[262144]{0}', space=vmem, size = 0x40000, scoped, tag = 'input window, operand 5']
    #allocation7 [shape = 's32[2]{0}', space=sflag, size = 0x8, scoped, tag = 'scoped memory for llama_forward.6']
    %21 = vsyncpa [#allocation7], 0
    %s22 = scalar_lea.sflag [#allocation7], 1
    %23 = vsyncpa %s22, 0
    loop: start=0, step=1, limit=6
    $region2: #{llama_forward.6} parent=1 // loop_pre_header
      _
    $region3: #{llama_forward.6} parent=1 // loop_header
      %s25 = sphi 0, %s29
      %p26 = scmp.ge.s32.totalorder %s25, 6
      %s32 = sphi 0, %s44
      %s33 = sphi 0, %s40
      %s34 = sphi 0, %s32
      %s35 = sphi 0, %s33
      %s36 = sphi 0, %s34
      %s37 = sphi 0, %s35
      %s47 = sphi 0, %s49
      %s50 = sphi 0, %s47
      %s51 = sphi 0, %s50
      %s67 = sphi 0, %s51
      %s73 = sphi 0, %s75
      %s76 = sphi 0, %s73
      %s77 = sphi 0, %s76
      %s93 = sphi 0, %s77
      %s97 = sphi 0, %s97
      %s99 = sphi 0, %s97
      %s100 = sphi 0, %s99
      %s114 = sphi 0, %s100
      %s122 = sphi 0, %s124
      %s125 = sphi 0, %s122
      %s126 = sphi 0, %s125
      %s142 = sphi 0, %s126
      %s150 = sphi 0, %s152
      %s153 = sphi 0, %s150
      %s154 = sphi 0, %s153
      %s170 = sphi 0, %s154
      %s176 = sphi 0, %s178
      %s179 = sphi 0, %s176
      %s180 = sphi 0, %s179
      %s196 = sphi 0, %s180
    $region4: #{llama_forward.6} parent=1 // loop_header_branch
      %28 = sbr.rel (%p26) target = $region8
    $region5: #{llama_forward.6} parent=1 // loop_body
      %s30 = ssub.s32 %s25, 1
      %s31 = ssub.s32 %s25, 2
      %s38 = sadd.s32 1, %s33
      %p39 = scmp.ge.s32.totalorder %s38, 4
      %s40 = scalar_select %p39, 0, %s38
      %s41 = sadd.s32 1, %s32
      %s42 = scalar_select %p39, %s41, %s32
      %p43 = scmp.ge.s32.totalorder %s42, 1
      %s44 = scalar_select %p43, 0, %s42
      %s45 = ssub.s32 %s32, %s44
      %p46 = scmp.eq.s32.totalorder %s45, 0
      %s48 = sadd.s32 %s47, 1
      %s49 = scalar_select %p46, %s47, %s48
      %p52 = pneg %p46
      %p53 = scmp.eq.s32.totalorder %s25, 3
      %p54 = por %p52, %p53
      %p55 = scmp.ne.s32.totalorder %s47, %s50
      %p56 = scmp.eq.s32.totalorder %s25, 0
      %p57 = por %p55, %p56
      %p58 = scmp.ne.s32.totalorder %s47, %s50
      %p59 = scmp.eq.s32.totalorder %s30, 3
      %p60 = por %p58, %p59
      %p61 = scmp.ne.s32.totalorder %s50, %s51
      %p62 = scmp.eq.s32.totalorder %s30, 0
      %p63 = por %p61, %p62
      %p64 = scmp.ne.s32.totalorder %s50, %s51
      %p65 = scmp.eq.s32.totalorder %s31, 3
      %p66 = por %p64, %p65
      %p68 = scmp.ne.s32.totalorder %s51, %s67
      %p69 = scmp.eq.s32.totalorder %s31, 0
      %p70 = por %p68, %p69
      %s71 = ssub.s32 %s32, %s44
      %p72 = scmp.eq.s32.totalorder %s71, 0
      %s74 = sadd.s32 %s73, 1
      %s75 = scalar_select %p72, %s73, %s74
      %p78 = pneg %p72
      %p79 = scmp.eq.s32.totalorder %s25, 3
      %p80 = por %p78, %p79
      %p81 = scmp.ne.s32.totalorder %s73, %s76
      %p82 = scmp.eq.s32.totalorder %s25, 0
      %p83 = por %p81, %p82
      %p84 = scmp.ne.s32.totalorder %s73, %s76
      %p85 = scmp.eq.s32.totalorder %s30, 3
      %p86 = por %p84, %p85
      %p87 = scmp.ne.s32.totalorder %s76, %s77
      %p88 = scmp.eq.s32.totalorder %s30, 0
      %p89 = por %p87, %p88
      %p90 = scmp.ne.s32.totalorder %s76, %s77
      %p91 = scmp.eq.s32.totalorder %s31, 3
      %p92 = por %p90, %p91
      %p94 = scmp.ne.s32.totalorder %s77, %s93
      %p95 = scmp.eq.s32.totalorder %s31, 0
      %p96 = por %p94, %p95
      %s98 = sadd.s32 %s97, 1
      %p101 = scmp.eq.s32.totalorder %s25, 3
      %p102 = scmp.ne.s32.totalorder %s97, %s99
      %p103 = scmp.eq.s32.totalorder %s25, 0
      %p104 = por %p102, %p103
      %p105 = scmp.ne.s32.totalorder %s97, %s99
      %p106 = scmp.eq.s32.totalorder %s30, 3
      %p107 = por %p105, %p106
      %p108 = scmp.ne.s32.totalorder %s99, %s100
      %p109 = scmp.eq.s32.totalorder %s30, 0
      %p110 = por %p108, %p109
      %p111 = scmp.ne.s32.totalorder %s99, %s100
      %p112 = scmp.eq.s32.totalorder %s31, 3
      %p113 = por %p111, %p112
      %p115 = scmp.ne.s32.totalorder %s100, %s114
      %p116 = scmp.eq.s32.totalorder %s31, 0
      %p117 = por %p115, %p116
      %s118 = sld [smem:[#allocation5 + %s33]]
      %s119 = sld [smem:[#allocation5 + %s40]]
      %s120 = ssub.s32 %s118, %s119
      %p121 = scmp.eq.s32.totalorder %s120, 0
      %s123 = sadd.s32 %s122, 1
      %s124 = scalar_select %p121, %s122, %s123
      %p127 = pneg %p121
      %p128 = scmp.eq.s32.totalorder %s25, 3
      %p129 = por %p127, %p128
      %p130 = scmp.ne.s32.totalorder %s122, %s125
      %p131 = scmp.eq.s32.totalorder %s25, 0
      %p132 = por %p130, %p131
      %p133 = scmp.ne.s32.totalorder %s122, %s125
      %p134 = scmp.eq.s32.totalorder %s30, 3
      %p135 = por %p133, %p134
      %p136 = scmp.ne.s32.totalorder %s125, %s126
      %p137 = scmp.eq.s32.totalorder %s30, 0
      %p138 = por %p136, %p137
      %p139 = scmp.ne.s32.totalorder %s125, %s126
      %p140 = scmp.eq.s32.totalorder %s31, 3
      %p141 = por %p139, %p140
      %p143 = scmp.ne.s32.totalorder %s126, %s142
      %p144 = scmp.eq.s32.totalorder %s31, 0
      %p145 = por %p143, %p144
      %s146 = sld [smem:[#allocation5 + %s33]]
      %s147 = sld [smem:[#allocation5 + %s40]]
      %s148 = ssub.s32 %s146, %s147
      %p149 = scmp.eq.s32.totalorder %s148, 0
      %s151 = sadd.s32 %s150, 1
      %s152 = scalar_select %p149, %s150, %s151
      %p155 = pneg %p149
      %p156 = scmp.eq.s32.totalorder %s25, 3
      %p157 = por %p155, %p156
      %p158 = scmp.ne.s32.totalorder %s150, %s153
      %p159 = scmp.eq.s32.totalorder %s25, 0
      %p160 = por %p158, %p159
      %p161 = scmp.ne.s32.totalorder %s150, %s153
      %p162 = scmp.eq.s32.totalorder %s30, 3
      %p163 = por %p161, %p162
      %p164 = scmp.ne.s32.totalorder %s153, %s154
      %p165 = scmp.eq.s32.totalorder %s30, 0
      %p166 = por %p164, %p165
      %p167 = scmp.ne.s32.totalorder %s153, %s154
      %p168 = scmp.eq.s32.totalorder %s31, 3
      %p169 = por %p167, %p168
      %p171 = scmp.ne.s32.totalorder %s154, %s170
      %p172 = scmp.eq.s32.totalorder %s31, 0
      %p173 = por %p171, %p172
      %s174 = ssub.s32 %s32, %s44
      %p175 = scmp.eq.s32.totalorder %s174, 0
      %s177 = sadd.s32 %s176, 1
      %s178 = scalar_select %p175, %s176, %s177
      %p181 = pneg %p175
      %p182 = scmp.eq.s32.totalorder %s25, 3
      %p183 = por %p181, %p182
      %p184 = scmp.ne.s32.totalorder %s176, %s179
      %p185 = scmp.eq.s32.totalorder %s25, 0
      %p186 = por %p184, %p185
      %p187 = scmp.ne.s32.totalorder %s176, %s179
      %p188 = scmp.eq.s32.totalorder %s30, 3
      %p189 = por %p187, %p188
      %p190 = scmp.ne.s32.totalorder %s179, %s180
      %p191 = scmp.eq.s32.totalorder %s30, 0
      %p192 = por %p190, %p191
      %p193 = scmp.ne.s32.totalorder %s179, %s180
      %p194 = scmp.eq.s32.totalorder %s31, 3
      %p195 = por %p193, %p194
      %p197 = scmp.ne.s32.totalorder %s180, %s196
      %p198 = scmp.eq.s32.totalorder %s31, 0
      %p199 = por %p197, %p198
      %p200 = scmp.le.s32.totalorder 1, %s25
      %p201 = scmp.lt.s32.totalorder %s25, 5
      %p202 = pnand %p200, %p201
      %p203 = pneg %p202
      // Predicated region
      $region9: #{llama_forward.6} parent=5 // pred_check
        _
      $region10: #{llama_forward.6} parent=5 // pred_check_branch
        %205 = sbr.rel (%p202) target = $region12
      $region11: #{llama_forward.6} parent=5 // pred_region
        %s206 = ssub.s32 %s25, 1
        // Predicated region
        $region13: #{llama_forward.6} parent=11 // pred_check
          %p207 = pneg %p63
        $region14: #{llama_forward.6} parent=11 // pred_check_branch
          %209 = sbr.rel (%p207) target = $region16
        $region15: #{llama_forward.6} parent=11 // pred_region
          %s210 = smul.u32 4, %s34
          %p211 = scmp.lt.s32.totalorder %s210, 3
          %s212 = scalar_select %p211, %s210, 3
          %s213 = smul.addr %s212, 8
          %s214 = scalar_lea.vmem %s2, %s213
          %s215 = smul.u32 4, %s34
        $region16: #{llama_forward.6} parent=11 // pred_fallthru
          _
        // Predicated region
        $region17: #{llama_forward.6} parent=11 // pred_check
          %p216 = pneg %p89
        $region18: #{llama_forward.6} parent=11 // pred_check_branch
          %218 = sbr.rel (%p216) target = $region20
        $region19: #{llama_forward.6} parent=11 // pred_region
          %s219 = smul.u32 4, %s34
          %p220 = scmp.lt.s32.totalorder %s219, 3
          %s221 = scalar_select %p220, %s219, 3
          %s222 = smul.addr %s221, 8
          %s223 = scalar_lea.vmem %s3, %s222
          %s224 = smul.u32 4, %s34
        $region20: #{llama_forward.6} parent=11 // pred_fallthru
          _
        // Predicated region
        $region21: #{llama_forward.6} parent=11 // pred_check
          %p225 = pneg %p110
        $region22: #{llama_forward.6} parent=11 // pred_check_branch
          %227 = sbr.rel (%p225) target = $region24
        $region23: #{llama_forward.6} parent=11 // pred_region
          _
        $region24: #{llama_forward.6} parent=11 // pred_fallthru
          _
      $region12: #{llama_forward.6} parent=5 // pred_fallthru
        _
      %p228 = scmp.lt.s32.totalorder %s25, 4
      // Predicated region
      $region25: #{llama_forward.6} parent=5 // pred_check
        %p229 = pneg %p228
      $region26: #{llama_forward.6} parent=5 // pred_check_branch
        %231 = sbr.rel (%p229) target = $region28
      $region27: #{llama_forward.6} parent=5 // pred_region
        // Predicated region
        $region29: #{llama_forward.6} parent=27 // pred_check
          %p232 = pneg %p132
        $region30: #{llama_forward.6} parent=27 // pred_check_branch
          %234 = sbr.rel (%p232) target = $region32
        $region31: #{llama_forward.6} parent=27 // pred_region
          %s235 = sand.u32 %s122, 1
          %s236 = scalar_lea.sflag [#allocation7], %s235
          %s237 = sand.u32 %s122, 1
          %s238 = smul.addr %s237, 256
          %s239 = scalar_lea.vmem [#allocation6], %s238
          %s240 = sld [smem:[#allocation5 + %s33]]
          %242 = vsyncadd %s236, 0
          %s243 = smul.addr %s240, 64
          %s244 = smul.addr %s243, 4
          %s245 = scalar_lea.hbm %s5, %s244
          %s246 = sshll.u32 %s245, 4
          %s247 = int_to_ptr.hbm [resolvable:$true] %s246
          %s248 = sshll.u32 %s239, 4
          %s249 = int_to_ptr.vmem [resolvable:$true] %s248
          %254 = dma.hbm_to_vmem [thread:$0]  %s247, 4096, %s249, %s236, 256, 256, 16
        $region32: #{llama_forward.6} parent=27 // pred_fallthru
          _
        // Predicated region
        $region33: #{llama_forward.6} parent=27 // pred_check
          %p255 = pneg %p160
        $region34: #{llama_forward.6} parent=27 // pred_check_branch
          %257 = sbr.rel (%p255) target = $region36
        $region35: #{llama_forward.6} parent=27 // pred_region
          %s258 = sld [smem:[#allocation5 + %s33]]
          %p259 = scmp.lt.s32.totalorder %s258, 3
          %s260 = scalar_select %p259, %s258, 3
          %s261 = smul.addr %s260, 32
          %s262 = smul.addr %s261, 4
          %s263 = scalar_lea.vmem %s6, %s262
          %s264 = sld [smem:[#allocation5 + %s33]]
        $region36: #{llama_forward.6} parent=27 // pred_fallthru
          _
      $region28: #{llama_forward.6} parent=5 // pred_fallthru
        _
      %p265 = scmp.le.s32.totalorder 1, %s25
      %p266 = scmp.lt.s32.totalorder %s25, 5
      %p267 = pnand %p265, %p266
      %p268 = pneg %p267
      // Predicated region
      $region37: #{llama_forward.6} parent=5 // pred_check
        _
      $region38: #{llama_forward.6} parent=5 // pred_check_branch
        %270 = sbr.rel (%p267) target = $region40
      $region39: #{llama_forward.6} parent=5 // pred_region
        %s271 = ssub.s32 %s25, 1
        %s272 = sand.u32 %s125, 1
        %s273 = scalar_lea.sflag [#allocation7], %s272
        %s274 = sand.u32 %s125, 1
        %s275 = smul.addr %s274, 256
        %s276 = scalar_lea.vmem [#allocation6], %s275
        // Predicated region
        $region41: #{llama_forward.6} parent=39 // pred_check
          %p277 = pneg %p138
        $region42: #{llama_forward.6} parent=39 // pred_check_branch
          %279 = sbr.rel (%p277) target = $region44
        $region43: #{llama_forward.6} parent=39 // pred_region
          %281 = dma.done %s273, 4096
        $region44: #{llama_forward.6} parent=39 // pred_fallthru
          _
        %s282 = smul.u32 4, %s34
        %p283 = scmp.lt.s32.totalorder %s282, 3
        %s284 = scalar_select %p283, %s282, 3
        %s285 = smul.addr %s284, 8
        %s286 = scalar_lea.vmem %s2, %s285
        %p287 = pneg %p63
        %p288 = pneg %p60
        %s289 = smul.u32 4, %s34
        %p290 = scmp.lt.s32.totalorder %s289, 3
        %s291 = scalar_select %p290, %s289, 3
        %s292 = smul.addr %s291, 8
        %s293 = scalar_lea.vmem %s3, %s292
        %p294 = pneg %p89
        %p295 = pneg %p86
        %p296 = pneg %p110
        %p297 = pneg %p107
        %s298 = sand.u32 %s125, 1
        %s299 = scalar_lea.sflag [#allocation7], %s298
        %s300 = sand.u32 %s125, 1
        %s301 = smul.addr %s300, 256
        %s302 = scalar_lea.vmem [#allocation6], %s301
        %p303 = pneg %p138
        %p304 = pneg %p135
        %s305 = sld [smem:[#allocation5 + %s35]]
        %p306 = scmp.lt.s32.totalorder %s305, 3
        %s307 = scalar_select %p306, %s305, 3
        %s308 = smul.addr %s307, 32
        %s309 = smul.addr %s308, 4
        %s310 = scalar_lea.vmem %s6, %s309
        %p311 = pneg %p166
        %p312 = pneg %p163
        %p313 = pneg %p192
        %p314 = pneg %p189
        %s315 = smul.u32 4, %s34
        %p316 = scmp.lt.s32.totalorder %s315, 3
        %s317 = scalar_select %p316, %s315, 3
        %s318 = smul.addr %s317, 8
        %s319 = scalar_lea.vmem %s7, %s318
        %s320 = smul.u32 4, %s34
        %p321 = scmp.lt.s32.totalorder %s320, 3
        %s322 = scalar_select %p321, %s320, 3
        %s323 = smul.addr %s322, 8
        %s324 = scalar_lea.vmem %s2, %s323
        %s325 = smul.u32 4, %s34
        %s326 = smul.u32 4, %s34
        %p327 = scmp.lt.s32.totalorder %s326, 3
        %s328 = scalar_select %p327, %s326, 3
        %s329 = smul.addr %s328, 8
        %s330 = scalar_lea.vmem %s3, %s329
        %s331 = smul.u32 4, %s34
        %s332 = sld [smem:[#allocation5 + %s35]]
        %s333 = sld [smem:[#allocation5 + %s35]]
        %p334 = scmp.lt.s32.totalorder %s333, 3
        %s335 = scalar_select %p334, %s333, 3
        %s336 = smul.addr %s335, 32
        %s337 = smul.addr %s336, 4
        %s338 = scalar_lea.vmem %s6, %s337
        %s339 = sld [smem:[#allocation5 + %s35]]
        %s340 = smul.u32 4, %s34
        %p341 = scmp.lt.s32.totalorder %s340, 3
        %s342 = scalar_select %p341, %s340, 3
        %s343 = smul.addr %s342, 8
        %s344 = scalar_lea.vmem %s7, %s343
        %s345 = smul.u32 4, %s34
        %p346 = scmp.eq.s32.totalorder %s35, 0
        // Predicated region
        $region45: #{llama_forward.6} parent=39 // pred_check
          %p347 = pneg %p346
        $region46: #{llama_forward.6} parent=39 // pred_check_branch
          %349 = sbr.rel (%p347) target = $region48
        $region47: #{llama_forward.6} parent=39 // pred_region
          %v350 = vld [vmem:[%s324] sm:$0xff]
          %v351 = vld [vmem:[%s324 + $0x8] sm:$0xff]
          %v352 = vld [vmem:[%s324 + $0x10] sm:$0xff]
          %v353 = vld [vmem:[%s324 + $0x18] sm:$0xff]
          %354 = vst [vmem:[%s344] sm:$0xff] %v350
          %355 = vst [vmem:[%s344 + $0x8] sm:$0xff] %v351
          %356 = vst [vmem:[%s344 + $0x10] sm:$0xff] %v352
          %357 = vst [vmem:[%s344 + $0x18] sm:$0xff] %v353
          %v358 = vmul.f32 %v350, %v350
          %v359 = vmul.f32 %v351, %v351
          %v360 = vmul.f32 %v352, %v352
          %v361 = vmul.f32 %v353, %v353
          %362 = vadd.xlane.f32.xlu0 %v358
          %v363 = vpop.xlane.xlu0 %362
          %364 = vadd.xlane.f32.xlu0 %v359
          %v365 = vpop.xlane.xlu0 %364
          %366 = vadd.xlane.f32.xlu0 %v360
          %v367 = vpop.xlane.xlu0 %366
          %368 = vadd.xlane.f32.xlu0 %v361
          %v369 = vpop.xlane.xlu0 %368
          %v370 = vrcp.pop 128.0
          %v371 = vmul.f32 128.0, %v370
          %v372 = vsub.f32 1.0, %v371
          %v373 = vmul.f32 %v370, %v372
          %v374 = vadd.f32 %v370, %v373
          %vm375 = vweird.f32 %v370
          %v376 = vsel %vm375, %v370, %v374
          %v377 = vmul.f32 %v363, %v376
          %v378 = vmul.f32 %v365, %v376
          %v379 = vmul.f32 %v367, %v376
          %v380 = vmul.f32 %v369, %v376
          %v381 = vadd.f32 %v377, 1e-06
          %v382 = vadd.f32 %v378, 1e-06
          %v383 = vadd.f32 %v379, 1e-06
          %v384 = vadd.f32 %v380, 1e-06
          %v385 = vrsqrt.pop %v381
          %v386 = vmul.f32 %v385, %v381
          %v387 = vmul.f32 %v386, %v385
          %v388 = vmul.f32 0.5, %v387
          %v389 = vsub.f32 1.5, %v388
          %v390 = vmul.f32 %v385, %v389
          %vm391 = vweird.f32 %v381
          %vm392 = vweird.f32 %v385
          %vm393 = vmor %vm391, %vm392
          %v394 = vsel %vm393, %v385, %v390
          %v395 = vrsqrt.pop %v382
          %v396 = vmul.f32 %v395, %v382
          %v397 = vmul.f32 %v396, %v395
          %v398 = vmul.f32 0.5, %v397
          %v399 = vsub.f32 1.5, %v398
          %v400 = vmul.f32 %v395, %v399
          %vm401 = vweird.f32 %v382
          %vm402 = vweird.f32 %v395
          %vm403 = vmor %vm401, %vm402
          %v404 = vsel %vm403, %v395, %v400
          %v405 = vrsqrt.pop %v383
          %v406 = vmul.f32 %v405, %v383
          %v407 = vmul.f32 %v406, %v405
          %v408 = vmul.f32 0.5, %v407
          %v409 = vsub.f32 1.5, %v408
          %v410 = vmul.f32 %v405, %v409
          %vm411 = vweird.f32 %v383
          %vm412 = vweird.f32 %v405
          %vm413 = vmor %vm411, %vm412
          %v414 = vsel %vm413, %v405, %v410
          %v415 = vrsqrt.pop %v384
          %v416 = vmul.f32 %v415, %v384
          %v417 = vmul.f32 %v416, %v415
          %v418 = vmul.f32 0.5, %v417
          %v419 = vsub.f32 1.5, %v418
          %v420 = vmul.f32 %v415, %v419
          %vm421 = vweird.f32 %v384
          %vm422 = vweird.f32 %v415
          %vm423 = vmor %vm421, %vm422
          %v424 = vsel %vm423, %v415, %v420
          %v425 = vmul.f32 %v350, %v394
          %v426 = vmul.f32 %v351, %v404
          %v427 = vmul.f32 %v352, %v414
          %v428 = vmul.f32 %v353, %v424
          %v429 = vld [vmem:[%s4] sm:$0x1]
          %v431 = vperm.slane %v429, 0
          %v433 = vmul.f32 %v425, %v431
          %v434 = vmul.f32 %v426, %v431
          %v435 = vmul.f32 %v427, %v431
          %v436 = vmul.f32 %v428, %v431
          %v437 = vpack.c.bf16 %v433, %v433
          %v438 = vpack.c.bf16 %v434, %v434
          %v439 = vpack.c.bf16 %v435, %v435
          %v440 = vpack.c.bf16 %v436, %v436
          %441 = vst [vmem:[#allocation2] sm:$0xf] %v437
          %442 = vst [vmem:[#allocation2 + $0x4] sm:$0xf] %v438
          %443 = vst [vmem:[#allocation2 + $0x8] sm:$0xf] %v439
          %444 = vst [vmem:[#allocation2 + $0xc] sm:$0xf] %v440
        $region48: #{llama_forward.6} parent=39 // pred_fallthru
          _
        %s445 = sld [smem:[#allocation4]]
        %p446 = scmp.lt.s32.totalorder %s35, %s445
        // Predicated region
        $region49: #{llama_forward.6} parent=39 // pred_check
          %p447 = pneg %p446
        $region50: #{llama_forward.6} parent=39 // pred_check_branch
          %449 = sbr.rel (%p447) target = $region52
        $region51: #{llama_forward.6} parent=39 // pred_region
          %s450 = sld [smem:[#allocation5 + %s35]]
          %v451 = vld [vmem:[#allocation2] sm:$0xf]
          %v452 = vld [vmem:[#allocation2 + $0x4] sm:$0xf]
          %v453 = vld [vmem:[#allocation2 + $0x8] sm:$0xf]
          %v454 = vld [vmem:[#allocation2 + $0xc] sm:$0xf]
          %v455 = vld [vmem:[%s276] sm:$0xff]
          %v456 = vld [vmem:[%s276 + $0x8] sm:$0xff]
          %v457 = vld [vmem:[%s276 + $0x10] sm:$0xff]
          %v458 = vld [vmem:[%s276 + $0x18] sm:$0xff]
          %v459 = vld [vmem:[%s276 + $0x20] sm:$0xff]
          %v460 = vld [vmem:[%s276 + $0x28] sm:$0xff]
          %v461 = vld [vmem:[%s276 + $0x30] sm:$0xff]
          %v462 = vld [vmem:[%s276 + $0x38] sm:$0xff]
          %v463 = vld [vmem:[%s276 + $0x40] sm:$0xff]
          %v464 = vld [vmem:[%s276 + $0x48] sm:$0xff]
          %v465 = vld [vmem:[%s276 + $0x50] sm:$0xff]
          %v466 = vld [vmem:[%s276 + $0x58] sm:$0xff]
          %v467 = vld [vmem:[%s276 + $0x60] sm:$0xff]
          %v468 = vld [vmem:[%s276 + $0x68] sm:$0xff]
          %v469 = vld [vmem:[%s276 + $0x70] sm:$0xff]
          %v470 = vld [vmem:[%s276 + $0x78] sm:$0xff]
          %v471 = vld [vmem:[%s276 + $0x80] sm:$0xff]
          %v472 = vld [vmem:[%s276 + $0x88] sm:$0xff]
          %v473 = vld [vmem:[%s276 + $0x90] sm:$0xff]
          %v474 = vld [vmem:[%s276 + $0x98] sm:$0xff]
          %v475 = vld [vmem:[%s276 + $0xa0] sm:$0xff]
          %v476 = vld [vmem:[%s276 + $0xa8] sm:$0xff]
          %v477 = vld [vmem:[%s276 + $0xb0] sm:$0xff]
          %v478 = vld [vmem:[%s276 + $0xb8] sm:$0xff]
          %v479 = vld [vmem:[%s276 + $0xc0] sm:$0xff]
          %v480 = vld [vmem:[%s276 + $0xc8] sm:$0xff]
          %v481 = vld [vmem:[%s276 + $0xd0] sm:$0xff]
          %v482 = vld [vmem:[%s276 + $0xd8] sm:$0xff]
          %v483 = vld [vmem:[%s276 + $0xe0] sm:$0xff]
          %v484 = vld [vmem:[%s276 + $0xe8] sm:$0xff]
          %v485 = vld [vmem:[%s276 + $0xf0] sm:$0xff]
          %v486 = vld [vmem:[%s276 + $0xf8] sm:$0xff]
          %v491 = vunpack.c.l.b16 %v451
          %v492 = vunpack.c.l.b16 %v452
          %v493 = vunpack.c.l.b16 %v453
          %v494 = vunpack.c.l.b16 %v454
          %v495 = vpack.c.b16 %v492, %v491
          %v496 = vpack.c.b16 %v494, %v493
          %v531 = vunpack.c.l.b16 %v455
          %v532 = vunpack.c.h.b16 %v455
          %v533 = vunpack.c.l.b16 %v456
          %v534 = vunpack.c.h.b16 %v456
          %v535 = vunpack.c.l.b16 %v457
          %v536 = vunpack.c.h.b16 %v457
          %v537 = vunpack.c.l.b16 %v458
          %v538 = vunpack.c.h.b16 %v458
          %v539 = vunpack.c.l.b16 %v459
          %v540 = vunpack.c.h.b16 %v459
          %v541 = vunpack.c.l.b16 %v460
          %v542 = vunpack.c.h.b16 %v460
          %v543 = vunpack.c.l.b16 %v461
          %v544 = vunpack.c.h.b16 %v461
          %v545 = vunpack.c.l.b16 %v462
          %v546 = vunpack.c.h.b16 %v462
          %v547 = vunpack.c.l.b16 %v463
          %v548 = vunpack.c.h.b16 %v463
          %v549 = vunpack.c.l.b16 %v464
          %v550 = vunpack.c.h.b16 %v464
          %v551 = vunpack.c.l.b16 %v465
          %v552 = vunpack.c.h.b16 %v465
          %v553 = vunpack.c.l.b16 %v466
          %v554 = vunpack.c.h.b16 %v466
          %v555 = vunpack.c.l.b16 %v467
          %v556 = vunpack.c.h.b16 %v467
          %v557 = vunpack.c.l.b16 %v468
          %v558 = vunpack.c.h.b16 %v468
          %v559 = vunpack.c.l.b16 %v469
          %v560 = vunpack.c.h.b16 %v469
          %v561 = vunpack.c.l.b16 %v470
          %v562 = vunpack.c.h.b16 %v470
          %v563 = vunpack.c.l.b16 %v471
          %v564 = vunpack.c.h.b16 %v471
          %v565 = vunpack.c.l.b16 %v472
          %v566 = vunpack.c.h.b16 %v472
          %v567 = vunpack.c.l.b16 %v473
          %v568 = vunpack.c.h.b16 %v473
          %v569 = vunpack.c.l.b16 %v474
          %v570 = vunpack.c.h.b16 %v474
          %v571 = vunpack.c.l.b16 %v475
          %v572 = vunpack.c.h.b16 %v475
          %v573 = vunpack.c.l.b16 %v476
          %v574 = vunpack.c.h.b16 %v476
          %v575 = vunpack.c.l.b16 %v477
          %v576 = vunpack.c.h.b16 %v477
          %v577 = vunpack.c.l.b16 %v478
          %v578 = vunpack.c.h.b16 %v478
          %v579 = vunpack.c.l.b16 %v479
          %v580 = vunpack.c.h.b16 %v479
          %v581 = vunpack.c.l.b16 %v480
          %v582 = vunpack.c.h.b16 %v480
          %v583 = vunpack.c.l.b16 %v481
          %v584 = vunpack.c.h.b16 %v481
          %v585 = vunpack.c.l.b16 %v482
          %v586 = vunpack.c.h.b16 %v482
          %v587 = vunpack.c.l.b16 %v483
          %v588 = vunpack.c.h.b16 %v483
          %v589 = vunpack.c.l.b16 %v484
          %v590 = vunpack.c.h.b16 %v484
          %v591 = vunpack.c.l.b16 %v485
          %v592 = vunpack.c.h.b16 %v485
          %v593 = vunpack.c.l.b16 %v486
          %v594 = vunpack.c.h.b16 %v486
          %v595 = vpack.c.b16 %v535, %v531
          %v596 = vpack.c.b16 %v536, %v532
          %v597 = vpack.c.b16 %v537, %v533
          %v598 = vpack.c.b16 %v538, %v534
          %v599 = vpack.c.b16 %v543, %v539
          %v600 = vpack.c.b16 %v544, %v540
          %v601 = vpack.c.b16 %v545, %v541
          %v602 = vpack.c.b16 %v546, %v542
          %v603 = vpack.c.b16 %v551, %v547
          %v604 = vpack.c.b16 %v552, %v548
          %v605 = vpack.c.b16 %v553, %v549
          %v606 = vpack.c.b16 %v554, %v550
          %v607 = vpack.c.b16 %v559, %v555
          %v608 = vpack.c.b16 %v560, %v556
          %v609 = vpack.c.b16 %v561, %v557
          %v610 = vpack.c.b16 %v562, %v558
          %v611 = vpack.c.b16 %v567, %v563
          %v612 = vpack.c.b16 %v568, %v564
          %v613 = vpack.c.b16 %v569, %v565
          %v614 = vpack.c.b16 %v570, %v566
          %v615 = vpack.c.b16 %v575, %v571
          %v616 = vpack.c.b16 %v576, %v572
          %v617 = vpack.c.b16 %v577, %v573
          %v618 = vpack.c.b16 %v578, %v574
          %v619 = vpack.c.b16 %v583, %v579
          %v620 = vpack.c.b16 %v584, %v580
          %v621 = vpack.c.b16 %v585, %v581
          %v622 = vpack.c.b16 %v586, %v582
          %v623 = vpack.c.b16 %v591, %v587
          %v624 = vpack.c.b16 %v592, %v588
          %v625 = vpack.c.b16 %v593, %v589
          %v626 = vpack.c.b16 %v594, %v590
          %659 = vmatpush.bf16.msra.mxu0 %v623
          %660 = vmatpush.bf16.msra.mxu0 %v619
          %661 = vmatpush.bf16.msra.mxu0 %v615
          %662 = vmatpush.bf16.msra.mxu0 %v611
          %663 = vmatpush.bf16.msra.mxu0 %v607
          %664 = vmatpush.bf16.msra.mxu0 %v603
          %665 = vmatpush.bf16.msra.mxu0 %v599
          %666 = vmatpush.bf16.msra.mxu0 %v595
          %667 = vmatmul.bf16.gmra.mxu0 %v495
          %v668 = vpop.f32.mrf.mxu0
          %v669 = vadd.f32 0.0, %v668
          %v670 = vpop.f32.mrf.mxu0
          %v671 = vadd.f32 0.0, %v670
          %672 = vmatmul.bf16.gmra.mxu0 %v496
          %v673 = vpop.f32.mrf.mxu0
          %v674 = vadd.f32 0.0, %v673
          %v675 = vpop.f32.mrf.mxu0
          %v676 = vadd.f32 0.0, %v675
          %677 = vdwg.mxu0
          %678 = vmatpush.bf16.msra.mxu0 %v624
          %679 = vmatpush.bf16.msra.mxu0 %v620
          %680 = vmatpush.bf16.msra.mxu0 %v616
          %681 = vmatpush.bf16.msra.mxu0 %v612
          %682 = vmatpush.bf16.msra.mxu0 %v608
          %683 = vmatpush.bf16.msra.mxu0 %v604
          %684 = vmatpush.bf16.msra.mxu0 %v600
          %685 = vmatpush.bf16.msra.mxu0 %v596
          %686 = vmatmul.bf16.gmra.mxu0 %v495
          %v687 = vpop.f32.mrf.mxu0
          %v688 = vadd.f32 0.0, %v687
          %v689 = vpop.f32.mrf.mxu0
          %v690 = vadd.f32 0.0, %v689
          %691 = vmatmul.bf16.gmra.mxu0 %v496
          %v692 = vpop.f32.mrf.mxu0
          %v693 = vadd.f32 0.0, %v692
          %v694 = vpop.f32.mrf.mxu0
          %v695 = vadd.f32 0.0, %v694
          %696 = vdwg.mxu0
          %697 = vmatpush.bf16.msra.mxu0 %v625
          %698 = vmatpush.bf16.msra.mxu0 %v621
          %699 = vmatpush.bf16.msra.mxu0 %v617
          %700 = vmatpush.bf16.msra.mxu0 %v613
          %701 = vmatpush.bf16.msra.mxu0 %v609
          %702 = vmatpush.bf16.msra.mxu0 %v605
          %703 = vmatpush.bf16.msra.mxu0 %v601
          %704 = vmatpush.bf16.msra.mxu0 %v597
          %705 = vmatmul.bf16.gmra.mxu0 %v495
          %v706 = vpop.f32.mrf.mxu0
          %v707 = vadd.f32 0.0, %v706
          %v708 = vpop.f32.mrf.mxu0
          %v709 = vadd.f32 0.0, %v708
          %710 = vmatmul.bf16.gmra.mxu0 %v496
          %v711 = vpop.f32.mrf.mxu0
          %v712 = vadd.f32 0.0, %v711
          %v713 = vpop.f32.mrf.mxu0
          %v714 = vadd.f32 0.0, %v713
          %715 = vdwg.mxu0
          %716 = vmatpush.bf16.msra.mxu0 %v626
          %717 = vmatpush.bf16.msra.mxu0 %v622
          %718 = vmatpush.bf16.msra.mxu0 %v618
          %719 = vmatpush.bf16.msra.mxu0 %v614
          %720 = vmatpush.bf16.msra.mxu0 %v610
          %721 = vmatpush.bf16.msra.mxu0 %v606
          %722 = vmatpush.bf16.msra.mxu0 %v602
          %723 = vmatpush.bf16.msra.mxu0 %v598
          %724 = vmatmul.bf16.gmra.mxu0 %v495
          %v725 = vpop.f32.mrf.mxu0
          %v726 = vadd.f32 0.0, %v725
          %v727 = vpop.f32.mrf.mxu0
          %v728 = vadd.f32 0.0, %v727
          %729 = vmatmul.bf16.gmra.mxu0 %v496
          %v730 = vpop.f32.mrf.mxu0
          %v731 = vadd.f32 0.0, %v730
          %v732 = vpop.f32.mrf.mxu0
          %v733 = vadd.f32 0.0, %v732
          %734 = vdwg.mxu0
          %v735 = vxor.u32 %v669, 2147483648
          %v736 = vxor.u32 %v688, 2147483648
          %v737 = vxor.u32 %v671, 2147483648
          %v738 = vxor.u32 %v690, 2147483648
          %v739 = vxor.u32 %v674, 2147483648
          %v740 = vxor.u32 %v693, 2147483648
          %v741 = vxor.u32 %v676, 2147483648
          %v742 = vxor.u32 %v695, 2147483648
          %v743 = vmul.f32 %v735, 1.442695
          %v744 = vpow.pop %v743
          %v745 = vmul.f32 %v736, 1.442695
          %v746 = vpow.pop %v745
          %v747 = vmul.f32 %v737, 1.442695
          %v748 = vpow.pop %v747
          %v749 = vmul.f32 %v738, 1.442695
          %v750 = vpow.pop %v749
          %v751 = vmul.f32 %v739, 1.442695
          %v752 = vpow.pop %v751
          %v753 = vmul.f32 %v740, 1.442695
          %v754 = vpow.pop %v753
          %v755 = vmul.f32 %v741, 1.442695
          %v756 = vpow.pop %v755
          %v757 = vmul.f32 %v742, 1.442695
          %v758 = vpow.pop %v757
          %v759 = vadd.f32 %v744, 1.0
          %v760 = vadd.f32 %v746, 1.0
          %v761 = vadd.f32 %v748, 1.0
          %v762 = vadd.f32 %v750, 1.0
          %v763 = vadd.f32 %v752, 1.0
          %v764 = vadd.f32 %v754, 1.0
          %v765 = vadd.f32 %v756, 1.0
          %v766 = vadd.f32 %v758, 1.0
          %v767 = vrcp.pop %v759
          %v768 = vmul.f32 %v759, %v767
          %v769 = vsub.f32 1.0, %v768
          %v770 = vmul.f32 %v767, %v769
          %v771 = vadd.f32 %v767, %v770
          %vm772 = vweird.f32 %v759
          %vm773 = vweird.f32 %v767
          %vm774 = vmor %vm772, %vm773
          %v775 = vsel %vm774, %v767, %v771
          %v776 = vand.u32 2147483647, %v759
          %vm777 = vcmp.eq.f32.partialorder %v776, 8.507059e+37
          %v778 = vand.u32 %v759, 2147483648
          %v779 = vor.u32 1.1754944e-38, %v778
          %v780 = vsel %vm777, %v779, %v775
          %v781 = vmul.f32 1.0, %v780
          %v782 = vrcp.pop %v760
          %v783 = vmul.f32 %v760, %v782
          %v784 = vsub.f32 1.0, %v783
          %v785 = vmul.f32 %v782, %v784
          %v786 = vadd.f32 %v782, %v785
          %vm787 = vweird.f32 %v760
          %vm788 = vweird.f32 %v782
          %vm789 = vmor %vm787, %vm788
          %v790 = vsel %vm789, %v782, %v786
          %v791 = vand.u32 2147483647, %v760
          %vm792 = vcmp.eq.f32.partialorder %v791, 8.507059e+37
          %v793 = vand.u32 %v760, 2147483648
          %v794 = vor.u32 1.1754944e-38, %v793
          %v795 = vsel %vm792, %v794, %v790
          %v796 = vmul.f32 1.0, %v795
          %v797 = vrcp.pop %v761
          %v798 = vmul.f32 %v761, %v797
          %v799 = vsub.f32 1.0, %v798
          %v800 = vmul.f32 %v797, %v799
          %v801 = vadd.f32 %v797, %v800
          %vm802 = vweird.f32 %v761
          %vm803 = vweird.f32 %v797
          %vm804 = vmor %vm802, %vm803
          %v805 = vsel %vm804, %v797, %v801
          %v806 = vand.u32 2147483647, %v761
          %vm807 = vcmp.eq.f32.partialorder %v806, 8.507059e+37
          %v808 = vand.u32 %v761, 2147483648
          %v809 = vor.u32 1.1754944e-38, %v808
          %v810 = vsel %vm807, %v809, %v805
          %v811 = vmul.f32 1.0, %v810
          %v812 = vrcp.pop %v762
          %v813 = vmul.f32 %v762, %v812
          %v814 = vsub.f32 1.0, %v813
          %v815 = vmul.f32 %v812, %v814
          %v816 = vadd.f32 %v812, %v815
          %vm817 = vweird.f32 %v762
          %vm818 = vweird.f32 %v812
          %vm819 = vmor %vm817, %vm818
          %v820 = vsel %vm819, %v812, %v816
          %v821 = vand.u32 2147483647, %v762
          %vm822 = vcmp.eq.f32.partialorder %v821, 8.507059e+37
          %v823 = vand.u32 %v762, 2147483648
          %v824 = vor.u32 1.1754944e-38, %v823
          %v825 = vsel %vm822, %v824, %v820
          %v826 = vmul.f32 1.0, %v825
          %v827 = vrcp.pop %v763
          %v828 = vmul.f32 %v763, %v827
          %v829 = vsub.f32 1.0, %v828
          %v830 = vmul.f32 %v827, %v829
          %v831 = vadd.f32 %v827, %v830
          %vm832 = vweird.f32 %v763
          %vm833 = vweird.f32 %v827
          %vm834 = vmor %vm832, %vm833
          %v835 = vsel %vm834, %v827, %v831
          %v836 = vand.u32 2147483647, %v763
          %vm837 = vcmp.eq.f32.partialorder %v836, 8.507059e+37
          %v838 = vand.u32 %v763, 2147483648
          %v839 = vor.u32 1.1754944e-38, %v838
          %v840 = vsel %vm837, %v839, %v835
          %v841 = vmul.f32 1.0, %v840
          %v842 = vrcp.pop %v764
          %v843 = vmul.f32 %v764, %v842
          %v844 = vsub.f32 1.0, %v843
          %v845 = vmul.f32 %v842, %v844
          %v846 = vadd.f32 %v842, %v845
          %vm847 = vweird.f32 %v764
          %vm848 = vweird.f32 %v842
          %vm849 = vmor %vm847, %vm848
          %v850 = vsel %vm849, %v842, %v846
          %v851 = vand.u32 2147483647, %v764
          %vm852 = vcmp.eq.f32.partialorder %v851, 8.507059e+37
          %v853 = vand.u32 %v764, 2147483648
          %v854 = vor.u32 1.1754944e-38, %v853
          %v855 = vsel %vm852, %v854, %v850
          %v856 = vmul.f32 1.0, %v855
          %v857 = vrcp.pop %v765
          %v858 = vmul.f32 %v765, %v857
          %v859 = vsub.f32 1.0, %v858
          %v860 = vmul.f32 %v857, %v859
          %v861 = vadd.f32 %v857, %v860
          %vm862 = vweird.f32 %v765
          %vm863 = vweird.f32 %v857
          %vm864 = vmor %vm862, %vm863
          %v865 = vsel %vm864, %v857, %v861
          %v866 = vand.u32 2147483647, %v765
          %vm867 = vcmp.eq.f32.partialorder %v866, 8.507059e+37
          %v868 = vand.u32 %v765, 2147483648
          %v869 = vor.u32 1.1754944e-38, %v868
          %v870 = vsel %vm867, %v869, %v865
          %v871 = vmul.f32 1.0, %v870
          %v872 = vrcp.pop %v766
          %v873 = vmul.f32 %v766, %v872
          %v874 = vsub.f32 1.0, %v873
          %v875 = vmul.f32 %v872, %v874
          %v876 = vadd.f32 %v872, %v875
          %vm877 = vweird.f32 %v766
          %vm878 = vweird.f32 %v872
          %vm879 = vmor %vm877, %vm878
          %v880 = vsel %vm879, %v872, %v876
          %v881 = vand.u32 2147483647, %v766
          %vm882 = vcmp.eq.f32.partialorder %v881, 8.507059e+37
          %v883 = vand.u32 %v766, 2147483648
          %v884 = vor.u32 1.1754944e-38, %v883
          %v885 = vsel %vm882, %v884, %v880
          %v886 = vmul.f32 1.0, %v885
          %v887 = vmul.f32 %v669, %v781
          %v888 = vmul.f32 %v688, %v796
          %v889 = vmul.f32 %v671, %v811
          %v890 = vmul.f32 %v690, %v826
          %v891 = vmul.f32 %v674, %v841
          %v892 = vmul.f32 %v693, %v856
          %v893 = vmul.f32 %v676, %v871
          %v894 = vmul.f32 %v695, %v886
          %v895 = vmul.f32 %v887, %v707
          %v896 = vmul.f32 %v888, %v726
          %v897 = vmul.f32 %v889, %v709
          %v898 = vmul.f32 %v890, %v728
          %v899 = vmul.f32 %v891, %v712
          %v900 = vmul.f32 %v892, %v731
          %v901 = vmul.f32 %v893, %v714
          %v902 = vmul.f32 %v894, %v733
          %v903 = vpack.c.bf16 %v897, %v895
          %v904 = vpack.c.bf16 %v898, %v896
          %v905 = vpack.c.bf16 %v901, %v899
          %v906 = vpack.c.bf16 %v902, %v900
          %v907 = vld [vmem:[%s338] sm:$0xf]
          %v908 = vld [vmem:[%s338 + $0x4] sm:$0xf]
          %v909 = vld [vmem:[%s338 + $0x8] sm:$0xf]
          %v910 = vld [vmem:[%s338 + $0xc] sm:$0xf]
          %v911 = vld [vmem:[%s338 + $0x10] sm:$0xf]
          %v912 = vld [vmem:[%s338 + $0x14] sm:$0xf]
          %v913 = vld [vmem:[%s338 + $0x18] sm:$0xf]
          %v914 = vld [vmem:[%s338 + $0x1c] sm:$0xf]
          %v915 = vld [vmem:[%s338 + $0x20] sm:$0xf]
          %v916 = vld [vmem:[%s338 + $0x24] sm:$0xf]
          %v917 = vld [vmem:[%s338 + $0x28] sm:$0xf]
          %v918 = vld [vmem:[%s338 + $0x2c] sm:$0xf]
          %v919 = vld [vmem:[%s338 + $0x30] sm:$0xf]
          %v920 = vld [vmem:[%s338 + $0x34] sm:$0xf]
          %v921 = vld [vmem:[%s338 + $0x38] sm:$0xf]
          %v922 = vld [vmem:[%s338 + $0x3c] sm:$0xf]
          %v923 = vld [vmem:[%s338 + $0x40] sm:$0xf]
          %v924 = vld [vmem:[%s338 + $0x44] sm:$0xf]
          %v925 = vld [vmem:[%s338 + $0x48] sm:$0xf]
          %v926 = vld [vmem:[%s338 + $0x4c] sm:$0xf]
          %v927 = vld [vmem:[%s338 + $0x50] sm:$0xf]
          %v928 = vld [vmem:[%s338 + $0x54] sm:$0xf]
          %v929 = vld [vmem:[%s338 + $0x58] sm:$0xf]
          %v930 = vld [vmem:[%s338 + $0x5c] sm:$0xf]
          %v931 = vld [vmem:[%s338 + $0x60] sm:$0xf]
          %v932 = vld [vmem:[%s338 + $0x64] sm:$0xf]
          %v933 = vld [vmem:[%s338 + $0x68] sm:$0xf]
          %v934 = vld [vmem:[%s338 + $0x6c] sm:$0xf]
          %v935 = vld [vmem:[%s338 + $0x70] sm:$0xf]
          %v936 = vld [vmem:[%s338 + $0x74] sm:$0xf]
          %v937 = vld [vmem:[%s338 + $0x78] sm:$0xf]
          %v938 = vld [vmem:[%s338 + $0x7c] sm:$0xf]
          %v971 = vunpack.c.l.b16 %v907
          %v972 = vunpack.c.l.b16 %v908
          %v973 = vunpack.c.l.b16 %v909
          %v974 = vunpack.c.l.b16 %v910
          %v975 = vunpack.c.l.b16 %v911
          %v976 = vunpack.c.l.b16 %v912
          %v977 = vunpack.c.l.b16 %v913
          %v978 = vunpack.c.l.b16 %v914
          %v979 = vunpack.c.l.b16 %v915
          %v980 = vunpack.c.l.b16 %v916
          %v981 = vunpack.c.l.b16 %v917
          %v982 = vunpack.c.l.b16 %v918
          %v983 = vunpack.c.l.b16 %v919
          %v984 = vunpack.c.l.b16 %v920
          %v985 = vunpack.c.l.b16 %v921
          %v986 = vunpack.c.l.b16 %v922
          %v987 = vunpack.c.l.b16 %v923
          %v988 = vunpack.c.l.b16 %v924
          %v989 = vunpack.c.l.b16 %v925
          %v990 = vunpack.c.l.b16 %v926
          %v991 = vunpack.c.l.b16 %v927
          %v992 = vunpack.c.l.b16 %v928
          %v993 = vunpack.c.l.b16 %v929
          %v994 = vunpack.c.l.b16 %v930
          %v995 = vunpack.c.l.b16 %v931
          %v996 = vunpack.c.l.b16 %v932
          %v997 = vunpack.c.l.b16 %v933
          %v998 = vunpack.c.l.b16 %v934
          %v999 = vunpack.c.l.b16 %v935
          %v1000 = vunpack.c.l.b16 %v936
          %v1001 = vunpack.c.l.b16 %v937
          %v1002 = vunpack.c.l.b16 %v938
          %v1003 = vpack.c.b16 %v972, %v971
          %v1004 = vpack.c.b16 %v974, %v973
          %v1005 = vpack.c.b16 %v976, %v975
          %v1006 = vpack.c.b16 %v978, %v977
          %v1007 = vpack.c.b16 %v980, %v979
          %v1008 = vpack.c.b16 %v982, %v981
          %v1009 = vpack.c.b16 %v984, %v983
          %v1010 = vpack.c.b16 %v986, %v985
          %v1011 = vpack.c.b16 %v988, %v987
          %v1012 = vpack.c.b16 %v990, %v989
          %v1013 = vpack.c.b16 %v992, %v991
          %v1014 = vpack.c.b16 %v994, %v993
          %v1015 = vpack.c.b16 %v996, %v995
          %v1016 = vpack.c.b16 %v998, %v997
          %v1017 = vpack.c.b16 %v1000, %v999
          %v1018 = vpack.c.b16 %v1002, %v1001
          %1035 = vmatpush.bf16.msra.mxu0 %v1010
          %1036 = vmatpush.bf16.msra.mxu0 %v1009
          %1037 = vmatpush.bf16.msra.mxu0 %v1008
          %1038 = vmatpush.bf16.msra.mxu0 %v1007
          %1039 = vmatpush.bf16.msra.mxu0 %v1006
          %1040 = vmatpush.bf16.msra.mxu0 %v1005
          %1041 = vmatpush.bf16.msra.mxu0 %v1004
          %1042 = vmatpush.bf16.msra.mxu0 %v1003
          %1043 = vmatmul.bf16.gmra.mxu0 %v903
          %v1044 = vpop.f32.mrf.mxu0
          %v1045 = vadd.f32 0.0, %v1044
          %v1046 = vpop.f32.mrf.mxu0
          %v1047 = vadd.f32 0.0, %v1046
          %1048 = vmatmul.bf16.gmra.mxu0 %v905
          %v1049 = vpop.f32.mrf.mxu0
          %v1050 = vadd.f32 0.0, %v1049
          %v1051 = vpop.f32.mrf.mxu0
          %v1052 = vadd.f32 0.0, %v1051
          %1053 = vdwg.mxu0
          %1054 = vmatpush.bf16.msra.mxu0 %v1018
          %1055 = vmatpush.bf16.msra.mxu0 %v1017
          %1056 = vmatpush.bf16.msra.mxu0 %v1016
          %1057 = vmatpush.bf16.msra.mxu0 %v1015
          %1058 = vmatpush.bf16.msra.mxu0 %v1014
          %1059 = vmatpush.bf16.msra.mxu0 %v1013
          %1060 = vmatpush.bf16.msra.mxu0 %v1012
          %1061 = vmatpush.bf16.msra.mxu0 %v1011
          %1062 = vmatmul.bf16.gmra.mxu0 %v904
          %v1063 = vpop.f32.mrf.mxu0
          %v1064 = vadd.f32 %v1045, %v1063
          %v1065 = vpop.f32.mrf.mxu0
          %v1066 = vadd.f32 %v1047, %v1065
          %1067 = vmatmul.bf16.gmra.mxu0 %v906
          %v1068 = vpop.f32.mrf.mxu0
          %v1069 = vadd.f32 %v1050, %v1068
          %v1070 = vpop.f32.mrf.mxu0
          %v1071 = vadd.f32 %v1052, %v1070
          %1072 = vdwg.mxu0
          %v1073 = vld [vmem:[%s330] sm:$0xff]
          %v1074 = vld [vmem:[%s330 + $0x8] sm:$0xff]
          %v1075 = vld [vmem:[%s330 + $0x10] sm:$0xff]
          %v1076 = vld [vmem:[%s330 + $0x18] sm:$0xff]
          %v1077 = vlaneseq
          %v1078 = vand.u32 %v1077, 127
          %v1079 = vstv %s450
          %vm1080 = vcmp.eq.s32.totalorder %v1078, %v1079
          %v1081 = vsel %vm1080, %v1073, 0.0
          %v1082 = vsel %vm1080, %v1074, 0.0
          %v1083 = vsel %vm1080, %v1075, 0.0
          %v1084 = vsel %vm1080, %v1076, 0.0
          %vm1085 = vcmask 31744
          %v1086 = vsel %vm1085, %v1081, 0.0
          %1087 = vadd.xlane.f32.xlu0 %v1086
          %v1088 = vpop.xlane.xlu0 %1087
          %v1089 = vsel %vm1085, %v1082, 0.0
          %1090 = vadd.xlane.f32.xlu0 %v1089
          %v1091 = vpop.xlane.xlu0 %1090
          %v1092 = vsel %vm1085, %v1083, 0.0
          %1093 = vadd.xlane.f32.xlu0 %v1092
          %v1094 = vpop.xlane.xlu0 %1093
          %v1095 = vsel %vm1085, %v1084, 0.0
          %1096 = vadd.xlane.f32.xlu0 %v1095
          %v1097 = vpop.xlane.xlu0 %1096
          %v1098 = vld [vmem:[%s344] sm:$0xff]
          %v1099 = vld [vmem:[%s344 + $0x8] sm:$0xff]
          %v1100 = vld [vmem:[%s344 + $0x10] sm:$0xff]
          %v1101 = vld [vmem:[%s344 + $0x18] sm:$0xff]
          %v1102 = vmul.f32 %v1064, %v1088
          %v1103 = vmul.f32 %v1066, %v1091
          %v1104 = vmul.f32 %v1069, %v1094
          %v1105 = vmul.f32 %v1071, %v1097
          %v1106 = vadd.f32 %v1098, %v1102
          %v1107 = vadd.f32 %v1099, %v1103
          %v1108 = vadd.f32 %v1100, %v1104
          %v1109 = vadd.f32 %v1101, %v1105
          %1110 = vst [vmem:[%s344] sm:$0xff] %v1106
          %1111 = vst [vmem:[%s344 + $0x8] sm:$0xff] %v1107
          %1112 = vst [vmem:[%s344 + $0x10] sm:$0xff] %v1108
          %1113 = vst [vmem:[%s344 + $0x18] sm:$0xff] %v1109
        $region52: #{llama_forward.6} parent=39 // pred_fallthru
          _
        %s1114 = smul.u32 4, %s34
        %p1115 = scmp.lt.s32.totalorder %s1114, 3
        %s1116 = scalar_select %p1115, %s1114, 3
        %s1117 = smul.addr %s1116, 8
        %s1118 = scalar_lea.vmem %s7, %s1117
        // Predicated region
        $region53: #{llama_forward.6} parent=39 // pred_check
          %p1119 = pneg %p189
        $region54: #{llama_forward.6} parent=39 // pred_check_branch
          %1121 = sbr.rel (%p1119) target = $region56
        $region55: #{llama_forward.6} parent=39 // pred_region
          %s1122 = smul.u32 4, %s34
        $region56: #{llama_forward.6} parent=39 // pred_fallthru
          _
        // Predicated region
        $region57: #{llama_forward.6} parent=39 // pred_check
          %p1123 = pneg %p189
        $region58: #{llama_forward.6} parent=39 // pred_check_branch
          %1125 = sbr.rel (%p1123) target = $region60
        $region59: #{llama_forward.6} parent=39 // pred_region
          %s1126 = smul.u32 4, %s34
          %p1127 = scmp.lt.s32.totalorder %s1126, 3
          %s1128 = scalar_select %p1127, %s1126, 3
          %s1129 = smul.addr %s1128, 8
          %s1130 = scalar_lea.vmem %s7, %s1129
        $region60: #{llama_forward.6} parent=39 // pred_fallthru
          _
      $region40: #{llama_forward.6} parent=5 // pred_fallthru
        _
      %p1131 = scmp.le.s32.totalorder 2, %s25
      // Predicated region
      $region61: #{llama_forward.6} parent=5 // pred_check
        %p1132 = pneg %p1131
      $region62: #{llama_forward.6} parent=5 // pred_check_branch
        %1134 = sbr.rel (%p1132) target = $region64
      $region63: #{llama_forward.6} parent=5 // pred_region
        %s1135 = ssub.s32 %s25, 2
      $region64: #{llama_forward.6} parent=5 // pred_fallthru
        _
    $region6: #{llama_forward.6} parent=1 // loop_footer
      %s29 = sadd.s32 1, %s25
    $region7: #{llama_forward.6} parent=1 // loop_footer_branch
      %24 = sbr.rel target = $region3
    $region8: #{llama_forward.6} parent=1 // loop_exit
      _
    %1136 = vsyncpa [#allocation7], 1
    %s1137 = scalar_lea.sflag [#allocation7], 1
    %1138 = vsyncpa %s1137, 1

// kernel: llama_forward.5
$region0: #{llama_forward.5}
  #allocation0 [shape = 'u32[]', space=smem, size = 0x4, offset = 0x4, fixed_abs, tag = 'smem constant byte address 0x4 - core index']
  #allocation1 [shape = 'u32[72,128]{1,0:T(1,128)}', space=vmem, size = 0x9000, scoped, tag = 'internal scratch']
  %s0 = inlined_call_operand.vmem [shape: f32[2,16,128], index: 0, kind: input, shape index: {}]
  %s1 = inlined_call_operand.vmem [shape: f32[1,128], index: 1, kind: input, shape index: {}]
  %s2 = inlined_call_operand.vmem [shape: bf16[4,128,32], index: 2, kind: input, shape index: {}]
  %s3 = inlined_call_operand.vmem [shape: bf16[4,128,32], index: 3, kind: input, shape index: {}]
  %s4 = inlined_call_operand.vmem [shape: bf16[4,128,32], index: 4, kind: input, shape index: {}]
  %s5 = inlined_call_operand.vmem [shape: bf16[4,32,128], index: 5, kind: input, shape index: {}]
  %s6 = inlined_call_operand.vmem [shape: f32[1,128], index: 6, kind: input, shape index: {}]
  %s7 = inlined_call_operand.vmem [shape: bf16[128,4], index: 7, kind: input, shape index: {}]
  %s8 = inlined_call_operand.vmem [shape: f32[1,4], index: 8, kind: input, shape index: {}]
  %s9 = inlined_call_operand.vmem [shape: f32[2,16,128], index: 9, kind: output, shape index: {0}]
  %s10 = inlined_call_operand.vmem [shape: f32[2,16,4], index: 10, kind: output, shape index: {1}]
  %11 = xla_tuple %s9, %s10
  %s12 = sld [smem:[#allocation0]]
  $region54: #{llama_forward.5} parent=0
    _
  %s14 = ssub.s32 1, %s12
  %s15 = scalar_select 0, %s14, %s12
  // Predicated region
  $region2: #{llama_forward.5} parent=0 // pred_check
    _
  $region3: #{llama_forward.5} parent=0 // pred_check_branch
    %17 = sbr.rel (0) target = $region5
  $region4: #{llama_forward.5} parent=0 // pred_region
    _
  $region5: #{llama_forward.5} parent=0 // pred_fallthru
    _
  // Predicated region
  $region6: #{llama_forward.5} parent=0 // pred_check
    _
  $region7: #{llama_forward.5} parent=0 // pred_check_branch
    %19 = sbr.rel (0) target = $region9
  $region8: #{llama_forward.5} parent=0 // pred_region
    _
  $region9: #{llama_forward.5} parent=0 // pred_fallthru
    _
  // Predicated region
  $region10: #{llama_forward.5} parent=0 // pred_check
    _
  $region11: #{llama_forward.5} parent=0 // pred_check_branch
    %21 = sbr.rel (0) target = $region13
  $region12: #{llama_forward.5} parent=0 // pred_region
    _
  $region13: #{llama_forward.5} parent=0 // pred_fallthru
    _
  // Predicated region
  $region14: #{llama_forward.5} parent=0 // pred_check
    _
  $region15: #{llama_forward.5} parent=0 // pred_check_branch
    %23 = sbr.rel (0) target = $region17
  $region16: #{llama_forward.5} parent=0 // pred_region
    _
  $region17: #{llama_forward.5} parent=0 // pred_fallthru
    _
  // Predicated region
  $region18: #{llama_forward.5} parent=0 // pred_check
    _
  $region19: #{llama_forward.5} parent=0 // pred_check_branch
    %25 = sbr.rel (0) target = $region21
  $region20: #{llama_forward.5} parent=0 // pred_region
    _
  $region21: #{llama_forward.5} parent=0 // pred_fallthru
    _
  // Predicated region
  $region22: #{llama_forward.5} parent=0 // pred_check
    _
  $region23: #{llama_forward.5} parent=0 // pred_check_branch
    %27 = sbr.rel (0) target = $region25
  $region24: #{llama_forward.5} parent=0 // pred_region
    _
  $region25: #{llama_forward.5} parent=0 // pred_fallthru
    _
  // Predicated region
  $region26: #{llama_forward.5} parent=0 // pred_check
    _
  $region27: #{llama_forward.5} parent=0 // pred_check_branch
    %29 = sbr.rel (0) target = $region29
  $region28: #{llama_forward.5} parent=0 // pred_region
    _
  $region29: #{llama_forward.5} parent=0 // pred_fallthru
    _
  // Predicated region
  $region30: #{llama_forward.5} parent=0 // pred_check
    _
  $region31: #{llama_forward.5} parent=0 // pred_check_branch
    %31 = sbr.rel (0) target = $region33
  $region32: #{llama_forward.5} parent=0 // pred_region
    _
  $region33: #{llama_forward.5} parent=0 // pred_fallthru
    _
  // Predicated region
  $region34: #{llama_forward.5} parent=0 // pred_check
    _
  $region35: #{llama_forward.5} parent=0 // pred_check_branch
    %33 = sbr.rel (0) target = $region37
  $region36: #{llama_forward.5} parent=0 // pred_region
    _
  $region37: #{llama_forward.5} parent=0 // pred_fallthru
    _
  %v35 = vld [vmem:[%s0] sm:$0xff]
  %v36 = vld [vmem:[%s0 + $0x8] sm:$0xff]
  %v37 = vld [vmem:[%s0 + $0x10] sm:$0xff]
  %v38 = vld [vmem:[%s0 + $0x18] sm:$0xff]
  %v39 = vmul.f32 %v35, %v35
  %v40 = vmul.f32 %v36, %v36
  %v41 = vmul.f32 %v37, %v37
  %v42 = vmul.f32 %v38, %v38
  %43 = vadd.xlane.f32.xlu0 %v39
  %v44 = vpop.xlane.xlu0 %43
  %45 = vadd.xlane.f32.xlu0 %v40
  %v46 = vpop.xlane.xlu0 %45
  %47 = vadd.xlane.f32.xlu0 %v41
  %v48 = vpop.xlane.xlu0 %47
  %49 = vadd.xlane.f32.xlu0 %v42
  %v50 = vpop.xlane.xlu0 %49
  %v51 = vrcp.pop 128.0
  %v52 = vmul.f32 128.0, %v51
  %v53 = vsub.f32 1.0, %v52
  %v54 = vmul.f32 %v51, %v53
  %v55 = vadd.f32 %v51, %v54
  %vm56 = vweird.f32 %v51
  %v57 = vsel %vm56, %v51, %v55
  %v58 = vmul.f32 %v44, %v57
  %v59 = vmul.f32 %v46, %v57
  %v60 = vmul.f32 %v48, %v57
  %v61 = vmul.f32 %v50, %v57
  %v62 = vadd.f32 %v58, 1e-06
  %v63 = vadd.f32 %v59, 1e-06
  %v64 = vadd.f32 %v60, 1e-06
  %v65 = vadd.f32 %v61, 1e-06
  %v66 = vrsqrt.pop %v62
  %v67 = vmul.f32 %v66, %v62
  %v68 = vmul.f32 %v67, %v66
  %v69 = vmul.f32 0.5, %v68
  %v70 = vsub.f32 1.5, %v69
  %v71 = vmul.f32 %v66, %v70
  %vm72 = vweird.f32 %v62
  %vm73 = vweird.f32 %v66
  %vm74 = vmor %vm72, %vm73
  %v75 = vsel %vm74, %v66, %v71
  %v76 = vrsqrt.pop %v63
  %v77 = vmul.f32 %v76, %v63
  %v78 = vmul.f32 %v77, %v76
  %v79 = vmul.f32 0.5, %v78
  %v80 = vsub.f32 1.5, %v79
  %v81 = vmul.f32 %v76, %v80
  %vm82 = vweird.f32 %v63
  %vm83 = vweird.f32 %v76
  %vm84 = vmor %vm82, %vm83
  %v85 = vsel %vm84, %v76, %v81
  %v86 = vrsqrt.pop %v64
  %v87 = vmul.f32 %v86, %v64
  %v88 = vmul.f32 %v87, %v86
  %v89 = vmul.f32 0.5, %v88
  %v90 = vsub.f32 1.5, %v89
  %v91 = vmul.f32 %v86, %v90
  %vm92 = vweird.f32 %v64
  %vm93 = vweird.f32 %v86
  %vm94 = vmor %vm92, %vm93
  %v95 = vsel %vm94, %v86, %v91
  %v96 = vrsqrt.pop %v65
  %v97 = vmul.f32 %v96, %v65
  %v98 = vmul.f32 %v97, %v96
  %v99 = vmul.f32 0.5, %v98
  %v100 = vsub.f32 1.5, %v99
  %v101 = vmul.f32 %v96, %v100
  %vm102 = vweird.f32 %v65
  %vm103 = vweird.f32 %v96
  %vm104 = vmor %vm102, %vm103
  %v105 = vsel %vm104, %v96, %v101
  %v106 = vmul.f32 %v35, %v75
  %v107 = vmul.f32 %v36, %v85
  %v108 = vmul.f32 %v37, %v95
  %v109 = vmul.f32 %v38, %v105
  %v110 = vld [vmem:[%s1] sm:$0x1]
  %v112 = vperm.slane %v110, 0
  %v114 = vmul.f32 %v106, %v112
  %v115 = vmul.f32 %v107, %v112
  %v116 = vmul.f32 %v108, %v112
  %v117 = vmul.f32 %v109, %v112
  %v118 = vpack.c.bf16 %v115, %v114
  %v119 = vpack.c.bf16 %v117, %v116
  %v120 = vld [vmem:[%s2] sm:$0xf]
  %v121 = vld [vmem:[%s2 + $0x4] sm:$0xf]
  %v122 = vld [vmem:[%s2 + $0x8] sm:$0xf]
  %v123 = vld [vmem:[%s2 + $0xc] sm:$0xf]
  %v124 = vld [vmem:[%s2 + $0x10] sm:$0xf]
  %v125 = vld [vmem:[%s2 + $0x14] sm:$0xf]
  %v126 = vld [vmem:[%s2 + $0x18] sm:$0xf]
  %v127 = vld [vmem:[%s2 + $0x1c] sm:$0xf]
  %v128 = vld [vmem:[%s2 + $0x20] sm:$0xf]
  %v129 = vld [vmem:[%s2 + $0x24] sm:$0xf]
  %v130 = vld [vmem:[%s2 + $0x28] sm:$0xf]
  %v131 = vld [vmem:[%s2 + $0x2c] sm:$0xf]
  %v132 = vld [vmem:[%s2 + $0x30] sm:$0xf]
  %v133 = vld [vmem:[%s2 + $0x34] sm:$0xf]
  %v134 = vld [vmem:[%s2 + $0x38] sm:$0xf]
  %v135 = vld [vmem:[%s2 + $0x3c] sm:$0xf]
  %v152 = vunpack.c.l.b16 %v120
  %v153 = vunpack.c.l.b16 %v121
  %v154 = vunpack.c.l.b16 %v122
  %v155 = vunpack.c.l.b16 %v123
  %v156 = vunpack.c.l.b16 %v124
  %v157 = vunpack.c.l.b16 %v125
  %v158 = vunpack.c.l.b16 %v126
  %v159 = vunpack.c.l.b16 %v127
  %v160 = vunpack.c.l.b16 %v128
  %v161 = vunpack.c.l.b16 %v129
  %v162 = vunpack.c.l.b16 %v130
  %v163 = vunpack.c.l.b16 %v131
  %v164 = vunpack.c.l.b16 %v132
  %v165 = vunpack.c.l.b16 %v133
  %v166 = vunpack.c.l.b16 %v134
  %v167 = vunpack.c.l.b16 %v135
  %v168 = vpack.c.b16 %v153, %v152
  %v169 = vpack.c.b16 %v155, %v154
  %v170 = vpack.c.b16 %v157, %v156
  %v171 = vpack.c.b16 %v159, %v158
  %v172 = vpack.c.b16 %v161, %v160
  %v173 = vpack.c.b16 %v163, %v162
  %v174 = vpack.c.b16 %v165, %v164
  %v175 = vpack.c.b16 %v167, %v166
  %184 = vmatpush.bf16.msra.mxu0 %v175
  %185 = vmatpush.bf16.msra.mxu0 %v174
  %186 = vmatpush.bf16.msra.mxu0 %v173
  %187 = vmatpush.bf16.msra.mxu0 %v172
  %188 = vmatpush.bf16.msra.mxu0 %v171
  %189 = vmatpush.bf16.msra.mxu0 %v170
  %190 = vmatpush.bf16.msra.mxu0 %v169
  %191 = vmatpush.bf16.msra.mxu0 %v168
  %192 = vmatmul.bf16.gmra.mxu0 %v118
  %v193 = vpop.f32.mrf.mxu0
  %v194 = vadd.f32 0.0, %v193
  %v195 = vpop.f32.mrf.mxu0
  %v196 = vadd.f32 0.0, %v195
  %197 = vmatmul.bf16.gmra.mxu0 %v119
  %v198 = vpop.f32.mrf.mxu0
  %v199 = vadd.f32 0.0, %v198
  %v200 = vpop.f32.mrf.mxu0
  %v201 = vadd.f32 0.0, %v200
  %202 = vdwg.mxu0
  %v203 = vld [vmem:[%s3] sm:$0xf]
  %v204 = vld [vmem:[%s3 + $0x4] sm:$0xf]
  %v205 = vld [vmem:[%s3 + $0x8] sm:$0xf]
  %v206 = vld [vmem:[%s3 + $0xc] sm:$0xf]
  %v207 = vld [vmem:[%s3 + $0x10] sm:$0xf]
  %v208 = vld [vmem:[%s3 + $0x14] sm:$0xf]
  %v209 = vld [vmem:[%s3 + $0x18] sm:$0xf]
  %v210 = vld [vmem:[%s3 + $0x1c] sm:$0xf]
  %v211 = vld [vmem:[%s3 + $0x20] sm:$0xf]
  %v212 = vld [vmem:[%s3 + $0x24] sm:$0xf]
  %v213 = vld [vmem:[%s3 + $0x28] sm:$0xf]
  %v214 = vld [vmem:[%s3 + $0x2c] sm:$0xf]
  %v215 = vld [vmem:[%s3 + $0x30] sm:$0xf]
  %v216 = vld [vmem:[%s3 + $0x34] sm:$0xf]
  %v217 = vld [vmem:[%s3 + $0x38] sm:$0xf]
  %v218 = vld [vmem:[%s3 + $0x3c] sm:$0xf]
  %v235 = vunpack.c.l.b16 %v203
  %v236 = vunpack.c.l.b16 %v204
  %v237 = vunpack.c.l.b16 %v205
  %v238 = vunpack.c.l.b16 %v206
  %v239 = vunpack.c.l.b16 %v207
  %v240 = vunpack.c.l.b16 %v208
  %v241 = vunpack.c.l.b16 %v209
  %v242 = vunpack.c.l.b16 %v210
  %v243 = vunpack.c.l.b16 %v211
  %v244 = vunpack.c.l.b16 %v212
  %v245 = vunpack.c.l.b16 %v213
  %v246 = vunpack.c.l.b16 %v214
  %v247 = vunpack.c.l.b16 %v215
  %v248 = vunpack.c.l.b16 %v216
  %v249 = vunpack.c.l.b16 %v217
  %v250 = vunpack.c.l.b16 %v218
  %v251 = vpack.c.b16 %v236, %v235
  %v252 = vpack.c.b16 %v238, %v237
  %v253 = vpack.c.b16 %v240, %v239
  %v254 = vpack.c.b16 %v242, %v241
  %v255 = vpack.c.b16 %v244, %v243
  %v256 = vpack.c.b16 %v246, %v245
  %v257 = vpack.c.b16 %v248, %v247
  %v258 = vpack.c.b16 %v250, %v249
  %267 = vmatpush.bf16.msra.mxu0 %v258
  %268 = vmatpush.bf16.msra.mxu0 %v257
  %269 = vmatpush.bf16.msra.mxu0 %v256
  %270 = vmatpush.bf16.msra.mxu0 %v255
  %271 = vmatpush.bf16.msra.mxu0 %v254
  %272 = vmatpush.bf16.msra.mxu0 %v253
  %273 = vmatpush.bf16.msra.mxu0 %v252
  %274 = vmatpush.bf16.msra.mxu0 %v251
  %275 = vmatmul.bf16.gmra.mxu0 %v118
  %v276 = vpop.f32.mrf.mxu0
  %v277 = vadd.f32 0.0, %v276
  %v278 = vpop.f32.mrf.mxu0
  %v279 = vadd.f32 0.0, %v278
  %280 = vmatmul.bf16.gmra.mxu0 %v119
  %v281 = vpop.f32.mrf.mxu0
  %v282 = vadd.f32 0.0, %v281
  %v283 = vpop.f32.mrf.mxu0
  %v284 = vadd.f32 0.0, %v283
  %285 = vdwg.mxu0
  %v286 = vld [vmem:[%s4] sm:$0xf]
  %v287 = vld [vmem:[%s4 + $0x4] sm:$0xf]
  %v288 = vld [vmem:[%s4 + $0x8] sm:$0xf]
  %v289 = vld [vmem:[%s4 + $0xc] sm:$0xf]
  %v290 = vld [vmem:[%s4 + $0x10] sm:$0xf]
  %v291 = vld [vmem:[%s4 + $0x14] sm:$0xf]
  %v292 = vld [vmem:[%s4 + $0x18] sm:$0xf]
  %v293 = vld [vmem:[%s4 + $0x1c] sm:$0xf]
  %v294 = vld [vmem:[%s4 + $0x20] sm:$0xf]
  %v295 = vld [vmem:[%s4 + $0x24] sm:$0xf]
  %v296 = vld [vmem:[%s4 + $0x28] sm:$0xf]
  %v297 = vld [vmem:[%s4 + $0x2c] sm:$0xf]
  %v298 = vld [vmem:[%s4 + $0x30] sm:$0xf]
  %v299 = vld [vmem:[%s4 + $0x34] sm:$0xf]
  %v300 = vld [vmem:[%s4 + $0x38] sm:$0xf]
  %v301 = vld [vmem:[%s4 + $0x3c] sm:$0xf]
  %v318 = vunpack.c.l.b16 %v286
  %v319 = vunpack.c.l.b16 %v287
  %v320 = vunpack.c.l.b16 %v288
  %v321 = vunpack.c.l.b16 %v289
  %v322 = vunpack.c.l.b16 %v290
  %v323 = vunpack.c.l.b16 %v291
  %v324 = vunpack.c.l.b16 %v292
  %v325 = vunpack.c.l.b16 %v293
  %v326 = vunpack.c.l.b16 %v294
  %v327 = vunpack.c.l.b16 %v295
  %v328 = vunpack.c.l.b16 %v296
  %v329 = vunpack.c.l.b16 %v297
  %v330 = vunpack.c.l.b16 %v298
  %v331 = vunpack.c.l.b16 %v299
  %v332 = vunpack.c.l.b16 %v300
  %v333 = vunpack.c.l.b16 %v301
  %v334 = vpack.c.b16 %v319, %v318
  %v335 = vpack.c.b16 %v321, %v320
  %v336 = vpack.c.b16 %v323, %v322
  %v337 = vpack.c.b16 %v325, %v324
  %v338 = vpack.c.b16 %v327, %v326
  %v339 = vpack.c.b16 %v329, %v328
  %v340 = vpack.c.b16 %v331, %v330
  %v341 = vpack.c.b16 %v333, %v332
  %350 = vmatpush.bf16.msra.mxu0 %v341
  %351 = vmatpush.bf16.msra.mxu0 %v340
  %352 = vmatpush.bf16.msra.mxu0 %v339
  %353 = vmatpush.bf16.msra.mxu0 %v338
  %354 = vmatpush.bf16.msra.mxu0 %v337
  %355 = vmatpush.bf16.msra.mxu0 %v336
  %356 = vmatpush.bf16.msra.mxu0 %v335
  %357 = vmatpush.bf16.msra.mxu0 %v334
  %358 = vmatmul.bf16.gmra.mxu0 %v118
  %v359 = vpop.f32.mrf.mxu0
  %v360 = vadd.f32 0.0, %v359
  %v361 = vpop.f32.mrf.mxu0
  %v362 = vadd.f32 0.0, %v361
  %363 = vmatmul.bf16.gmra.mxu0 %v119
  %v364 = vpop.f32.mrf.mxu0
  %v365 = vadd.f32 0.0, %v364
  %v366 = vpop.f32.mrf.mxu0
  %v367 = vadd.f32 0.0, %v366
  %368 = vdwg.mxu0
  %vm369 = vcmp.gt.f32.partialorder %v194, 0.0
  %vm370 = vcmp.gt.f32.partialorder %v196, 0.0
  %vm371 = vcmp.gt.f32.partialorder %v199, 0.0
  %vm372 = vcmp.gt.f32.partialorder %v201, 0.0
  %v373 = vadd.f32 %v194, 1.0
  %v374 = vadd.f32 %v196, 1.0
  %v375 = vadd.f32 %v199, 1.0
  %v376 = vadd.f32 %v201, 1.0
  %v377 = vmul.f32 %v194, 1.442695
  %v378 = vpow.pop %v377
  %v379 = vmul.f32 %v196, 1.442695
  %v380 = vpow.pop %v379
  %v381 = vmul.f32 %v199, 1.442695
  %v382 = vpow.pop %v381
  %v383 = vmul.f32 %v201, 1.442695
  %v384 = vpow.pop %v383
  %v385 = vsel %vm369, %v373, %v378
  %v386 = vsel %vm370, %v374, %v380
  %v387 = vsel %vm371, %v375, %v382
  %v388 = vsel %vm372, %v376, %v384
  %vm389 = vcmp.gt.f32.partialorder %v277, 0.0
  %vm390 = vcmp.gt.f32.partialorder %v279, 0.0
  %vm391 = vcmp.gt.f32.partialorder %v282, 0.0
  %vm392 = vcmp.gt.f32.partialorder %v284, 0.0
  %v393 = vadd.f32 %v277, 1.0
  %v394 = vadd.f32 %v279, 1.0
  %v395 = vadd.f32 %v282, 1.0
  %v396 = vadd.f32 %v284, 1.0
  %v397 = vmul.f32 %v277, 1.442695
  %v398 = vpow.pop %v397
  %v399 = vmul.f32 %v279, 1.442695
  %v400 = vpow.pop %v399
  %v401 = vmul.f32 %v282, 1.442695
  %v402 = vpow.pop %v401
  %v403 = vmul.f32 %v284, 1.442695
  %v404 = vpow.pop %v403
  %v405 = vsel %vm389, %v393, %v398
  %v406 = vsel %vm390, %v394, %v400
  %v407 = vsel %vm391, %v395, %v402
  %v408 = vsel %vm392, %v396, %v404
  %v409 = vpack.c.bf16 %v385, %v385
  %v410 = vpack.c.bf16 %v386, %v386
  %v411 = vpack.c.bf16 %v387, %v387
  %v412 = vpack.c.bf16 %v388, %v388
  %v413 = vpack.c.bf16 %v405, %v405
  %v414 = vpack.c.bf16 %v406, %v406
  %v415 = vpack.c.bf16 %v407, %v407
  %v416 = vpack.c.bf16 %v408, %v408
  %v417 = vpack.c.bf16 %v360, %v360
  %v418 = vpack.c.bf16 %v362, %v362
  %v419 = vpack.c.bf16 %v365, %v365
  %v420 = vpack.c.bf16 %v367, %v367
  %v423 = vunpack.c.l.b16 %v409
  %v424 = vunpack.c.l.b16 %v410
  %v425 = vpack.c.b16 %v424, %v423
  %v428 = vunpack.c.l.b16 %v413
  %v429 = vunpack.c.l.b16 %v414
  %v430 = vpack.c.b16 %v429, %v428
  %vm431 = vcmask 261120
  %v433 = vsel %vm431, %v425, 0
  %v436 = vsel %vm431, %v430, 0
  %438 = vmatpush.bf16.xpose.msra.mxu0 0
  %439 = vmatpush.bf16.xpose.msra.mxu0 0
  %440 = vmatpush.bf16.xpose.msra.mxu0 0
  %441 = vmatpush.bf16.xpose.msra.mxu0 0
  %442 = vmatpush.bf16.xpose.msra.mxu0 0
  %443 = vmatpush.bf16.xpose.msra.mxu0 0
  %444 = vmatpush.bf16.xpose.msra.mxu0 0
  %445 = vmatpush.bf16.xpose.msra.mxu0 %v436
  %446 = vmatmul.bf16.gmra.mxu0 %v433
  %v447 = vpop.f32.mrf.mxu0
  %v448 = vadd.f32 0.0, %v447
  %v449 = vpop.f32.mrf.mxu0
  %v450 = vadd.f32 0.0, %v449
  %451 = vdwg.mxu0
  %v454 = vunpack.c.l.b16 %v411
  %v455 = vunpack.c.l.b16 %v412
  %v456 = vpack.c.b16 %v455, %v454
  %v459 = vunpack.c.l.b16 %v415
  %v460 = vunpack.c.l.b16 %v416
  %v461 = vpack.c.b16 %v460, %v459
  %v463 = vsel %vm431, %v456, 0
  %v466 = vsel %vm431, %v461, 0
  %468 = vmatpush.bf16.xpose.msra.mxu0 0
  %469 = vmatpush.bf16.xpose.msra.mxu0 0
  %470 = vmatpush.bf16.xpose.msra.mxu0 0
  %471 = vmatpush.bf16.xpose.msra.mxu0 0
  %472 = vmatpush.bf16.xpose.msra.mxu0 0
  %473 = vmatpush.bf16.xpose.msra.mxu0 0
  %474 = vmatpush.bf16.xpose.msra.mxu0 0
  %475 = vmatpush.bf16.xpose.msra.mxu0 %v466
  %476 = vmatmul.bf16.gmra.mxu0 %v463
  %v477 = vpop.f32.mrf.mxu0
  %v478 = vadd.f32 0.0, %v477
  %v479 = vpop.f32.mrf.mxu0
  %v480 = vadd.f32 0.0, %v479
  %481 = vdwg.mxu0
  %vm482 = vcmask 130048
  %v483 = vsel %vm482, %v448, -inf
  %484 = vmax.xlane.f32.xlu0 %v483
  %v485 = vpop.xlane.xlu0 %484
  %v486 = vsel %vm482, %v450, -inf
  %487 = vmax.xlane.f32.xlu0 %v486
  %v488 = vpop.xlane.xlu0 %487
  %v489 = vsel %vm482, %v478, -inf
  %490 = vmax.xlane.f32.xlu0 %v489
  %v491 = vpop.xlane.xlu0 %490
  %v492 = vsel %vm482, %v480, -inf
  %493 = vmax.xlane.f32.xlu0 %v492
  %v494 = vpop.xlane.xlu0 %493
  %v495 = vsub.f32 %v448, %v485
  %v496 = vsub.f32 %v450, %v488
  %v497 = vsub.f32 %v478, %v491
  %v498 = vsub.f32 %v480, %v494
  %v499 = vmul.f32 %v495, 1.442695
  %v500 = vpow.pop %v499
  %v501 = vmul.f32 %v496, 1.442695
  %v502 = vpow.pop %v501
  %v503 = vmul.f32 %v497, 1.442695
  %v504 = vpow.pop %v503
  %v505 = vmul.f32 %v498, 1.442695
  %v506 = vpow.pop %v505
  %v507 = vsel %vm482, %v500, 0.0
  %508 = vadd.xlane.f32.xlu0 %v507
  %v509 = vpop.xlane.xlu0 %508
  %v510 = vsel %vm482, %v502, 0.0
  %511 = vadd.xlane.f32.xlu0 %v510
  %v512 = vpop.xlane.xlu0 %511
  %v513 = vsel %vm482, %v504, 0.0
  %514 = vadd.xlane.f32.xlu0 %v513
  %v515 = vpop.xlane.xlu0 %514
  %v516 = vsel %vm482, %v506, 0.0
  %517 = vadd.xlane.f32.xlu0 %v516
  %v518 = vpop.xlane.xlu0 %517
  %v519 = vrcp.pop %v509
  %v520 = vmul.f32 %v509, %v519
  %v521 = vsub.f32 1.0, %v520
  %v522 = vmul.f32 %v519, %v521
  %v523 = vadd.f32 %v519, %v522
  %vm524 = vweird.f32 %v509
  %vm525 = vweird.f32 %v519
  %vm526 = vmor %vm524, %vm525
  %v527 = vsel %vm526, %v519, %v523
  %v528 = vand.u32 2147483647, %v509
  %vm529 = vcmp.eq.f32.partialorder %v528, 8.507059e+37
  %v530 = vand.u32 %v509, 2147483648
  %v531 = vor.u32 1.1754944e-38, %v530
  %v532 = vsel %vm529, %v531, %v527
  %v533 = vmul.f32 %v500, %v532
  %v534 = vrcp.pop %v512
  %v535 = vmul.f32 %v512, %v534
  %v536 = vsub.f32 1.0, %v535
  %v537 = vmul.f32 %v534, %v536
  %v538 = vadd.f32 %v534, %v537
  %vm539 = vweird.f32 %v512
  %vm540 = vweird.f32 %v534
  %vm541 = vmor %vm539, %vm540
  %v542 = vsel %vm541, %v534, %v538
  %v543 = vand.u32 2147483647, %v512
  %vm544 = vcmp.eq.f32.partialorder %v543, 8.507059e+37
  %v545 = vand.u32 %v512, 2147483648
  %v546 = vor.u32 1.1754944e-38, %v545
  %v547 = vsel %vm544, %v546, %v542
  %v548 = vmul.f32 %v502, %v547
  %v549 = vrcp.pop %v515
  %v550 = vmul.f32 %v515, %v549
  %v551 = vsub.f32 1.0, %v550
  %v552 = vmul.f32 %v549, %v551
  %v553 = vadd.f32 %v549, %v552
  %vm554 = vweird.f32 %v515
  %vm555 = vweird.f32 %v549
  %vm556 = vmor %vm554, %vm555
  %v557 = vsel %vm556, %v549, %v553
  %v558 = vand.u32 2147483647, %v515
  %vm559 = vcmp.eq.f32.partialorder %v558, 8.507059e+37
  %v560 = vand.u32 %v515, 2147483648
  %v561 = vor.u32 1.1754944e-38, %v560
  %v562 = vsel %vm559, %v561, %v557
  %v563 = vmul.f32 %v504, %v562
  %v564 = vrcp.pop %v518
  %v565 = vmul.f32 %v518, %v564
  %v566 = vsub.f32 1.0, %v565
  %v567 = vmul.f32 %v564, %v566
  %v568 = vadd.f32 %v564, %v567
  %vm569 = vweird.f32 %v518
  %vm570 = vweird.f32 %v564
  %vm571 = vmor %vm569, %vm570
  %v572 = vsel %vm571, %v564, %v568
  %v573 = vand.u32 2147483647, %v518
  %vm574 = vcmp.eq.f32.partialorder %v573, 8.507059e+37
  %v575 = vand.u32 %v518, 2147483648
  %v576 = vor.u32 1.1754944e-38, %v575
  %v577 = vsel %vm574, %v576, %v572
  %v578 = vmul.f32 %v506, %v577
  %v579 = vpack.c.bf16 %v533, %v533
  %v580 = vpack.c.bf16 %v548, %v548
  %v581 = vpack.c.bf16 %v563, %v563
  %v582 = vpack.c.bf16 %v578, %v578
  %v585 = vunpack.c.l.b16 %v579
  %v586 = vunpack.c.l.b16 %v580
  %v587 = vpack.c.b16 %v586, %v585
  %v590 = vunpack.c.l.b16 %v417
  %v591 = vunpack.c.l.b16 %v418
  %v592 = vpack.c.b16 %v591, %v590
  %v595 = vsel %vm482, %v587, 0
  %597 = vmatpush.bf16.msra.mxu0 0
  %598 = vmatpush.bf16.msra.mxu0 0
  %599 = vmatpush.bf16.msra.mxu0 0
  %600 = vmatpush.bf16.msra.mxu0 0
  %601 = vmatpush.bf16.msra.mxu0 0
  %602 = vmatpush.bf16.msra.mxu0 0
  %603 = vmatpush.bf16.msra.mxu0 0
  %604 = vmatpush.bf16.msra.mxu0 %v592
  %605 = vmatmul.bf16.gmra.mxu0 %v595
  %v606 = vpop.f32.mrf.mxu0
  %v607 = vadd.f32 0.0, %v606
  %v608 = vpop.f32.mrf.mxu0
  %v609 = vadd.f32 0.0, %v608
  %610 = vdwg.mxu0
  %v613 = vunpack.c.l.b16 %v581
  %v614 = vunpack.c.l.b16 %v582
  %v615 = vpack.c.b16 %v614, %v613
  %v618 = vunpack.c.l.b16 %v419
  %v619 = vunpack.c.l.b16 %v420
  %v620 = vpack.c.b16 %v619, %v618
  %v623 = vsel %vm482, %v615, 0
  %625 = vmatpush.bf16.msra.mxu0 0
  %626 = vmatpush.bf16.msra.mxu0 0
  %627 = vmatpush.bf16.msra.mxu0 0
  %628 = vmatpush.bf16.msra.mxu0 0
  %629 = vmatpush.bf16.msra.mxu0 0
  %630 = vmatpush.bf16.msra.mxu0 0
  %631 = vmatpush.bf16.msra.mxu0 0
  %632 = vmatpush.bf16.msra.mxu0 %v620
  %633 = vmatmul.bf16.gmra.mxu0 %v623
  %v634 = vpop.f32.mrf.mxu0
  %v635 = vadd.f32 0.0, %v634
  %v636 = vpop.f32.mrf.mxu0
  %v637 = vadd.f32 0.0, %v636
  %638 = vdwg.mxu0
  %v639 = vpack.c.bf16 %v609, %v607
  %v640 = vpack.c.bf16 %v637, %v635
  %v641 = vld [vmem:[%s5] sm:$0xf]
  %v642 = vld [vmem:[%s5 + $0x4] sm:$0xf]
  %v643 = vld [vmem:[%s5 + $0x8] sm:$0xf]
  %v644 = vld [vmem:[%s5 + $0xc] sm:$0xf]
  %s645 = scalar_lea.vmem %s2, 64
  %v646 = vld [vmem:[%s645] sm:$0xf]
  %v647 = vld [vmem:[%s645 + $0x4] sm:$0xf]
  %v648 = vld [vmem:[%s645 + $0x8] sm:$0xf]
  %v649 = vld [vmem:[%s645 + $0xc] sm:$0xf]
  %v650 = vld [vmem:[%s645 + $0x10] sm:$0xf]
  %v651 = vld [vmem:[%s645 + $0x14] sm:$0xf]
  %v652 = vld [vmem:[%s645 + $0x18] sm:$0xf]
  %v653 = vld [vmem:[%s645 + $0x1c] sm:$0xf]
  %v654 = vld [vmem:[%s645 + $0x20] sm:$0xf]
  %v655 = vld [vmem:[%s645 + $0x24] sm:$0xf]
  %v656 = vld [vmem:[%s645 + $0x28] sm:$0xf]
  %v657 = vld [vmem:[%s645 + $0x2c] sm:$0xf]
  %v658 = vld [vmem:[%s645 + $0x30] sm:$0xf]
  %v659 = vld [vmem:[%s645 + $0x34] sm:$0xf]
  %v660 = vld [vmem:[%s645 + $0x38] sm:$0xf]
  %v661 = vld [vmem:[%s645 + $0x3c] sm:$0xf]
  %v678 = vunpack.c.l.b16 %v646
  %v679 = vunpack.c.l.b16 %v647
  %v680 = vunpack.c.l.b16 %v648
  %v681 = vunpack.c.l.b16 %v649
  %v682 = vunpack.c.l.b16 %v650
  %v683 = vunpack.c.l.b16 %v651
  %v684 = vunpack.c.l.b16 %v652
  %v685 = vunpack.c.l.b16 %v653
  %v686 = vunpack.c.l.b16 %v654
  %v687 = vunpack.c.l.b16 %v655
  %v688 = vunpack.c.l.b16 %v656
  %v689 = vunpack.c.l.b16 %v657
  %v690 = vunpack.c.l.b16 %v658
  %v691 = vunpack.c.l.b16 %v659
  %v692 = vunpack.c.l.b16 %v660
  %v693 = vunpack.c.l.b16 %v661
  %v694 = vpack.c.b16 %v679, %v678
  %v695 = vpack.c.b16 %v681, %v680
  %v696 = vpack.c.b16 %v683, %v682
  %v697 = vpack.c.b16 %v685, %v684
  %v698 = vpack.c.b16 %v687, %v686
  %v699 = vpack.c.b16 %v689, %v688
  %v700 = vpack.c.b16 %v691, %v690
  %v701 = vpack.c.b16 %v693, %v692
  %710 = vmatpush.bf16.msra.mxu0 %v701
  %711 = vmatpush.bf16.msra.mxu0 %v700
  %712 = vmatpush.bf16.msra.mxu0 %v699
  %713 = vmatpush.bf16.msra.mxu0 %v698
  %714 = vmatpush.bf16.msra.mxu0 %v697
  %715 = vmatpush.bf16.msra.mxu0 %v696
  %716 = vmatpush.bf16.msra.mxu0 %v695
  %717 = vmatpush.bf16.msra.mxu0 %v694
  %718 = vmatmul.bf16.gmra.mxu0 %v118
  %v719 = vpop.f32.mrf.mxu0
  %v720 = vadd.f32 0.0, %v719
  %v721 = vpop.f32.mrf.mxu0
  %v722 = vadd.f32 0.0, %v721
  %723 = vmatmul.bf16.gmra.mxu0 %v119
  %v724 = vpop.f32.mrf.mxu0
  %v725 = vadd.f32 0.0, %v724
  %v726 = vpop.f32.mrf.mxu0
  %v727 = vadd.f32 0.0, %v726
  %728 = vdwg.mxu0
  %s729 = scalar_lea.vmem %s3, 64
  %v730 = vld [vmem:[%s729] sm:$0xf]
  %v731 = vld [vmem:[%s729 + $0x4] sm:$0xf]
  %v732 = vld [vmem:[%s729 + $0x8] sm:$0xf]
  %v733 = vld [vmem:[%s729 + $0xc] sm:$0xf]
  %v734 = vld [vmem:[%s729 + $0x10] sm:$0xf]
  %v735 = vld [vmem:[%s729 + $0x14] sm:$0xf]
  %v736 = vld [vmem:[%s729 + $0x18] sm:$0xf]
  %v737 = vld [vmem:[%s729 + $0x1c] sm:$0xf]
  %v738 = vld [vmem:[%s729 + $0x20] sm:$0xf]
  %v739 = vld [vmem:[%s729 + $0x24] sm:$0xf]
  %v740 = vld [vmem:[%s729 + $0x28] sm:$0xf]
  %v741 = vld [vmem:[%s729 + $0x2c] sm:$0xf]
  %v742 = vld [vmem:[%s729 + $0x30] sm:$0xf]
  %v743 = vld [vmem:[%s729 + $0x34] sm:$0xf]
  %v744 = vld [vmem:[%s729 + $0x38] sm:$0xf]
  %v745 = vld [vmem:[%s729 + $0x3c] sm:$0xf]
  %v762 = vunpack.c.l.b16 %v730
  %v763 = vunpack.c.l.b16 %v731
  %v764 = vunpack.c.l.b16 %v732
  %v765 = vunpack.c.l.b16 %v733
  %v766 = vunpack.c.l.b16 %v734
  %v767 = vunpack.c.l.b16 %v735
  %v768 = vunpack.c.l.b16 %v736
  %v769 = vunpack.c.l.b16 %v737
  %v770 = vunpack.c.l.b16 %v738
  %v771 = vunpack.c.l.b16 %v739
  %v772 = vunpack.c.l.b16 %v740
  %v773 = vunpack.c.l.b16 %v741
  %v774 = vunpack.c.l.b16 %v742
  %v775 = vunpack.c.l.b16 %v743
  %v776 = vunpack.c.l.b16 %v744
  %v777 = vunpack.c.l.b16 %v745
  %v778 = vpack.c.b16 %v763, %v762
  %v779 = vpack.c.b16 %v765, %v764
  %v780 = vpack.c.b16 %v767, %v766
  %v781 = vpack.c.b16 %v769, %v768
  %v782 = vpack.c.b16 %v771, %v770
  %v783 = vpack.c.b16 %v773, %v772
  %v784 = vpack.c.b16 %v775, %v774
  %v785 = vpack.c.b16 %v777, %v776
  %794 = vmatpush.bf16.msra.mxu0 %v785
  %795 = vmatpush.bf16.msra.mxu0 %v784
  %796 = vmatpush.bf16.msra.mxu0 %v783
  %797 = vmatpush.bf16.msra.mxu0 %v782
  %798 = vmatpush.bf16.msra.mxu0 %v781
  %799 = vmatpush.bf16.msra.mxu0 %v780
  %800 = vmatpush.bf16.msra.mxu0 %v779
  %801 = vmatpush.bf16.msra.mxu0 %v778
  %802 = vmatmul.bf16.gmra.mxu0 %v118
  %v803 = vpop.f32.mrf.mxu0
  %v804 = vadd.f32 0.0, %v803
  %v805 = vpop.f32.mrf.mxu0
  %v806 = vadd.f32 0.0, %v805
  %807 = vmatmul.bf16.gmra.mxu0 %v119
  %v808 = vpop.f32.mrf.mxu0
  %v809 = vadd.f32 0.0, %v808
  %v810 = vpop.f32.mrf.mxu0
  %v811 = vadd.f32 0.0, %v810
  %812 = vdwg.mxu0
  %s813 = scalar_lea.vmem %s4, 64
  %v814 = vld [vmem:[%s813] sm:$0xf]
  %v815 = vld [vmem:[%s813 + $0x4] sm:$0xf]
  %v816 = vld [vmem:[%s813 + $0x8] sm:$0xf]
  %v817 = vld [vmem:[%s813 + $0xc] sm:$0xf]
  %v818 = vld [vmem:[%s813 + $0x10] sm:$0xf]
  %v819 = vld [vmem:[%s813 + $0x14] sm:$0xf]
  %v820 = vld [vmem:[%s813 + $0x18] sm:$0xf]
  %v821 = vld [vmem:[%s813 + $0x1c] sm:$0xf]
  %v822 = vld [vmem:[%s813 + $0x20] sm:$0xf]
  %v823 = vld [vmem:[%s813 + $0x24] sm:$0xf]
  %v824 = vld [vmem:[%s813 + $0x28] sm:$0xf]
  %v825 = vld [vmem:[%s813 + $0x2c] sm:$0xf]
  %v826 = vld [vmem:[%s813 + $0x30] sm:$0xf]
  %v827 = vld [vmem:[%s813 + $0x34] sm:$0xf]
  %v828 = vld [vmem:[%s813 + $0x38] sm:$0xf]
  %v829 = vld [vmem:[%s813 + $0x3c] sm:$0xf]
  %v846 = vunpack.c.l.b16 %v814
  %v847 = vunpack.c.l.b16 %v815
  %v848 = vunpack.c.l.b16 %v816
  %v849 = vunpack.c.l.b16 %v817
  %v850 = vunpack.c.l.b16 %v818
  %v851 = vunpack.c.l.b16 %v819
  %v852 = vunpack.c.l.b16 %v820
  %v853 = vunpack.c.l.b16 %v821
  %v854 = vunpack.c.l.b16 %v822
  %v855 = vunpack.c.l.b16 %v823
  %v856 = vunpack.c.l.b16 %v824
  %v857 = vunpack.c.l.b16 %v825
  %v858 = vunpack.c.l.b16 %v826
  %v859 = vunpack.c.l.b16 %v827
  %v860 = vunpack.c.l.b16 %v828
  %v861 = vunpack.c.l.b16 %v829
  %v862 = vpack.c.b16 %v847, %v846
  %v863 = vpack.c.b16 %v849, %v848
  %v864 = vpack.c.b16 %v851, %v850
  %v865 = vpack.c.b16 %v853, %v852
  %v866 = vpack.c.b16 %v855, %v854
  %v867 = vpack.c.b16 %v857, %v856
  %v868 = vpack.c.b16 %v859, %v858
  %v869 = vpack.c.b16 %v861, %v860
  %878 = vmatpush.bf16.msra.mxu0 %v869
  %879 = vmatpush.bf16.msra.mxu0 %v868
  %880 = vmatpush.bf16.msra.mxu0 %v867
  %881 = vmatpush.bf16.msra.mxu0 %v866
  %882 = vmatpush.bf16.msra.mxu0 %v865
  %883 = vmatpush.bf16.msra.mxu0 %v864
  %884 = vmatpush.bf16.msra.mxu0 %v863
  %885 = vmatpush.bf16.msra.mxu0 %v862
  %886 = vmatmul.bf16.gmra.mxu0 %v118
  %v887 = vpop.f32.mrf.mxu0
  %v888 = vadd.f32 0.0, %v887
  %v889 = vpop.f32.mrf.mxu0
  %v890 = vadd.f32 0.0, %v889
  %891 = vmatmul.bf16.gmra.mxu0 %v119
  %v892 = vpop.f32.mrf.mxu0
  %v893 = vadd.f32 0.0, %v892
  %v894 = vpop.f32.mrf.mxu0
  %v895 = vadd.f32 0.0, %v894
  %896 = vdwg.mxu0
  %vm897 = vcmp.gt.f32.partialorder %v720, 0.0
  %vm898 = vcmp.gt.f32.partialorder %v722, 0.0
  %vm899 = vcmp.gt.f32.partialorder %v725, 0.0
  %vm900 = vcmp.gt.f32.partialorder %v727, 0.0
  %v901 = vadd.f32 %v720, 1.0
  %v902 = vadd.f32 %v722, 1.0
  %v903 = vadd.f32 %v725, 1.0
  %v904 = vadd.f32 %v727, 1.0
  %v905 = vmul.f32 %v720, 1.442695
  %v906 = vpow.pop %v905
  %v907 = vmul.f32 %v722, 1.442695
  %v908 = vpow.pop %v907
  %v909 = vmul.f32 %v725, 1.442695
  %v910 = vpow.pop %v909
  %v911 = vmul.f32 %v727, 1.442695
  %v912 = vpow.pop %v911
  %v913 = vsel %vm897, %v901, %v906
  %v914 = vsel %vm898, %v902, %v908
  %v915 = vsel %vm899, %v903, %v910
  %v916 = vsel %vm900, %v904, %v912
  %vm917 = vcmp.gt.f32.partialorder %v804, 0.0
  %vm918 = vcmp.gt.f32.partialorder %v806, 0.0
  %vm919 = vcmp.gt.f32.partialorder %v809, 0.0
  %vm920 = vcmp.gt.f32.partialorder %v811, 0.0
  %v921 = vadd.f32 %v804, 1.0
  %v922 = vadd.f32 %v806, 1.0
  %v923 = vadd.f32 %v809, 1.0
  %v924 = vadd.f32 %v811, 1.0
  %v925 = vmul.f32 %v804, 1.442695
  %v926 = vpow.pop %v925
  %v927 = vmul.f32 %v806, 1.442695
  %v928 = vpow.pop %v927
  %v929 = vmul.f32 %v809, 1.442695
  %v930 = vpow.pop %v929
  %v931 = vmul.f32 %v811, 1.442695
  %v932 = vpow.pop %v931
  %v933 = vsel %vm917, %v921, %v926
  %v934 = vsel %vm918, %v922, %v928
  %v935 = vsel %vm919, %v923, %v930
  %v936 = vsel %vm920, %v924, %v932
  %v937 = vpack.c.bf16 %v913, %v913
  %v938 = vpack.c.bf16 %v914, %v914
  %v939 = vpack.c.bf16 %v915, %v915
  %v940 = vpack.c.bf16 %v916, %v916
  %v941 = vpack.c.bf16 %v933, %v933
  %v942 = vpack.c.bf16 %v934, %v934
  %v943 = vpack.c.bf16 %v935, %v935
  %v944 = vpack.c.bf16 %v936, %v936
  %v945 = vpack.c.bf16 %v888, %v888
  %v946 = vpack.c.bf16 %v890, %v890
  %v947 = vpack.c.bf16 %v893, %v893
  %v948 = vpack.c.bf16 %v895, %v895
  %v951 = vunpack.c.l.b16 %v937
  %v952 = vunpack.c.l.b16 %v938
  %v953 = vpack.c.b16 %v952, %v951
  %v956 = vunpack.c.l.b16 %v941
  %v957 = vunpack.c.l.b16 %v942
  %v958 = vpack.c.b16 %v957, %v956
  %v960 = vsel %vm431, %v953, 0
  %v963 = vsel %vm431, %v958, 0
  %965 = vmatpush.bf16.xpose.msra.mxu0 0
  %966 = vmatpush.bf16.xpose.msra.mxu0 0
  %967 = vmatpush.bf16.xpose.msra.mxu0 0
  %968 = vmatpush.bf16.xpose.msra.mxu0 0
  %969 = vmatpush.bf16.xpose.msra.mxu0 0
  %970 = vmatpush.bf16.xpose.msra.mxu0 0
  %971 = vmatpush.bf16.xpose.msra.mxu0 0
  %972 = vmatpush.bf16.xpose.msra.mxu0 %v963
  %973 = vmatmul.bf16.gmra.mxu0 %v960
  %v974 = vpop.f32.mrf.mxu0
  %v975 = vadd.f32 0.0, %v974
  %v976 = vpop.f32.mrf.mxu0
  %v977 = vadd.f32 0.0, %v976
  %978 = vdwg.mxu0
  %v981 = vunpack.c.l.b16 %v939
  %v982 = vunpack.c.l.b16 %v940
  %v983 = vpack.c.b16 %v982, %v981
  %v986 = vunpack.c.l.b16 %v943
  %v987 = vunpack.c.l.b16 %v944
  %v988 = vpack.c.b16 %v987, %v986
  %v990 = vsel %vm431, %v983, 0
  %v993 = vsel %vm431, %v988, 0
  %995 = vmatpush.bf16.xpose.msra.mxu0 0
  %996 = vmatpush.bf16.xpose.msra.mxu0 0
  %997 = vmatpush.bf16.xpose.msra.mxu0 0
  %998 = vmatpush.bf16.xpose.msra.mxu0 0
  %999 = vmatpush.bf16.xpose.msra.mxu0 0
  %1000 = vmatpush.bf16.xpose.msra.mxu0 0
  %1001 = vmatpush.bf16.xpose.msra.mxu0 0
  %1002 = vmatpush.bf16.xpose.msra.mxu0 %v993
  %1003 = vmatmul.bf16.gmra.mxu0 %v990
  %v1004 = vpop.f32.mrf.mxu0
  %v1005 = vadd.f32 0.0, %v1004
  %v1006 = vpop.f32.mrf.mxu0
  %v1007 = vadd.f32 0.0, %v1006
  %1008 = vdwg.mxu0
  %v1009 = vsel %vm482, %v975, -inf
  %1010 = vmax.xlane.f32.xlu0 %v1009
  %v1011 = vpop.xlane.xlu0 %1010
  %v1012 = vsel %vm482, %v977, -inf
  %1013 = vmax.xlane.f32.xlu0 %v1012
  %v1014 = vpop.xlane.xlu0 %1013
  %v1015 = vsel %vm482, %v1005, -inf
  %1016 = vmax.xlane.f32.xlu0 %v1015
  %v1017 = vpop.xlane.xlu0 %1016
  %v1018 = vsel %vm482, %v1007, -inf
  %1019 = vmax.xlane.f32.xlu0 %v1018
  %v1020 = vpop.xlane.xlu0 %1019
  %v1021 = vsub.f32 %v975, %v1011
  %v1022 = vsub.f32 %v977, %v1014
  %v1023 = vsub.f32 %v1005, %v1017
  %v1024 = vsub.f32 %v1007, %v1020
  %v1025 = vmul.f32 %v1021, 1.442695
  %v1026 = vpow.pop %v1025
  %v1027 = vmul.f32 %v1022, 1.442695
  %v1028 = vpow.pop %v1027
  %v1029 = vmul.f32 %v1023, 1.442695
  %v1030 = vpow.pop %v1029
  %v1031 = vmul.f32 %v1024, 1.442695
  %v1032 = vpow.pop %v1031
  %v1033 = vsel %vm482, %v1026, 0.0
  %1034 = vadd.xlane.f32.xlu0 %v1033
  %v1035 = vpop.xlane.xlu0 %1034
  %v1036 = vsel %vm482, %v1028, 0.0
  %1037 = vadd.xlane.f32.xlu0 %v1036
  %v1038 = vpop.xlane.xlu0 %1037
  %v1039 = vsel %vm482, %v1030, 0.0
  %1040 = vadd.xlane.f32.xlu0 %v1039
  %v1041 = vpop.xlane.xlu0 %1040
  %v1042 = vsel %vm482, %v1032, 0.0
  %1043 = vadd.xlane.f32.xlu0 %v1042
  %v1044 = vpop.xlane.xlu0 %1043
  %v1045 = vrcp.pop %v1035
  %v1046 = vmul.f32 %v1035, %v1045
  %v1047 = vsub.f32 1.0, %v1046
  %v1048 = vmul.f32 %v1045, %v1047
  %v1049 = vadd.f32 %v1045, %v1048
  %vm1050 = vweird.f32 %v1035
  %vm1051 = vweird.f32 %v1045
  %vm1052 = vmor %vm1050, %vm1051
  %v1053 = vsel %vm1052, %v1045, %v1049
  %v1054 = vand.u32 2147483647, %v1035
  %vm1055 = vcmp.eq.f32.partialorder %v1054, 8.507059e+37
  %v1056 = vand.u32 %v1035, 2147483648
  %v1057 = vor.u32 1.1754944e-38, %v1056
  %v1058 = vsel %vm1055, %v1057, %v1053
  %v1059 = vmul.f32 %v1026, %v1058
  %v1060 = vrcp.pop %v1038
  %v1061 = vmul.f32 %v1038, %v1060
  %v1062 = vsub.f32 1.0, %v1061
  %v1063 = vmul.f32 %v1060, %v1062
  %v1064 = vadd.f32 %v1060, %v1063
  %vm1065 = vweird.f32 %v1038
  %vm1066 = vweird.f32 %v1060
  %vm1067 = vmor %vm1065, %vm1066
  %v1068 = vsel %vm1067, %v1060, %v1064
  %v1069 = vand.u32 2147483647, %v1038
  %vm1070 = vcmp.eq.f32.partialorder %v1069, 8.507059e+37
  %v1071 = vand.u32 %v1038, 2147483648
  %v1072 = vor.u32 1.1754944e-38, %v1071
  %v1073 = vsel %vm1070, %v1072, %v1068
  %v1074 = vmul.f32 %v1028, %v1073
  %v1075 = vrcp.pop %v1041
  %v1076 = vmul.f32 %v1041, %v1075
  %v1077 = vsub.f32 1.0, %v1076
  %v1078 = vmul.f32 %v1075, %v1077
  %v1079 = vadd.f32 %v1075, %v1078
  %vm1080 = vweird.f32 %v1041
  %vm1081 = vweird.f32 %v1075
  %vm1082 = vmor %vm1080, %vm1081
  %v1083 = vsel %vm1082, %v1075, %v1079
  %v1084 = vand.u32 2147483647, %v1041
  %vm1085 = vcmp.eq.f32.partialorder %v1084, 8.507059e+37
  %v1086 = vand.u32 %v1041, 2147483648
  %v1087 = vor.u32 1.1754944e-38, %v1086
  %v1088 = vsel %vm1085, %v1087, %v1083
  %v1089 = vmul.f32 %v1030, %v1088
  %v1090 = vrcp.pop %v1044
  %v1091 = vmul.f32 %v1044, %v1090
  %v1092 = vsub.f32 1.0, %v1091
  %v1093 = vmul.f32 %v1090, %v1092
  %v1094 = vadd.f32 %v1090, %v1093
  %vm1095 = vweird.f32 %v1044
  %vm1096 = vweird.f32 %v1090
  %vm1097 = vmor %vm1095, %vm1096
  %v1098 = vsel %vm1097, %v1090, %v1094
  %v1099 = vand.u32 2147483647, %v1044
  %vm1100 = vcmp.eq.f32.partialorder %v1099, 8.507059e+37
  %v1101 = vand.u32 %v1044, 2147483648
  %v1102 = vor.u32 1.1754944e-38, %v1101
  %v1103 = vsel %vm1100, %v1102, %v1098
  %v1104 = vmul.f32 %v1032, %v1103
  %v1105 = vpack.c.bf16 %v1059, %v1059
  %v1106 = vpack.c.bf16 %v1074, %v1074
  %v1107 = vpack.c.bf16 %v1089, %v1089
  %v1108 = vpack.c.bf16 %v1104, %v1104
  %v1111 = vunpack.c.l.b16 %v1105
  %v1112 = vunpack.c.l.b16 %v1106
  %v1113 = vpack.c.b16 %v1112, %v1111
  %v1116 = vunpack.c.l.b16 %v945
  %v1117 = vunpack.c.l.b16 %v946
  %v1118 = vpack.c.b16 %v1117, %v1116
  %v1121 = vsel %vm482, %v1113, 0
  %1123 = vmatpush.bf16.msra.mxu0 0
  %1124 = vmatpush.bf16.msra.mxu0 0
  %1125 = vmatpush.bf16.msra.mxu0 0
  %1126 = vmatpush.bf16.msra.mxu0 0
  %1127 = vmatpush.bf16.msra.mxu0 0
  %1128 = vmatpush.bf16.msra.mxu0 0
  %1129 = vmatpush.bf16.msra.mxu0 0
  %1130 = vmatpush.bf16.msra.mxu0 %v1118
  %1131 = vmatmul.bf16.gmra.mxu0 %v1121
  %v1132 = vpop.f32.mrf.mxu0
  %v1133 = vadd.f32 0.0, %v1132
  %v1134 = vpop.f32.mrf.mxu0
  %v1135 = vadd.f32 0.0, %v1134
  %1136 = vdwg.mxu0
  %v1139 = vunpack.c.l.b16 %v1107
  %v1140 = vunpack.c.l.b16 %v1108
  %v1141 = vpack.c.b16 %v1140, %v1139
  %v1144 = vunpack.c.l.b16 %v947
  %v1145 = vunpack.c.l.b16 %v948
  %v1146 = vpack.c.b16 %v1145, %v1144
  %v1149 = vsel %vm482, %v1141, 0
  %1151 = vmatpush.bf16.msra.mxu0 0
  %1152 = vmatpush.bf16.msra.mxu0 0
  %1153 = vmatpush.bf16.msra.mxu0 0
  %1154 = vmatpush.bf16.msra.mxu0 0
  %1155 = vmatpush.bf16.msra.mxu0 0
  %1156 = vmatpush.bf16.msra.mxu0 0
  %1157 = vmatpush.bf16.msra.mxu0 0
  %1158 = vmatpush.bf16.msra.mxu0 %v1146
  %1159 = vmatmul.bf16.gmra.mxu0 %v1149
  %v1160 = vpop.f32.mrf.mxu0
  %v1161 = vadd.f32 0.0, %v1160
  %v1162 = vpop.f32.mrf.mxu0
  %v1163 = vadd.f32 0.0, %v1162
  %1164 = vdwg.mxu0
  %v1165 = vpack.c.bf16 %v1135, %v1133
  %v1166 = vpack.c.bf16 %v1163, %v1161
  %s1167 = scalar_lea.vmem %s5, 16
  %v1168 = vld [vmem:[%s1167] sm:$0xf]
  %v1169 = vld [vmem:[%s1167 + $0x4] sm:$0xf]
  %v1170 = vld [vmem:[%s1167 + $0x8] sm:$0xf]
  %v1171 = vld [vmem:[%s1167 + $0xc] sm:$0xf]
  %v1176 = vunpack.c.l.b16 %v1168
  %v1177 = vunpack.c.l.b16 %v1169
  %v1178 = vunpack.c.l.b16 %v1170
  %v1179 = vunpack.c.l.b16 %v1171
  %v1180 = vpack.c.b16 %v1177, %v1176
  %v1181 = vpack.c.b16 %v1179, %v1178
  %v1185 = vsel %vm431, %v1165, 0
  %v1188 = vsel %vm431, %v1166, 0
  %1190 = vmatpush.bf16.msra.mxu0 0
  %1191 = vmatpush.bf16.msra.mxu0 0
  %1192 = vmatpush.bf16.msra.mxu0 0
  %1193 = vmatpush.bf16.msra.mxu0 0
  %1194 = vmatpush.bf16.msra.mxu0 0
  %1195 = vmatpush.bf16.msra.mxu0 0
  %1196 = vmatpush.bf16.msra.mxu0 %v1181
  %1197 = vmatpush.bf16.msra.mxu0 %v1180
  %1198 = vmatmul.bf16.gmra.mxu0 %v1185
  %v1199 = vpop.f32.mrf.mxu0
  %v1200 = vadd.f32 0.0, %v1199
  %v1201 = vpop.f32.mrf.mxu0
  %v1202 = vadd.f32 0.0, %v1201
  %1203 = vmatmul.bf16.gmra.mxu0 %v1188
  %v1204 = vpop.f32.mrf.mxu0
  %v1205 = vadd.f32 0.0, %v1204
  %v1206 = vpop.f32.mrf.mxu0
  %v1207 = vadd.f32 0.0, %v1206
  %1208 = vdwg.mxu0
  %v1213 = vunpack.c.l.b16 %v641
  %v1214 = vunpack.c.l.b16 %v642
  %v1215 = vunpack.c.l.b16 %v643
  %v1216 = vunpack.c.l.b16 %v644
  %v1217 = vpack.c.b16 %v1214, %v1213
  %v1218 = vpack.c.b16 %v1216, %v1215
  %v1222 = vsel %vm431, %v639, 0
  %v1225 = vsel %vm431, %v640, 0
  %1227 = vmatpush.bf16.msra.mxu0 0
  %1228 = vmatpush.bf16.msra.mxu0 0
  %1229 = vmatpush.bf16.msra.mxu0 0
  %1230 = vmatpush.bf16.msra.mxu0 0
  %1231 = vmatpush.bf16.msra.mxu0 0
  %1232 = vmatpush.bf16.msra.mxu0 0
  %1233 = vmatpush.bf16.msra.mxu0 %v1218
  %1234 = vmatpush.bf16.msra.mxu0 %v1217
  %1235 = vmatmul.bf16.gmra.mxu0 %v1222
  %v1236 = vpop.f32.mrf.mxu0
  %v1237 = vadd.f32 %v1200, %v1236
  %v1238 = vpop.f32.mrf.mxu0
  %v1239 = vadd.f32 %v1202, %v1238
  %1240 = vmatmul.bf16.gmra.mxu0 %v1225
  %v1241 = vpop.f32.mrf.mxu0
  %v1242 = vadd.f32 %v1205, %v1241
  %v1243 = vpop.f32.mrf.mxu0
  %v1244 = vadd.f32 %v1207, %v1243
  %1245 = vdwg.mxu0
  %s1246 = scalar_lea.vmem %s2, 128
  %v1247 = vld [vmem:[%s1246] sm:$0xf]
  %v1248 = vld [vmem:[%s1246 + $0x4] sm:$0xf]
  %v1249 = vld [vmem:[%s1246 + $0x8] sm:$0xf]
  %v1250 = vld [vmem:[%s1246 + $0xc] sm:$0xf]
  %v1251 = vld [vmem:[%s1246 + $0x10] sm:$0xf]
  %v1252 = vld [vmem:[%s1246 + $0x14] sm:$0xf]
  %v1253 = vld [vmem:[%s1246 + $0x18] sm:$0xf]
  %v1254 = vld [vmem:[%s1246 + $0x1c] sm:$0xf]
  %v1255 = vld [vmem:[%s1246 + $0x20] sm:$0xf]
  %v1256 = vld [vmem:[%s1246 + $0x24] sm:$0xf]
  %v1257 = vld [vmem:[%s1246 + $0x28] sm:$0xf]
  %v1258 = vld [vmem:[%s1246 + $0x2c] sm:$0xf]
  %v1259 = vld [vmem:[%s1246 + $0x30] sm:$0xf]
  %v1260 = vld [vmem:[%s1246 + $0x34] sm:$0xf]
  %v1261 = vld [vmem:[%s1246 + $0x38] sm:$0xf]
  %v1262 = vld [vmem:[%s1246 + $0x3c] sm:$0xf]
  %v1279 = vunpack.c.l.b16 %v1247
  %v1280 = vunpack.c.l.b16 %v1248
  %v1281 = vunpack.c.l.b16 %v1249
  %v1282 = vunpack.c.l.b16 %v1250
  %v1283 = vunpack.c.l.b16 %v1251
  %v1284 = vunpack.c.l.b16 %v1252
  %v1285 = vunpack.c.l.b16 %v1253
  %v1286 = vunpack.c.l.b16 %v1254
  %v1287 = vunpack.c.l.b16 %v1255
  %v1288 = vunpack.c.l.b16 %v1256
  %v1289 = vunpack.c.l.b16 %v1257
  %v1290 = vunpack.c.l.b16 %v1258
  %v1291 = vunpack.c.l.b16 %v1259
  %v1292 = vunpack.c.l.b16 %v1260
  %v1293 = vunpack.c.l.b16 %v1261
  %v1294 = vunpack.c.l.b16 %v1262
  %v1295 = vpack.c.b16 %v1280, %v1279
  %v1296 = vpack.c.b16 %v1282, %v1281
  %v1297 = vpack.c.b16 %v1284, %v1283
  %v1298 = vpack.c.b16 %v1286, %v1285
  %v1299 = vpack.c.b16 %v1288, %v1287
  %v1300 = vpack.c.b16 %v1290, %v1289
  %v1301 = vpack.c.b16 %v1292, %v1291
  %v1302 = vpack.c.b16 %v1294, %v1293
  %1311 = vmatpush.bf16.msra.mxu0 %v1302
  %1312 = vmatpush.bf16.msra.mxu0 %v1301
  %1313 = vmatpush.bf16.msra.mxu0 %v1300
  %1314 = vmatpush.bf16.msra.mxu0 %v1299
  %1315 = vmatpush.bf16.msra.mxu0 %v1298
  %1316 = vmatpush.bf16.msra.mxu0 %v1297
  %1317 = vmatpush.bf16.msra.mxu0 %v1296
  %1318 = vmatpush.bf16.msra.mxu0 %v1295
  %1319 = vmatmul.bf16.gmra.mxu0 %v118
  %v1320 = vpop.f32.mrf.mxu0
  %v1321 = vadd.f32 0.0, %v1320
  %v1322 = vpop.f32.mrf.mxu0
  %v1323 = vadd.f32 0.0, %v1322
  %1324 = vmatmul.bf16.gmra.mxu0 %v119
  %v1325 = vpop.f32.mrf.mxu0
  %v1326 = vadd.f32 0.0, %v1325
  %v1327 = vpop.f32.mrf.mxu0
  %v1328 = vadd.f32 0.0, %v1327
  %1329 = vdwg.mxu0
  %s1330 = scalar_lea.vmem %s3, 128
  %v1331 = vld [vmem:[%s1330] sm:$0xf]
  %v1332 = vld [vmem:[%s1330 + $0x4] sm:$0xf]
  %v1333 = vld [vmem:[%s1330 + $0x8] sm:$0xf]
  %v1334 = vld [vmem:[%s1330 + $0xc] sm:$0xf]
  %v1335 = vld [vmem:[%s1330 + $0x10] sm:$0xf]
  %v1336 = vld [vmem:[%s1330 + $0x14] sm:$0xf]
  %v1337 = vld [vmem:[%s1330 + $0x18] sm:$0xf]
  %v1338 = vld [vmem:[%s1330 + $0x1c] sm:$0xf]
  %v1339 = vld [vmem:[%s1330 + $0x20] sm:$0xf]
  %v1340 = vld [vmem:[%s1330 + $0x24] sm:$0xf]
  %v1341 = vld [vmem:[%s1330 + $0x28] sm:$0xf]
  %v1342 = vld [vmem:[%s1330 + $0x2c] sm:$0xf]
  %v1343 = vld [vmem:[%s1330 + $0x30] sm:$0xf]
  %v1344 = vld [vmem:[%s1330 + $0x34] sm:$0xf]
  %v1345 = vld [vmem:[%s1330 + $0x38] sm:$0xf]
  %v1346 = vld [vmem:[%s1330 + $0x3c] sm:$0xf]
  %v1363 = vunpack.c.l.b16 %v1331
  %v1364 = vunpack.c.l.b16 %v1332
  %v1365 = vunpack.c.l.b16 %v1333
  %v1366 = vunpack.c.l.b16 %v1334
  %v1367 = vunpack.c.l.b16 %v1335
  %v1368 = vunpack.c.l.b16 %v1336
  %v1369 = vunpack.c.l.b16 %v1337
  %v1370 = vunpack.c.l.b16 %v1338
  %v1371 = vunpack.c.l.b16 %v1339
  %v1372 = vunpack.c.l.b16 %v1340
  %v1373 = vunpack.c.l.b16 %v1341
  %v1374 = vunpack.c.l.b16 %v1342
  %v1375 = vunpack.c.l.b16 %v1343
  %v1376 = vunpack.c.l.b16 %v1344
  %v1377 = vunpack.c.l.b16 %v1345
  %v1378 = vunpack.c.l.b16 %v1346
  %v1379 = vpack.c.b16 %v1364, %v1363
  %v1380 = vpack.c.b16 %v1366, %v1365
  %v1381 = vpack.c.b16 %v1368, %v1367
  %v1382 = vpack.c.b16 %v1370, %v1369
  %v1383 = vpack.c.b16 %v1372, %v1371
  %v1384 = vpack.c.b16 %v1374, %v1373
  %v1385 = vpack.c.b16 %v1376, %v1375
  %v1386 = vpack.c.b16 %v1378, %v1377
  %1395 = vmatpush.bf16.msra.mxu0 %v1386
  %1396 = vmatpush.bf16.msra.mxu0 %v1385
  %1397 = vmatpush.bf16.msra.mxu0 %v1384
  %1398 = vmatpush.bf16.msra.mxu0 %v1383
  %1399 = vmatpush.bf16.msra.mxu0 %v1382
  %1400 = vmatpush.bf16.msra.mxu0 %v1381
  %1401 = vmatpush.bf16.msra.mxu0 %v1380
  %1402 = vmatpush.bf16.msra.mxu0 %v1379
  %1403 = vmatmul.bf16.gmra.mxu0 %v118
  %v1404 = vpop.f32.mrf.mxu0
  %v1405 = vadd.f32 0.0, %v1404
  %v1406 = vpop.f32.mrf.mxu0
  %v1407 = vadd.f32 0.0, %v1406
  %1408 = vmatmul.bf16.gmra.mxu0 %v119
  %v1409 = vpop.f32.mrf.mxu0
  %v1410 = vadd.f32 0.0, %v1409
  %v1411 = vpop.f32.mrf.mxu0
  %v1412 = vadd.f32 0.0, %v1411
  %1413 = vdwg.mxu0
  %s1414 = scalar_lea.vmem %s4, 128
  %v1415 = vld [vmem:[%s1414] sm:$0xf]
  %v1416 = vld [vmem:[%s1414 + $0x4] sm:$0xf]
  %v1417 = vld [vmem:[%s1414 + $0x8] sm:$0xf]
  %v1418 = vld [vmem:[%s1414 + $0xc] sm:$0xf]
  %v1419 = vld [vmem:[%s1414 + $0x10] sm:$0xf]
  %v1420 = vld [vmem:[%s1414 + $0x14] sm:$0xf]
  %v1421 = vld [vmem:[%s1414 + $0x18] sm:$0xf]
  %v1422 = vld [vmem:[%s1414 + $0x1c] sm:$0xf]
  %v1423 = vld [vmem:[%s1414 + $0x20] sm:$0xf]
  %v1424 = vld [vmem:[%s1414 + $0x24] sm:$0xf]
  %v1425 = vld [vmem:[%s1414 + $0x28] sm:$0xf]
  %v1426 = vld [vmem:[%s1414 + $0x2c] sm:$0xf]
  %v1427 = vld [vmem:[%s1414 + $0x30] sm:$0xf]
  %v1428 = vld [vmem:[%s1414 + $0x34] sm:$0xf]
  %v1429 = vld [vmem:[%s1414 + $0x38] sm:$0xf]
  %v1430 = vld [vmem:[%s1414 + $0x3c] sm:$0xf]
  %v1447 = vunpack.c.l.b16 %v1415
  %v1448 = vunpack.c.l.b16 %v1416
  %v1449 = vunpack.c.l.b16 %v1417
  %v1450 = vunpack.c.l.b16 %v1418
  %v1451 = vunpack.c.l.b16 %v1419
  %v1452 = vunpack.c.l.b16 %v1420
  %v1453 = vunpack.c.l.b16 %v1421
  %v1454 = vunpack.c.l.b16 %v1422
  %v1455 = vunpack.c.l.b16 %v1423
  %v1456 = vunpack.c.l.b16 %v1424
  %v1457 = vunpack.c.l.b16 %v1425
  %v1458 = vunpack.c.l.b16 %v1426
  %v1459 = vunpack.c.l.b16 %v1427
  %v1460 = vunpack.c.l.b16 %v1428
  %v1461 = vunpack.c.l.b16 %v1429
  %v1462 = vunpack.c.l.b16 %v1430
  %v1463 = vpack.c.b16 %v1448, %v1447
  %v1464 = vpack.c.b16 %v1450, %v1449
  %v1465 = vpack.c.b16 %v1452, %v1451
  %v1466 = vpack.c.b16 %v1454, %v1453
  %v1467 = vpack.c.b16 %v1456, %v1455
  %v1468 = vpack.c.b16 %v1458, %v1457
  %v1469 = vpack.c.b16 %v1460, %v1459
  %v1470 = vpack.c.b16 %v1462, %v1461
  %1479 = vmatpush.bf16.msra.mxu0 %v1470
  %1480 = vmatpush.bf16.msra.mxu0 %v1469
  %1481 = vmatpush.bf16.msra.mxu0 %v1468
  %1482 = vmatpush.bf16.msra.mxu0 %v1467
  %1483 = vmatpush.bf16.msra.mxu0 %v1466
  %1484 = vmatpush.bf16.msra.mxu0 %v1465
  %1485 = vmatpush.bf16.msra.mxu0 %v1464
  %1486 = vmatpush.bf16.msra.mxu0 %v1463
  %1487 = vmatmul.bf16.gmra.mxu0 %v118
  %v1488 = vpop.f32.mrf.mxu0
  %v1489 = vadd.f32 0.0, %v1488
  %v1490 = vpop.f32.mrf.mxu0
  %v1491 = vadd.f32 0.0, %v1490
  %1492 = vmatmul.bf16.gmra.mxu0 %v119
  %v1493 = vpop.f32.mrf.mxu0
  %v1494 = vadd.f32 0.0, %v1493
  %v1495 = vpop.f32.mrf.mxu0
  %v1496 = vadd.f32 0.0, %v1495
  %1497 = vdwg.mxu0
  %vm1498 = vcmp.gt.f32.partialorder %v1321, 0.0
  %vm1499 = vcmp.gt.f32.partialorder %v1323, 0.0
  %vm1500 = vcmp.gt.f32.partialorder %v1326, 0.0
  %vm1501 = vcmp.gt.f32.partialorder %v1328, 0.0
  %v1502 = vadd.f32 %v1321, 1.0
  %v1503 = vadd.f32 %v1323, 1.0
  %v1504 = vadd.f32 %v1326, 1.0
  %v1505 = vadd.f32 %v1328, 1.0
  %v1506 = vmul.f32 %v1321, 1.442695
  %v1507 = vpow.pop %v1506
  %v1508 = vmul.f32 %v1323, 1.442695
  %v1509 = vpow.pop %v1508
  %v1510 = vmul.f32 %v1326, 1.442695
  %v1511 = vpow.pop %v1510
  %v1512 = vmul.f32 %v1328, 1.442695
  %v1513 = vpow.pop %v1512
  %v1514 = vsel %vm1498, %v1502, %v1507
  %v1515 = vsel %vm1499, %v1503, %v1509
  %v1516 = vsel %vm1500, %v1504, %v1511
  %v1517 = vsel %vm1501, %v1505, %v1513
  %vm1518 = vcmp.gt.f32.partialorder %v1405, 0.0
  %vm1519 = vcmp.gt.f32.partialorder %v1407, 0.0
  %vm1520 = vcmp.gt.f32.partialorder %v1410, 0.0
  %vm1521 = vcmp.gt.f32.partialorder %v1412, 0.0
  %v1522 = vadd.f32 %v1405, 1.0
  %v1523 = vadd.f32 %v1407, 1.0
  %v1524 = vadd.f32 %v1410, 1.0
  %v1525 = vadd.f32 %v1412, 1.0
  %v1526 = vmul.f32 %v1405, 1.442695
  %v1527 = vpow.pop %v1526
  %v1528 = vmul.f32 %v1407, 1.442695
  %v1529 = vpow.pop %v1528
  %v1530 = vmul.f32 %v1410, 1.442695
  %v1531 = vpow.pop %v1530
  %v1532 = vmul.f32 %v1412, 1.442695
  %v1533 = vpow.pop %v1532
  %v1534 = vsel %vm1518, %v1522, %v1527
  %v1535 = vsel %vm1519, %v1523, %v1529
  %v1536 = vsel %vm1520, %v1524, %v1531
  %v1537 = vsel %vm1521, %v1525, %v1533
  %v1538 = vpack.c.bf16 %v1514, %v1514
  %v1539 = vpack.c.bf16 %v1515, %v1515
  %v1540 = vpack.c.bf16 %v1516, %v1516
  %v1541 = vpack.c.bf16 %v1517, %v1517
  %v1542 = vpack.c.bf16 %v1534, %v1534
  %v1543 = vpack.c.bf16 %v1535, %v1535
  %v1544 = vpack.c.bf16 %v1536, %v1536
  %v1545 = vpack.c.bf16 %v1537, %v1537
  %v1546 = vpack.c.bf16 %v1489, %v1489
  %v1547 = vpack.c.bf16 %v1491, %v1491
  %v1548 = vpack.c.bf16 %v1494, %v1494
  %v1549 = vpack.c.bf16 %v1496, %v1496
  %v1552 = vunpack.c.l.b16 %v1538
  %v1553 = vunpack.c.l.b16 %v1539
  %v1554 = vpack.c.b16 %v1553, %v1552
  %v1557 = vunpack.c.l.b16 %v1542
  %v1558 = vunpack.c.l.b16 %v1543
  %v1559 = vpack.c.b16 %v1558, %v1557
  %v1561 = vsel %vm431, %v1554, 0
  %v1564 = vsel %vm431, %v1559, 0
  %1566 = vmatpush.bf16.xpose.msra.mxu0 0
  %1567 = vmatpush.bf16.xpose.msra.mxu0 0
  %1568 = vmatpush.bf16.xpose.msra.mxu0 0
  %1569 = vmatpush.bf16.xpose.msra.mxu0 0
  %1570 = vmatpush.bf16.xpose.msra.mxu0 0
  %1571 = vmatpush.bf16.xpose.msra.mxu0 0
  %1572 = vmatpush.bf16.xpose.msra.mxu0 0
  %1573 = vmatpush.bf16.xpose.msra.mxu0 %v1564
  %1574 = vmatmul.bf16.gmra.mxu0 %v1561
  %v1575 = vpop.f32.mrf.mxu0
  %v1576 = vadd.f32 0.0, %v1575
  %v1577 = vpop.f32.mrf.mxu0
  %v1578 = vadd.f32 0.0, %v1577
  %1579 = vdwg.mxu0
  %v1582 = vunpack.c.l.b16 %v1540
  %v1583 = vunpack.c.l.b16 %v1541
  %v1584 = vpack.c.b16 %v1583, %v1582
  %v1587 = vunpack.c.l.b16 %v1544
  %v1588 = vunpack.c.l.b16 %v1545
  %v1589 = vpack.c.b16 %v1588, %v1587
  %v1591 = vsel %vm431, %v1584, 0
  %v1594 = vsel %vm431, %v1589, 0
  %1596 = vmatpush.bf16.xpose.msra.mxu0 0
  %1597 = vmatpush.bf16.xpose.msra.mxu0 0
  %1598 = vmatpush.bf16.xpose.msra.mxu0 0
  %1599 = vmatpush.bf16.xpose.msra.mxu0 0
  %1600 = vmatpush.bf16.xpose.msra.mxu0 0
  %1601 = vmatpush.bf16.xpose.msra.mxu0 0
  %1602 = vmatpush.bf16.xpose.msra.mxu0 0
  %1603 = vmatpush.bf16.xpose.msra.mxu0 %v1594
  %1604 = vmatmul.bf16.gmra.mxu0 %v1591
  %v1605 = vpop.f32.mrf.mxu0
  %v1606 = vadd.f32 0.0, %v1605
  %v1607 = vpop.f32.mrf.mxu0
  %v1608 = vadd.f32 0.0, %v1607
  %1609 = vdwg.mxu0
  %v1610 = vsel %vm482, %v1576, -inf
  %1611 = vmax.xlane.f32.xlu0 %v1610
  %v1612 = vpop.xlane.xlu0 %1611
  %v1613 = vsel %vm482, %v1578, -inf
  %1614 = vmax.xlane.f32.xlu0 %v1613
  %v1615 = vpop.xlane.xlu0 %1614
  %v1616 = vsel %vm482, %v1606, -inf
  %1617 = vmax.xlane.f32.xlu0 %v1616
  %v1618 = vpop.xlane.xlu0 %1617
  %v1619 = vsel %vm482, %v1608, -inf
  %1620 = vmax.xlane.f32.xlu0 %v1619
  %v1621 = vpop.xlane.xlu0 %1620
  %v1622 = vsub.f32 %v1576, %v1612
  %v1623 = vsub.f32 %v1578, %v1615
  %v1624 = vsub.f32 %v1606, %v1618
  %v1625 = vsub.f32 %v1608, %v1621
  %v1626 = vmul.f32 %v1622, 1.442695
  %v1627 = vpow.pop %v1626
  %v1628 = vmul.f32 %v1623, 1.442695
  %v1629 = vpow.pop %v1628
  %v1630 = vmul.f32 %v1624, 1.442695
  %v1631 = vpow.pop %v1630
  %v1632 = vmul.f32 %v1625, 1.442695
  %v1633 = vpow.pop %v1632
  %v1634 = vsel %vm482, %v1627, 0.0
  %1635 = vadd.xlane.f32.xlu0 %v1634
  %v1636 = vpop.xlane.xlu0 %1635
  %v1637 = vsel %vm482, %v1629, 0.0
  %1638 = vadd.xlane.f32.xlu0 %v1637
  %v1639 = vpop.xlane.xlu0 %1638
  %v1640 = vsel %vm482, %v1631, 0.0
  %1641 = vadd.xlane.f32.xlu0 %v1640
  %v1642 = vpop.xlane.xlu0 %1641
  %v1643 = vsel %vm482, %v1633, 0.0
  %1644 = vadd.xlane.f32.xlu0 %v1643
  %v1645 = vpop.xlane.xlu0 %1644
  %v1646 = vrcp.pop %v1636
  %v1647 = vmul.f32 %v1636, %v1646
  %v1648 = vsub.f32 1.0, %v1647
  %v1649 = vmul.f32 %v1646, %v1648
  %v1650 = vadd.f32 %v1646, %v1649
  %vm1651 = vweird.f32 %v1636
  %vm1652 = vweird.f32 %v1646
  %vm1653 = vmor %vm1651, %vm1652
  %v1654 = vsel %vm1653, %v1646, %v1650
  %v1655 = vand.u32 2147483647, %v1636
  %vm1656 = vcmp.eq.f32.partialorder %v1655, 8.507059e+37
  %v1657 = vand.u32 %v1636, 2147483648
  %v1658 = vor.u32 1.1754944e-38, %v1657
  %v1659 = vsel %vm1656, %v1658, %v1654
  %v1660 = vmul.f32 %v1627, %v1659
  %v1661 = vrcp.pop %v1639
  %v1662 = vmul.f32 %v1639, %v1661
  %v1663 = vsub.f32 1.0, %v1662
  %v1664 = vmul.f32 %v1661, %v1663
  %v1665 = vadd.f32 %v1661, %v1664
  %vm1666 = vweird.f32 %v1639
  %vm1667 = vweird.f32 %v1661
  %vm1668 = vmor %vm1666, %vm1667
  %v1669 = vsel %vm1668, %v1661, %v1665
  %v1670 = vand.u32 2147483647, %v1639
  %vm1671 = vcmp.eq.f32.partialorder %v1670, 8.507059e+37
  %v1672 = vand.u32 %v1639, 2147483648
  %v1673 = vor.u32 1.1754944e-38, %v1672
  %v1674 = vsel %vm1671, %v1673, %v1669
  %v1675 = vmul.f32 %v1629, %v1674
  %v1676 = vrcp.pop %v1642
  %v1677 = vmul.f32 %v1642, %v1676
  %v1678 = vsub.f32 1.0, %v1677
  %v1679 = vmul.f32 %v1676, %v1678
  %v1680 = vadd.f32 %v1676, %v1679
  %vm1681 = vweird.f32 %v1642
  %vm1682 = vweird.f32 %v1676
  %vm1683 = vmor %vm1681, %vm1682
  %v1684 = vsel %vm1683, %v1676, %v1680
  %v1685 = vand.u32 2147483647, %v1642
  %vm1686 = vcmp.eq.f32.partialorder %v1685, 8.507059e+37
  %v1687 = vand.u32 %v1642, 2147483648
  %v1688 = vor.u32 1.1754944e-38, %v1687
  %v1689 = vsel %vm1686, %v1688, %v1684
  %v1690 = vmul.f32 %v1631, %v1689
  %v1691 = vrcp.pop %v1645
  %v1692 = vmul.f32 %v1645, %v1691
  %v1693 = vsub.f32 1.0, %v1692
  %v1694 = vmul.f32 %v1691, %v1693
  %v1695 = vadd.f32 %v1691, %v1694
  %vm1696 = vweird.f32 %v1645
  %vm1697 = vweird.f32 %v1691
  %vm1698 = vmor %vm1696, %vm1697
  %v1699 = vsel %vm1698, %v1691, %v1695
  %v1700 = vand.u32 2147483647, %v1645
  %vm1701 = vcmp.eq.f32.partialorder %v1700, 8.507059e+37
  %v1702 = vand.u32 %v1645, 2147483648
  %v1703 = vor.u32 1.1754944e-38, %v1702
  %v1704 = vsel %vm1701, %v1703, %v1699
  %v1705 = vmul.f32 %v1633, %v1704
  %v1706 = vpack.c.bf16 %v1660, %v1660
  %v1707 = vpack.c.bf16 %v1675, %v1675
  %v1708 = vpack.c.bf16 %v1690, %v1690
  %v1709 = vpack.c.bf16 %v1705, %v1705
  %v1712 = vunpack.c.l.b16 %v1706
  %v1713 = vunpack.c.l.b16 %v1707
  %v1714 = vpack.c.b16 %v1713, %v1712
  %v1717 = vunpack.c.l.b16 %v1546
  %v1718 = vunpack.c.l.b16 %v1547
  %v1719 = vpack.c.b16 %v1718, %v1717
  %v1722 = vsel %vm482, %v1714, 0
  %1724 = vmatpush.bf16.msra.mxu0 0
  %1725 = vmatpush.bf16.msra.mxu0 0
  %1726 = vmatpush.bf16.msra.mxu0 0
  %1727 = vmatpush.bf16.msra.mxu0 0
  %1728 = vmatpush.bf16.msra.mxu0 0
  %1729 = vmatpush.bf16.msra.mxu0 0
  %1730 = vmatpush.bf16.msra.mxu0 0
  %1731 = vmatpush.bf16.msra.mxu0 %v1719
  %1732 = vmatmul.bf16.gmra.mxu0 %v1722
  %v1733 = vpop.f32.mrf.mxu0
  %v1734 = vadd.f32 0.0, %v1733
  %v1735 = vpop.f32.mrf.mxu0
  %v1736 = vadd.f32 0.0, %v1735
  %1737 = vdwg.mxu0
  %v1740 = vunpack.c.l.b16 %v1708
  %v1741 = vunpack.c.l.b16 %v1709
  %v1742 = vpack.c.b16 %v1741, %v1740
  %v1745 = vunpack.c.l.b16 %v1548
  %v1746 = vunpack.c.l.b16 %v1549
  %v1747 = vpack.c.b16 %v1746, %v1745
  %v1750 = vsel %vm482, %v1742, 0
  %1752 = vmatpush.bf16.msra.mxu0 0
  %1753 = vmatpush.bf16.msra.mxu0 0
  %1754 = vmatpush.bf16.msra.mxu0 0
  %1755 = vmatpush.bf16.msra.mxu0 0
  %1756 = vmatpush.bf16.msra.mxu0 0
  %1757 = vmatpush.bf16.msra.mxu0 0
  %1758 = vmatpush.bf16.msra.mxu0 0
  %1759 = vmatpush.bf16.msra.mxu0 %v1747
  %1760 = vmatmul.bf16.gmra.mxu0 %v1750
  %v1761 = vpop.f32.mrf.mxu0
  %v1762 = vadd.f32 0.0, %v1761
  %v1763 = vpop.f32.mrf.mxu0
  %v1764 = vadd.f32 0.0, %v1763
  %1765 = vdwg.mxu0
  %v1766 = vpack.c.bf16 %v1736, %v1734
  %v1767 = vpack.c.bf16 %v1764, %v1762
  %s1768 = scalar_lea.vmem %s5, 32
  %v1769 = vld [vmem:[%s1768] sm:$0xf]
  %v1770 = vld [vmem:[%s1768 + $0x4] sm:$0xf]
  %v1771 = vld [vmem:[%s1768 + $0x8] sm:$0xf]
  %v1772 = vld [vmem:[%s1768 + $0xc] sm:$0xf]
  %v1777 = vunpack.c.l.b16 %v1769
  %v1778 = vunpack.c.l.b16 %v1770
  %v1779 = vunpack.c.l.b16 %v1771
  %v1780 = vunpack.c.l.b16 %v1772
  %v1781 = vpack.c.b16 %v1778, %v1777
  %v1782 = vpack.c.b16 %v1780, %v1779
  %v1786 = vsel %vm431, %v1766, 0
  %v1789 = vsel %vm431, %v1767, 0
  %1791 = vmatpush.bf16.msra.mxu0 0
  %1792 = vmatpush.bf16.msra.mxu0 0
  %1793 = vmatpush.bf16.msra.mxu0 0
  %1794 = vmatpush.bf16.msra.mxu0 0
  %1795 = vmatpush.bf16.msra.mxu0 0
  %1796 = vmatpush.bf16.msra.mxu0 0
  %1797 = vmatpush.bf16.msra.mxu0 %v1782
  %1798 = vmatpush.bf16.msra.mxu0 %v1781
  %1799 = vmatmul.bf16.gmra.mxu0 %v1786
  %v1800 = vpop.f32.mrf.mxu0
  %v1801 = vadd.f32 0.0, %v1800
  %v1802 = vpop.f32.mrf.mxu0
  %v1803 = vadd.f32 0.0, %v1802
  %1804 = vmatmul.bf16.gmra.mxu0 %v1789
  %v1805 = vpop.f32.mrf.mxu0
  %v1806 = vadd.f32 0.0, %v1805
  %v1807 = vpop.f32.mrf.mxu0
  %v1808 = vadd.f32 0.0, %v1807
  %1809 = vdwg.mxu0
  %v1810 = vadd.f32 %v1237, %v1801
  %v1811 = vadd.f32 %v1239, %v1803
  %v1812 = vadd.f32 %v1242, %v1806
  %v1813 = vadd.f32 %v1244, %v1808
  %s1814 = scalar_lea.vmem %s2, 192
  %v1815 = vld [vmem:[%s1814] sm:$0xf]
  %v1816 = vld [vmem:[%s1814 + $0x4] sm:$0xf]
  %v1817 = vld [vmem:[%s1814 + $0x8] sm:$0xf]
  %v1818 = vld [vmem:[%s1814 + $0xc] sm:$0xf]
  %v1819 = vld [vmem:[%s1814 + $0x10] sm:$0xf]
  %v1820 = vld [vmem:[%s1814 + $0x14] sm:$0xf]
  %v1821 = vld [vmem:[%s1814 + $0x18] sm:$0xf]
  %v1822 = vld [vmem:[%s1814 + $0x1c] sm:$0xf]
  %v1823 = vld [vmem:[%s1814 + $0x20] sm:$0xf]
  %v1824 = vld [vmem:[%s1814 + $0x24] sm:$0xf]
  %v1825 = vld [vmem:[%s1814 + $0x28] sm:$0xf]
  %v1826 = vld [vmem:[%s1814 + $0x2c] sm:$0xf]
  %v1827 = vld [vmem:[%s1814 + $0x30] sm:$0xf]
  %v1828 = vld [vmem:[%s1814 + $0x34] sm:$0xf]
  %v1829 = vld [vmem:[%s1814 + $0x38] sm:$0xf]
  %v1830 = vld [vmem:[%s1814 + $0x3c] sm:$0xf]
  %v1847 = vunpack.c.l.b16 %v1815
  %v1848 = vunpack.c.l.b16 %v1816
  %v1849 = vunpack.c.l.b16 %v1817
  %v1850 = vunpack.c.l.b16 %v1818
  %v1851 = vunpack.c.l.b16 %v1819
  %v1852 = vunpack.c.l.b16 %v1820
  %v1853 = vunpack.c.l.b16 %v1821
  %v1854 = vunpack.c.l.b16 %v1822
  %v1855 = vunpack.c.l.b16 %v1823
  %v1856 = vunpack.c.l.b16 %v1824
  %v1857 = vunpack.c.l.b16 %v1825
  %v1858 = vunpack.c.l.b16 %v1826
  %v1859 = vunpack.c.l.b16 %v1827
  %v1860 = vunpack.c.l.b16 %v1828
  %v1861 = vunpack.c.l.b16 %v1829
  %v1862 = vunpack.c.l.b16 %v1830
  %v1863 = vpack.c.b16 %v1848, %v1847
  %v1864 = vpack.c.b16 %v1850, %v1849
  %v1865 = vpack.c.b16 %v1852, %v1851
  %v1866 = vpack.c.b16 %v1854, %v1853
  %v1867 = vpack.c.b16 %v1856, %v1855
  %v1868 = vpack.c.b16 %v1858, %v1857
  %v1869 = vpack.c.b16 %v1860, %v1859
  %v1870 = vpack.c.b16 %v1862, %v1861
  %1879 = vmatpush.bf16.msra.mxu0 %v1870
  %1880 = vmatpush.bf16.msra.mxu0 %v1869
  %1881 = vmatpush.bf16.msra.mxu0 %v1868
  %1882 = vmatpush.bf16.msra.mxu0 %v1867
  %1883 = vmatpush.bf16.msra.mxu0 %v1866
  %1884 = vmatpush.bf16.msra.mxu0 %v1865
  %1885 = vmatpush.bf16.msra.mxu0 %v1864
  %1886 = vmatpush.bf16.msra.mxu0 %v1863
  %1887 = vmatmul.bf16.gmra.mxu0 %v118
  %v1888 = vpop.f32.mrf.mxu0
  %v1889 = vadd.f32 0.0, %v1888
  %v1890 = vpop.f32.mrf.mxu0
  %v1891 = vadd.f32 0.0, %v1890
  %1892 = vmatmul.bf16.gmra.mxu0 %v119
  %v1893 = vpop.f32.mrf.mxu0
  %v1894 = vadd.f32 0.0, %v1893
  %v1895 = vpop.f32.mrf.mxu0
  %v1896 = vadd.f32 0.0, %v1895
  %1897 = vdwg.mxu0
  %s1898 = scalar_lea.vmem %s3, 192
  %v1899 = vld [vmem:[%s1898] sm:$0xf]
  %v1900 = vld [vmem:[%s1898 + $0x4] sm:$0xf]
  %v1901 = vld [vmem:[%s1898 + $0x8] sm:$0xf]
  %v1902 = vld [vmem:[%s1898 + $0xc] sm:$0xf]
  %v1903 = vld [vmem:[%s1898 + $0x10] sm:$0xf]
  %v1904 = vld [vmem:[%s1898 + $0x14] sm:$0xf]
  %v1905 = vld [vmem:[%s1898 + $0x18] sm:$0xf]
  %v1906 = vld [vmem:[%s1898 + $0x1c] sm:$0xf]
  %v1907 = vld [vmem:[%s1898 + $0x20] sm:$0xf]
  %v1908 = vld [vmem:[%s1898 + $0x24] sm:$0xf]
  %v1909 = vld [vmem:[%s1898 + $0x28] sm:$0xf]
  %v1910 = vld [vmem:[%s1898 + $0x2c] sm:$0xf]
  %v1911 = vld [vmem:[%s1898 + $0x30] sm:$0xf]
  %v1912 = vld [vmem:[%s1898 + $0x34] sm:$0xf]
  %v1913 = vld [vmem:[%s1898 + $0x38] sm:$0xf]
  %v1914 = vld [vmem:[%s1898 + $0x3c] sm:$0xf]
  %v1931 = vunpack.c.l.b16 %v1899
  %v1932 = vunpack.c.l.b16 %v1900
  %v1933 = vunpack.c.l.b16 %v1901
  %v1934 = vunpack.c.l.b16 %v1902
  %v1935 = vunpack.c.l.b16 %v1903
  %v1936 = vunpack.c.l.b16 %v1904
  %v1937 = vunpack.c.l.b16 %v1905
  %v1938 = vunpack.c.l.b16 %v1906
  %v1939 = vunpack.c.l.b16 %v1907
  %v1940 = vunpack.c.l.b16 %v1908
  %v1941 = vunpack.c.l.b16 %v1909
  %v1942 = vunpack.c.l.b16 %v1910
  %v1943 = vunpack.c.l.b16 %v1911
  %v1944 = vunpack.c.l.b16 %v1912
  %v1945 = vunpack.c.l.b16 %v1913
  %v1946 = vunpack.c.l.b16 %v1914
  %v1947 = vpack.c.b16 %v1932, %v1931
  %v1948 = vpack.c.b16 %v1934, %v1933
  %v1949 = vpack.c.b16 %v1936, %v1935
  %v1950 = vpack.c.b16 %v1938, %v1937
  %v1951 = vpack.c.b16 %v1940, %v1939
  %v1952 = vpack.c.b16 %v1942, %v1941
  %v1953 = vpack.c.b16 %v1944, %v1943
  %v1954 = vpack.c.b16 %v1946, %v1945
  %1963 = vmatpush.bf16.msra.mxu0 %v1954
  %1964 = vmatpush.bf16.msra.mxu0 %v1953
  %1965 = vmatpush.bf16.msra.mxu0 %v1952
  %1966 = vmatpush.bf16.msra.mxu0 %v1951
  %1967 = vmatpush.bf16.msra.mxu0 %v1950
  %1968 = vmatpush.bf16.msra.mxu0 %v1949
  %1969 = vmatpush.bf16.msra.mxu0 %v1948
  %1970 = vmatpush.bf16.msra.mxu0 %v1947
  %1971 = vmatmul.bf16.gmra.mxu0 %v118
  %v1972 = vpop.f32.mrf.mxu0
  %v1973 = vadd.f32 0.0, %v1972
  %v1974 = vpop.f32.mrf.mxu0
  %v1975 = vadd.f32 0.0, %v1974
  %1976 = vmatmul.bf16.gmra.mxu0 %v119
  %v1977 = vpop.f32.mrf.mxu0
  %v1978 = vadd.f32 0.0, %v1977
  %v1979 = vpop.f32.mrf.mxu0
  %v1980 = vadd.f32 0.0, %v1979
  %1981 = vdwg.mxu0
  %s1982 = scalar_lea.vmem %s4, 192
  %v1983 = vld [vmem:[%s1982] sm:$0xf]
  %v1984 = vld [vmem:[%s1982 + $0x4] sm:$0xf]
  %v1985 = vld [vmem:[%s1982 + $0x8] sm:$0xf]
  %v1986 = vld [vmem:[%s1982 + $0xc] sm:$0xf]
  %v1987 = vld [vmem:[%s1982 + $0x10] sm:$0xf]
  %v1988 = vld [vmem:[%s1982 + $0x14] sm:$0xf]
  %v1989 = vld [vmem:[%s1982 + $0x18] sm:$0xf]
  %v1990 = vld [vmem:[%s1982 + $0x1c] sm:$0xf]
  %v1991 = vld [vmem:[%s1982 + $0x20] sm:$0xf]
  %v1992 = vld [vmem:[%s1982 + $0x24] sm:$0xf]
  %v1993 = vld [vmem:[%s1982 + $0x28] sm:$0xf]
  %v1994 = vld [vmem:[%s1982 + $0x2c] sm:$0xf]
  %v1995 = vld [vmem:[%s1982 + $0x30] sm:$0xf]
  %v1996 = vld [vmem:[%s1982 + $0x34] sm:$0xf]
  %v1997 = vld [vmem:[%s1982 + $0x38] sm:$0xf]
  %v1998 = vld [vmem:[%s1982 + $0x3c] sm:$0xf]
  %v2015 = vunpack.c.l.b16 %v1983
  %v2016 = vunpack.c.l.b16 %v1984
  %v2017 = vunpack.c.l.b16 %v1985
  %v2018 = vunpack.c.l.b16 %v1986
  %v2019 = vunpack.c.l.b16 %v1987
  %v2020 = vunpack.c.l.b16 %v1988
  %v2021 = vunpack.c.l.b16 %v1989
  %v2022 = vunpack.c.l.b16 %v1990
  %v2023 = vunpack.c.l.b16 %v1991
  %v2024 = vunpack.c.l.b16 %v1992
  %v2025 = vunpack.c.l.b16 %v1993
  %v2026 = vunpack.c.l.b16 %v1994
  %v2027 = vunpack.c.l.b16 %v1995
  %v2028 = vunpack.c.l.b16 %v1996
  %v2029 = vunpack.c.l.b16 %v1997
  %v2030 = vunpack.c.l.b16 %v1998
  %v2031 = vpack.c.b16 %v2016, %v2015
  %v2032 = vpack.c.b16 %v2018, %v2017
  %v2033 = vpack.c.b16 %v2020, %v2019
  %v2034 = vpack.c.b16 %v2022, %v2021
  %v2035 = vpack.c.b16 %v2024, %v2023
  %v2036 = vpack.c.b16 %v2026, %v2025
  %v2037 = vpack.c.b16 %v2028, %v2027
  %v2038 = vpack.c.b16 %v2030, %v2029
  %2047 = vmatpush.bf16.msra.mxu0 %v2038
  %2048 = vmatpush.bf16.msra.mxu0 %v2037
  %2049 = vmatpush.bf16.msra.mxu0 %v2036
  %2050 = vmatpush.bf16.msra.mxu0 %v2035
  %2051 = vmatpush.bf16.msra.mxu0 %v2034
  %2052 = vmatpush.bf16.msra.mxu0 %v2033
  %2053 = vmatpush.bf16.msra.mxu0 %v2032
  %2054 = vmatpush.bf16.msra.mxu0 %v2031
  %2055 = vmatmul.bf16.gmra.mxu0 %v118
  %v2056 = vpop.f32.mrf.mxu0
  %v2057 = vadd.f32 0.0, %v2056
  %v2058 = vpop.f32.mrf.mxu0
  %v2059 = vadd.f32 0.0, %v2058
  %2060 = vmatmul.bf16.gmra.mxu0 %v119
  %v2061 = vpop.f32.mrf.mxu0
  %v2062 = vadd.f32 0.0, %v2061
  %v2063 = vpop.f32.mrf.mxu0
  %v2064 = vadd.f32 0.0, %v2063
  %2065 = vdwg.mxu0
  %vm2066 = vcmp.gt.f32.partialorder %v1889, 0.0
  %vm2067 = vcmp.gt.f32.partialorder %v1891, 0.0
  %vm2068 = vcmp.gt.f32.partialorder %v1894, 0.0
  %vm2069 = vcmp.gt.f32.partialorder %v1896, 0.0
  %v2070 = vadd.f32 %v1889, 1.0
  %v2071 = vadd.f32 %v1891, 1.0
  %v2072 = vadd.f32 %v1894, 1.0
  %v2073 = vadd.f32 %v1896, 1.0
  %v2074 = vmul.f32 %v1889, 1.442695
  %v2075 = vpow.pop %v2074
  %v2076 = vmul.f32 %v1891, 1.442695
  %v2077 = vpow.pop %v2076
  %v2078 = vmul.f32 %v1894, 1.442695
  %v2079 = vpow.pop %v2078
  %v2080 = vmul.f32 %v1896, 1.442695
  %v2081 = vpow.pop %v2080
  %v2082 = vsel %vm2066, %v2070, %v2075
  %v2083 = vsel %vm2067, %v2071, %v2077
  %v2084 = vsel %vm2068, %v2072, %v2079
  %v2085 = vsel %vm2069, %v2073, %v2081
  %vm2086 = vcmp.gt.f32.partialorder %v1973, 0.0
  %vm2087 = vcmp.gt.f32.partialorder %v1975, 0.0
  %vm2088 = vcmp.gt.f32.partialorder %v1978, 0.0
  %vm2089 = vcmp.gt.f32.partialorder %v1980, 0.0
  %v2090 = vadd.f32 %v1973, 1.0
  %v2091 = vadd.f32 %v1975, 1.0
  %v2092 = vadd.f32 %v1978, 1.0
  %v2093 = vadd.f32 %v1980, 1.0
  %v2094 = vmul.f32 %v1973, 1.442695
  %v2095 = vpow.pop %v2094
  %v2096 = vmul.f32 %v1975, 1.442695
  %v2097 = vpow.pop %v2096
  %v2098 = vmul.f32 %v1978, 1.442695
  %v2099 = vpow.pop %v2098
  %v2100 = vmul.f32 %v1980, 1.442695
  %v2101 = vpow.pop %v2100
  %v2102 = vsel %vm2086, %v2090, %v2095
  %v2103 = vsel %vm2087, %v2091, %v2097
  %v2104 = vsel %vm2088, %v2092, %v2099
  %v2105 = vsel %vm2089, %v2093, %v2101
  %v2106 = vpack.c.bf16 %v2082, %v2082
  %v2107 = vpack.c.bf16 %v2083, %v2083
  %v2108 = vpack.c.bf16 %v2084, %v2084
  %v2109 = vpack.c.bf16 %v2085, %v2085
  %v2110 = vpack.c.bf16 %v2102, %v2102
  %v2111 = vpack.c.bf16 %v2103, %v2103
  %v2112 = vpack.c.bf16 %v2104, %v2104
  %v2113 = vpack.c.bf16 %v2105, %v2105
  %v2114 = vpack.c.bf16 %v2057, %v2057
  %v2115 = vpack.c.bf16 %v2059, %v2059
  %v2116 = vpack.c.bf16 %v2062, %v2062
  %v2117 = vpack.c.bf16 %v2064, %v2064
  %v2120 = vunpack.c.l.b16 %v2106
  %v2121 = vunpack.c.l.b16 %v2107
  %v2122 = vpack.c.b16 %v2121, %v2120
  %v2125 = vunpack.c.l.b16 %v2110
  %v2126 = vunpack.c.l.b16 %v2111
  %v2127 = vpack.c.b16 %v2126, %v2125
  %v2129 = vsel %vm431, %v2122, 0
  %v2132 = vsel %vm431, %v2127, 0
  %2134 = vmatpush.bf16.xpose.msra.mxu0 0
  %2135 = vmatpush.bf16.xpose.msra.mxu0 0
  %2136 = vmatpush.bf16.xpose.msra.mxu0 0
  %2137 = vmatpush.bf16.xpose.msra.mxu0 0
  %2138 = vmatpush.bf16.xpose.msra.mxu0 0
  %2139 = vmatpush.bf16.xpose.msra.mxu0 0
  %2140 = vmatpush.bf16.xpose.msra.mxu0 0
  %2141 = vmatpush.bf16.xpose.msra.mxu0 %v2132
  %2142 = vmatmul.bf16.gmra.mxu0 %v2129
  %v2143 = vpop.f32.mrf.mxu0
  %v2144 = vadd.f32 0.0, %v2143
  %v2145 = vpop.f32.mrf.mxu0
  %v2146 = vadd.f32 0.0, %v2145
  %2147 = vdwg.mxu0
  %v2150 = vunpack.c.l.b16 %v2108
  %v2151 = vunpack.c.l.b16 %v2109
  %v2152 = vpack.c.b16 %v2151, %v2150
  %v2155 = vunpack.c.l.b16 %v2112
  %v2156 = vunpack.c.l.b16 %v2113
  %v2157 = vpack.c.b16 %v2156, %v2155
  %v2159 = vsel %vm431, %v2152, 0
  %v2162 = vsel %vm431, %v2157, 0
  %2164 = vmatpush.bf16.xpose.msra.mxu0 0
  %2165 = vmatpush.bf16.xpose.msra.mxu0 0
  %2166 = vmatpush.bf16.xpose.msra.mxu0 0
  %2167 = vmatpush.bf16.xpose.msra.mxu0 0
  %2168 = vmatpush.bf16.xpose.msra.mxu0 0
  %2169 = vmatpush.bf16.xpose.msra.mxu0 0
  %2170 = vmatpush.bf16.xpose.msra.mxu0 0
  %2171 = vmatpush.bf16.xpose.msra.mxu0 %v2162
  %2172 = vmatmul.bf16.gmra.mxu0 %v2159
  %v2173 = vpop.f32.mrf.mxu0
  %v2174 = vadd.f32 0.0, %v2173
  %v2175 = vpop.f32.mrf.mxu0
  %v2176 = vadd.f32 0.0, %v2175
  %2177 = vdwg.mxu0
  %v2178 = vsel %vm482, %v2144, -inf
  %2179 = vmax.xlane.f32.xlu0 %v2178
  %v2180 = vpop.xlane.xlu0 %2179
  %v2181 = vsel %vm482, %v2146, -inf
  %2182 = vmax.xlane.f32.xlu0 %v2181
  %v2183 = vpop.xlane.xlu0 %2182
  %v2184 = vsel %vm482, %v2174, -inf
  %2185 = vmax.xlane.f32.xlu0 %v2184
  %v2186 = vpop.xlane.xlu0 %2185
  %v2187 = vsel %vm482, %v2176, -inf
  %2188 = vmax.xlane.f32.xlu0 %v2187
  %v2189 = vpop.xlane.xlu0 %2188
  %v2190 = vsub.f32 %v2144, %v2180
  %v2191 = vsub.f32 %v2146, %v2183
  %v2192 = vsub.f32 %v2174, %v2186
  %v2193 = vsub.f32 %v2176, %v2189
  %v2194 = vmul.f32 %v2190, 1.442695
  %v2195 = vpow.pop %v2194
  %v2196 = vmul.f32 %v2191, 1.442695
  %v2197 = vpow.pop %v2196
  %v2198 = vmul.f32 %v2192, 1.442695
  %v2199 = vpow.pop %v2198
  %v2200 = vmul.f32 %v2193, 1.442695
  %v2201 = vpow.pop %v2200
  %v2202 = vsel %vm482, %v2195, 0.0
  %2203 = vadd.xlane.f32.xlu0 %v2202
  %v2204 = vpop.xlane.xlu0 %2203
  %v2205 = vsel %vm482, %v2197, 0.0
  %2206 = vadd.xlane.f32.xlu0 %v2205
  %v2207 = vpop.xlane.xlu0 %2206
  %v2208 = vsel %vm482, %v2199, 0.0
  %2209 = vadd.xlane.f32.xlu0 %v2208
  %v2210 = vpop.xlane.xlu0 %2209
  %v2211 = vsel %vm482, %v2201, 0.0
  %2212 = vadd.xlane.f32.xlu0 %v2211
  %v2213 = vpop.xlane.xlu0 %2212
  %v2214 = vrcp.pop %v2204
  %v2215 = vmul.f32 %v2204, %v2214
  %v2216 = vsub.f32 1.0, %v2215
  %v2217 = vmul.f32 %v2214, %v2216
  %v2218 = vadd.f32 %v2214, %v2217
  %vm2219 = vweird.f32 %v2204
  %vm2220 = vweird.f32 %v2214
  %vm2221 = vmor %vm2219, %vm2220
  %v2222 = vsel %vm2221, %v2214, %v2218
  %v2223 = vand.u32 2147483647, %v2204
  %vm2224 = vcmp.eq.f32.partialorder %v2223, 8.507059e+37
  %v2225 = vand.u32 %v2204, 2147483648
  %v2226 = vor.u32 1.1754944e-38, %v2225
  %v2227 = vsel %vm2224, %v2226, %v2222
  %v2228 = vmul.f32 %v2195, %v2227
  %v2229 = vrcp.pop %v2207
  %v2230 = vmul.f32 %v2207, %v2229
  %v2231 = vsub.f32 1.0, %v2230
  %v2232 = vmul.f32 %v2229, %v2231
  %v2233 = vadd.f32 %v2229, %v2232
  %vm2234 = vweird.f32 %v2207
  %vm2235 = vweird.f32 %v2229
  %vm2236 = vmor %vm2234, %vm2235
  %v2237 = vsel %vm2236, %v2229, %v2233
  %v2238 = vand.u32 2147483647, %v2207
  %vm2239 = vcmp.eq.f32.partialorder %v2238, 8.507059e+37
  %v2240 = vand.u32 %v2207, 2147483648
  %v2241 = vor.u32 1.1754944e-38, %v2240
  %v2242 = vsel %vm2239, %v2241, %v2237
  %v2243 = vmul.f32 %v2197, %v2242
  %v2244 = vrcp.pop %v2210
  %v2245 = vmul.f32 %v2210, %v2244
  %v2246 = vsub.f32 1.0, %v2245
  %v2247 = vmul.f32 %v2244, %v2246
  %v2248 = vadd.f32 %v2244, %v2247
  %vm2249 = vweird.f32 %v2210
  %vm2250 = vweird.f32 %v2244
  %vm2251 = vmor %vm2249, %vm2250
  %v2252 = vsel %vm2251, %v2244, %v2248
  %v2253 = vand.u32 2147483647, %v2210
  %vm2254 = vcmp.eq.f32.partialorder %v2253, 8.507059e+37
  %v2255 = vand.u32 %v2210, 2147483648
  %v2256 = vor.u32 1.1754944e-38, %v2255
  %v2257 = vsel %vm2254, %v2256, %v2252
  %v2258 = vmul.f32 %v2199, %v2257
  %v2259 = vrcp.pop %v2213
  %v2260 = vmul.f32 %v2213, %v2259
  %v2261 = vsub.f32 1.0, %v2260
  %v2262 = vmul.f32 %v2259, %v2261
  %v2263 = vadd.f32 %v2259, %v2262
  %vm2264 = vweird.f32 %v2213
  %vm2265 = vweird.f32 %v2259
  %vm2266 = vmor %vm2264, %vm2265
  %v2267 = vsel %vm2266, %v2259, %v2263
  %v2268 = vand.u32 2147483647, %v2213
  %vm2269 = vcmp.eq.f32.partialorder %v2268, 8.507059e+37
  %v2270 = vand.u32 %v2213, 2147483648
  %v2271 = vor.u32 1.1754944e-38, %v2270
  %v2272 = vsel %vm2269, %v2271, %v2267
  %v2273 = vmul.f32 %v2201, %v2272
  %v2274 = vpack.c.bf16 %v2228, %v2228
  %v2275 = vpack.c.bf16 %v2243, %v2243
  %v2276 = vpack.c.bf16 %v2258, %v2258
  %v2277 = vpack.c.bf16 %v2273, %v2273
  %v2280 = vunpack.c.l.b16 %v2274
  %v2281 = vunpack.c.l.b16 %v2275
  %v2282 = vpack.c.b16 %v2281, %v2280
  %v2285 = vunpack.c.l.b16 %v2114
  %v2286 = vunpack.c.l.b16 %v2115
  %v2287 = vpack.c.b16 %v2286, %v2285
  %v2290 = vsel %vm482, %v2282, 0
  %2292 = vmatpush.bf16.msra.mxu0 0
  %2293 = vmatpush.bf16.msra.mxu0 0
  %2294 = vmatpush.bf16.msra.mxu0 0
  %2295 = vmatpush.bf16.msra.mxu0 0
  %2296 = vmatpush.bf16.msra.mxu0 0
  %2297 = vmatpush.bf16.msra.mxu0 0
  %2298 = vmatpush.bf16.msra.mxu0 0
  %2299 = vmatpush.bf16.msra.mxu0 %v2287
  %2300 = vmatmul.bf16.gmra.mxu0 %v2290
  %v2301 = vpop.f32.mrf.mxu0
  %v2302 = vadd.f32 0.0, %v2301
  %v2303 = vpop.f32.mrf.mxu0
  %v2304 = vadd.f32 0.0, %v2303
  %2305 = vdwg.mxu0
  %v2308 = vunpack.c.l.b16 %v2276
  %v2309 = vunpack.c.l.b16 %v2277
  %v2310 = vpack.c.b16 %v2309, %v2308
  %v2313 = vunpack.c.l.b16 %v2116
  %v2314 = vunpack.c.l.b16 %v2117
  %v2315 = vpack.c.b16 %v2314, %v2313
  %v2318 = vsel %vm482, %v2310, 0
  %2320 = vmatpush.bf16.msra.mxu0 0
  %2321 = vmatpush.bf16.msra.mxu0 0
  %2322 = vmatpush.bf16.msra.mxu0 0
  %2323 = vmatpush.bf16.msra.mxu0 0
  %2324 = vmatpush.bf16.msra.mxu0 0
  %2325 = vmatpush.bf16.msra.mxu0 0
  %2326 = vmatpush.bf16.msra.mxu0 0
  %2327 = vmatpush.bf16.msra.mxu0 %v2315
  %2328 = vmatmul.bf16.gmra.mxu0 %v2318
  %v2329 = vpop.f32.mrf.mxu0
  %v2330 = vadd.f32 0.0, %v2329
  %v2331 = vpop.f32.mrf.mxu0
  %v2332 = vadd.f32 0.0, %v2331
  %2333 = vdwg.mxu0
  %v2334 = vpack.c.bf16 %v2304, %v2302
  %v2335 = vpack.c.bf16 %v2332, %v2330
  %s2336 = scalar_lea.vmem %s5, 48
  %v2337 = vld [vmem:[%s2336] sm:$0xf]
  %v2338 = vld [vmem:[%s2336 + $0x4] sm:$0xf]
  %v2339 = vld [vmem:[%s2336 + $0x8] sm:$0xf]
  %v2340 = vld [vmem:[%s2336 + $0xc] sm:$0xf]
  %v2345 = vunpack.c.l.b16 %v2337
  %v2346 = vunpack.c.l.b16 %v2338
  %v2347 = vunpack.c.l.b16 %v2339
  %v2348 = vunpack.c.l.b16 %v2340
  %v2349 = vpack.c.b16 %v2346, %v2345
  %v2350 = vpack.c.b16 %v2348, %v2347
  %v2354 = vsel %vm431, %v2334, 0
  %v2357 = vsel %vm431, %v2335, 0
  %2359 = vmatpush.bf16.msra.mxu0 0
  %2360 = vmatpush.bf16.msra.mxu0 0
  %2361 = vmatpush.bf16.msra.mxu0 0
  %2362 = vmatpush.bf16.msra.mxu0 0
  %2363 = vmatpush.bf16.msra.mxu0 0
  %2364 = vmatpush.bf16.msra.mxu0 0
  %2365 = vmatpush.bf16.msra.mxu0 %v2350
  %2366 = vmatpush.bf16.msra.mxu0 %v2349
  %2367 = vmatmul.bf16.gmra.mxu0 %v2354
  %v2368 = vpop.f32.mrf.mxu0
  %v2369 = vadd.f32 0.0, %v2368
  %v2370 = vpop.f32.mrf.mxu0
  %v2371 = vadd.f32 0.0, %v2370
  %2372 = vmatmul.bf16.gmra.mxu0 %v2357
  %v2373 = vpop.f32.mrf.mxu0
  %v2374 = vadd.f32 0.0, %v2373
  %v2375 = vpop.f32.mrf.mxu0
  %v2376 = vadd.f32 0.0, %v2375
  %2377 = vdwg.mxu0
  %v2378 = vadd.f32 %v1810, %v2369
  %v2379 = vadd.f32 %v1811, %v2371
  %v2380 = vadd.f32 %v1812, %v2374
  %v2381 = vadd.f32 %v1813, %v2376
  %v2382 = vadd.f32 %v35, %v2378
  %v2383 = vadd.f32 %v36, %v2379
  %v2384 = vadd.f32 %v37, %v2380
  %v2385 = vadd.f32 %v38, %v2381
  %2386 = vst [vmem:[%s9] sm:$0xff] %v2382
  %2387 = vst [vmem:[%s9 + $0x8] sm:$0xff] %v2383
  %2388 = vst [vmem:[%s9 + $0x10] sm:$0xff] %v2384
  %2389 = vst [vmem:[%s9 + $0x18] sm:$0xff] %v2385
  %v2390 = vmul.f32 %v2382, %v2382
  %v2391 = vmul.f32 %v2383, %v2383
  %v2392 = vmul.f32 %v2384, %v2384
  %v2393 = vmul.f32 %v2385, %v2385
  %2394 = vadd.xlane.f32.xlu0 %v2390
  %v2395 = vpop.xlane.xlu0 %2394
  %2396 = vadd.xlane.f32.xlu0 %v2391
  %v2397 = vpop.xlane.xlu0 %2396
  %2398 = vadd.xlane.f32.xlu0 %v2392
  %v2399 = vpop.xlane.xlu0 %2398
  %2400 = vadd.xlane.f32.xlu0 %v2393
  %v2401 = vpop.xlane.xlu0 %2400
  %v2402 = vmul.f32 %v2395, %v57
  %v2403 = vmul.f32 %v2397, %v57
  %v2404 = vmul.f32 %v2399, %v57
  %v2405 = vmul.f32 %v2401, %v57
  %v2406 = vadd.f32 %v2402, 1e-06
  %v2407 = vadd.f32 %v2403, 1e-06
  %v2408 = vadd.f32 %v2404, 1e-06
  %v2409 = vadd.f32 %v2405, 1e-06
  %v2410 = vrsqrt.pop %v2406
  %v2411 = vmul.f32 %v2410, %v2406
  %v2412 = vmul.f32 %v2411, %v2410
  %v2413 = vmul.f32 0.5, %v2412
  %v2414 = vsub.f32 1.5, %v2413
  %v2415 = vmul.f32 %v2410, %v2414
  %vm2416 = vweird.f32 %v2406
  %vm2417 = vweird.f32 %v2410
  %vm2418 = vmor %vm2416, %vm2417
  %v2419 = vsel %vm2418, %v2410, %v2415
  %v2420 = vrsqrt.pop %v2407
  %v2421 = vmul.f32 %v2420, %v2407
  %v2422 = vmul.f32 %v2421, %v2420
  %v2423 = vmul.f32 0.5, %v2422
  %v2424 = vsub.f32 1.5, %v2423
  %v2425 = vmul.f32 %v2420, %v2424
  %vm2426 = vweird.f32 %v2407
  %vm2427 = vweird.f32 %v2420
  %vm2428 = vmor %vm2426, %vm2427
  %v2429 = vsel %vm2428, %v2420, %v2425
  %v2430 = vrsqrt.pop %v2408
  %v2431 = vmul.f32 %v2430, %v2408
  %v2432 = vmul.f32 %v2431, %v2430
  %v2433 = vmul.f32 0.5, %v2432
  %v2434 = vsub.f32 1.5, %v2433
  %v2435 = vmul.f32 %v2430, %v2434
  %vm2436 = vweird.f32 %v2408
  %vm2437 = vweird.f32 %v2430
  %vm2438 = vmor %vm2436, %vm2437
  %v2439 = vsel %vm2438, %v2430, %v2435
  %v2440 = vrsqrt.pop %v2409
  %v2441 = vmul.f32 %v2440, %v2409
  %v2442 = vmul.f32 %v2441, %v2440
  %v2443 = vmul.f32 0.5, %v2442
  %v2444 = vsub.f32 1.5, %v2443
  %v2445 = vmul.f32 %v2440, %v2444
  %vm2446 = vweird.f32 %v2409
  %vm2447 = vweird.f32 %v2440
  %vm2448 = vmor %vm2446, %vm2447
  %v2449 = vsel %vm2448, %v2440, %v2445
  %v2450 = vmul.f32 %v2382, %v2419
  %v2451 = vmul.f32 %v2383, %v2429
  %v2452 = vmul.f32 %v2384, %v2439
  %v2453 = vmul.f32 %v2385, %v2449
  %v2454 = vld [vmem:[%s6] sm:$0x1]
  %v2456 = vperm.slane %v2454, 0
  %v2458 = vmul.f32 %v2450, %v2456
  %v2459 = vmul.f32 %v2451, %v2456
  %v2460 = vmul.f32 %v2452, %v2456
  %v2461 = vmul.f32 %v2453, %v2456
  %v2462 = vpack.c.bf16 %v2459, %v2458
  %v2463 = vpack.c.bf16 %v2461, %v2460
  %v2464 = vld [vmem:[%s7] sm:$0xf]
  %v2465 = vld [vmem:[%s7 + $0x4] sm:$0xf]
  %v2466 = vld [vmem:[%s7 + $0x8] sm:$0xf]
  %v2467 = vld [vmem:[%s7 + $0xc] sm:$0xf]
  %v2468 = vld [vmem:[%s7 + $0x10] sm:$0xf]
  %v2469 = vld [vmem:[%s7 + $0x14] sm:$0xf]
  %v2470 = vld [vmem:[%s7 + $0x18] sm:$0xf]
  %v2471 = vld [vmem:[%s7 + $0x1c] sm:$0xf]
  %v2472 = vld [vmem:[%s7 + $0x20] sm:$0xf]
  %v2473 = vld [vmem:[%s7 + $0x24] sm:$0xf]
  %v2474 = vld [vmem:[%s7 + $0x28] sm:$0xf]
  %v2475 = vld [vmem:[%s7 + $0x2c] sm:$0xf]
  %v2476 = vld [vmem:[%s7 + $0x30] sm:$0xf]
  %v2477 = vld [vmem:[%s7 + $0x34] sm:$0xf]
  %v2478 = vld [vmem:[%s7 + $0x38] sm:$0xf]
  %v2479 = vld [vmem:[%s7 + $0x3c] sm:$0xf]
  %v2480 = vld [vmem:[%s8] sm:$0x1]
  %v2482 = vperm.slane %v2480, 0
  %v2500 = vunpack.c.l.b16 %v2464
  %v2501 = vunpack.c.l.b16 %v2465
  %v2502 = vunpack.c.l.b16 %v2466
  %v2503 = vunpack.c.l.b16 %v2467
  %v2504 = vunpack.c.l.b16 %v2468
  %v2505 = vunpack.c.l.b16 %v2469
  %v2506 = vunpack.c.l.b16 %v2470
  %v2507 = vunpack.c.l.b16 %v2471
  %v2508 = vunpack.c.l.b16 %v2472
  %v2509 = vunpack.c.l.b16 %v2473
  %v2510 = vunpack.c.l.b16 %v2474
  %v2511 = vunpack.c.l.b16 %v2475
  %v2512 = vunpack.c.l.b16 %v2476
  %v2513 = vunpack.c.l.b16 %v2477
  %v2514 = vunpack.c.l.b16 %v2478
  %v2515 = vunpack.c.l.b16 %v2479
  %v2516 = vpack.c.b16 %v2501, %v2500
  %v2517 = vpack.c.b16 %v2503, %v2502
  %v2518 = vpack.c.b16 %v2505, %v2504
  %v2519 = vpack.c.b16 %v2507, %v2506
  %v2520 = vpack.c.b16 %v2509, %v2508
  %v2521 = vpack.c.b16 %v2511, %v2510
  %v2522 = vpack.c.b16 %v2513, %v2512
  %v2523 = vpack.c.b16 %v2515, %v2514
  %2532 = vmatpush.bf16.msra.mxu0 %v2523
  %2533 = vmatpush.bf16.msra.mxu0 %v2522
  %2534 = vmatpush.bf16.msra.mxu0 %v2521
  %2535 = vmatpush.bf16.msra.mxu0 %v2520
  %2536 = vmatpush.bf16.msra.mxu0 %v2519
  %2537 = vmatpush.bf16.msra.mxu0 %v2518
  %2538 = vmatpush.bf16.msra.mxu0 %v2517
  %2539 = vmatpush.bf16.msra.mxu0 %v2516
  %2540 = vmatmul.bf16.gmra.mxu0 %v2462
  %v2541 = vpop.f32.mrf.mxu0
  %v2542 = vadd.f32 %v2482, %v2541
  %v2543 = vpop.f32.mrf.mxu0
  %v2544 = vadd.f32 %v2482, %v2543
  %2545 = vmatmul.bf16.gmra.mxu0 %v2463
  %v2546 = vpop.f32.mrf.mxu0
  %v2547 = vadd.f32 %v2482, %v2546
  %v2548 = vpop.f32.mrf.mxu0
  %v2549 = vadd.f32 %v2482, %v2548
  %2550 = vdwg.mxu0
  %vm2551 = vcmask 31744
  %v2552 = vsel %vm2551, %v2542, -inf
  %2553 = vmax.xlane.f32.xlu0 %v2552
  %v2554 = vpop.xlane.xlu0 %2553
  %v2555 = vsel %vm2551, %v2544, -inf
  %2556 = vmax.xlane.f32.xlu0 %v2555
  %v2557 = vpop.xlane.xlu0 %2556
  %v2558 = vsel %vm2551, %v2547, -inf
  %2559 = vmax.xlane.f32.xlu0 %v2558
  %v2560 = vpop.xlane.xlu0 %2559
  %v2561 = vsel %vm2551, %v2549, -inf
  %2562 = vmax.xlane.f32.xlu0 %v2561
  %v2563 = vpop.xlane.xlu0 %2562
  %v2564 = vsub.f32 %v2542, %v2554
  %v2565 = vsub.f32 %v2544, %v2557
  %v2566 = vsub.f32 %v2547, %v2560
  %v2567 = vsub.f32 %v2549, %v2563
  %v2568 = vmul.f32 %v2564, 1.442695
  %v2569 = vpow.pop %v2568
  %v2570 = vmul.f32 %v2565, 1.442695
  %v2571 = vpow.pop %v2570
  %v2572 = vmul.f32 %v2566, 1.442695
  %v2573 = vpow.pop %v2572
  %v2574 = vmul.f32 %v2567, 1.442695
  %v2575 = vpow.pop %v2574
  %v2576 = vsel %vm2551, %v2569, 0.0
  %2577 = vadd.xlane.f32.xlu0 %v2576
  %v2578 = vpop.xlane.xlu0 %2577
  %v2579 = vsel %vm2551, %v2571, 0.0
  %2580 = vadd.xlane.f32.xlu0 %v2579
  %v2581 = vpop.xlane.xlu0 %2580
  %v2582 = vsel %vm2551, %v2573, 0.0
  %2583 = vadd.xlane.f32.xlu0 %v2582
  %v2584 = vpop.xlane.xlu0 %2583
  %v2585 = vsel %vm2551, %v2575, 0.0
  %2586 = vadd.xlane.f32.xlu0 %v2585
  %v2587 = vpop.xlane.xlu0 %2586
  %v2588 = vrcp.pop %v2578
  %v2589 = vmul.f32 %v2578, %v2588
  %v2590 = vsub.f32 1.0, %v2589
  %v2591 = vmul.f32 %v2588, %v2590
  %v2592 = vadd.f32 %v2588, %v2591
  %vm2593 = vweird.f32 %v2578
  %vm2594 = vweird.f32 %v2588
  %vm2595 = vmor %vm2593, %vm2594
  %v2596 = vsel %vm2595, %v2588, %v2592
  %v2597 = vand.u32 2147483647, %v2578
  %vm2598 = vcmp.eq.f32.partialorder %v2597, 8.507059e+37
  %v2599 = vand.u32 %v2578, 2147483648
  %v2600 = vor.u32 1.1754944e-38, %v2599
  %v2601 = vsel %vm2598, %v2600, %v2596
  %v2602 = vmul.f32 %v2569, %v2601
  %v2603 = vrcp.pop %v2581
  %v2604 = vmul.f32 %v2581, %v2603
  %v2605 = vsub.f32 1.0, %v2604
  %v2606 = vmul.f32 %v2603, %v2605
  %v2607 = vadd.f32 %v2603, %v2606
  %vm2608 = vweird.f32 %v2581
  %vm2609 = vweird.f32 %v2603
  %vm2610 = vmor %vm2608, %vm2609
  %v2611 = vsel %vm2610, %v2603, %v2607
  %v2612 = vand.u32 2147483647, %v2581
  %vm2613 = vcmp.eq.f32.partialorder %v2612, 8.507059e+37
  %v2614 = vand.u32 %v2581, 2147483648
  %v2615 = vor.u32 1.1754944e-38, %v2614
  %v2616 = vsel %vm2613, %v2615, %v2611
  %v2617 = vmul.f32 %v2571, %v2616
  %v2618 = vrcp.pop %v2584
  %v2619 = vmul.f32 %v2584, %v2618
  %v2620 = vsub.f32 1.0, %v2619
  %v2621 = vmul.f32 %v2618, %v2620
  %v2622 = vadd.f32 %v2618, %v2621
  %vm2623 = vweird.f32 %v2584
  %vm2624 = vweird.f32 %v2618
  %vm2625 = vmor %vm2623, %vm2624
  %v2626 = vsel %vm2625, %v2618, %v2622
  %v2627 = vand.u32 2147483647, %v2584
  %vm2628 = vcmp.eq.f32.partialorder %v2627, 8.507059e+37
  %v2629 = vand.u32 %v2584, 2147483648
  %v2630 = vor.u32 1.1754944e-38, %v2629
  %v2631 = vsel %vm2628, %v2630, %v2626
  %v2632 = vmul.f32 %v2573, %v2631
  %v2633 = vrcp.pop %v2587
  %v2634 = vmul.f32 %v2587, %v2633
  %v2635 = vsub.f32 1.0, %v2634
  %v2636 = vmul.f32 %v2633, %v2635
  %v2637 = vadd.f32 %v2633, %v2636
  %vm2638 = vweird.f32 %v2587
  %vm2639 = vweird.f32 %v2633
  %vm2640 = vmor %vm2638, %vm2639
  %v2641 = vsel %vm2640, %v2633, %v2637
  %v2642 = vand.u32 2147483647, %v2587
  %vm2643 = vcmp.eq.f32.partialorder %v2642, 8.507059e+37
  %v2644 = vand.u32 %v2587, 2147483648
  %v2645 = vor.u32 1.1754944e-38, %v2644
  %v2646 = vsel %vm2643, %v2645, %v2641
  %v2647 = vmul.f32 %v2575, %v2646
  %2648 = vst.msk [vmem:[%s10] sm:$0xff] %vm2551, %v2602
  %2649 = vst.msk [vmem:[%s10 + $0x8] sm:$0xff] %vm2551, %v2617
  %2650 = vst.msk [vmem:[%s10 + $0x10] sm:$0xff] %vm2551, %v2632
  %2651 = vst.msk [vmem:[%s10 + $0x18] sm:$0xff] %vm2551, %v2647
  // Predicated region
  $region38: #{llama_forward.5} parent=0 // pred_check
    _
  $region39: #{llama_forward.5} parent=0 // pred_check_branch
    %2653 = sbr.rel (0) target = $region41
  $region40: #{llama_forward.5} parent=0 // pred_region
    _
  $region41: #{llama_forward.5} parent=0 // pred_fallthru
    _
  // Predicated region
  $region42: #{llama_forward.5} parent=0 // pred_check
    _
  $region43: #{llama_forward.5} parent=0 // pred_check_branch
    %2655 = sbr.rel (0) target = $region45
  $region44: #{llama_forward.5} parent=0 // pred_region
    _
  $region45: #{llama_forward.5} parent=0 // pred_fallthru
    _
  // Predicated region
  $region46: #{llama_forward.5} parent=0 // pred_check
    _
  $region47: #{llama_forward.5} parent=0 // pred_check_branch
    %2657 = sbr.rel (0) target = $region49
  $region48: #{llama_forward.5} parent=0 // pred_region
    _
  $region49: #{llama_forward.5} parent=0 // pred_fallthru
    _
  // Predicated region
  $region50: #{llama_forward.5} parent=0 // pred_check
    _
  $region51: #{llama_forward.5} parent=0 // pred_check_branch
    %2659 = sbr.rel (0) target = $region53
  $region52: #{llama_forward.5} parent=0 // pred_region
    _
  $region53: #{llama_forward.5} parent=0 // pred_fallthru
    _

</llo_original>
